<compile_context>
chip_gen: v6e
topology: v6e:2x2x1
jax: 0.10.0
libtpu: 0.0.40
codegen_flags: <defaults>
</compile_context>

<pallas_src>
import functools
import math

import jax
import jax.numpy as jnp
from jax.experimental import pallas as pl
from jax.experimental.pallas import tpu as pltpu


# ----------------------------------------------------------------------------
# In-kernel helpers
# ----------------------------------------------------------------------------
def _layernorm(x, w, b, eps=1e-5):
    mu = jnp.mean(x, axis=-1, keepdims=True)
    var = jnp.mean(jnp.square(x - mu), axis=-1, keepdims=True)
    return (x - mu) * jax.lax.rsqrt(var + eps) * w + b


# ----------------------------------------------------------------------------
# Fused forward kernel: L post-norm TransformerEncoderLayers (PyTorch defaults:
# ReLU, norm_first=False) + final LayerNorm + MaxPool over seq + Linear(D->1).
# ----------------------------------------------------------------------------
def _fused_forward_kernel(x_ref,
                          wqkv_ref, bqkv_ref, wo_ref, bo_ref,
                          w1_ref, b1_ref, w2_ref, b2_ref,
                          ln1w_ref, ln1b_ref, ln2w_ref, ln2b_ref,
                          lnf_w_ref, lnf_b_ref, out_w_ref, out_b_ref,
                          o_ref, ctx_ref,
                          *, num_heads, num_layers):
    B, S, D = x_ref.shape
    dh = D // num_heads
    scale = 1.0 / math.sqrt(dh)

    # Activations stay resident across all layers; dense math on (B*S, D) rows.
    x2d = x_ref[...].reshape(B * S, D)                       # f32

    for l in range(num_layers):                              # static unroll
        # ---- fused QKV projection (bf16 operands, f32 accumulation) ---------
        qkv = jnp.dot(x2d.astype(jnp.bfloat16), wqkv_ref[l],
                      preferred_element_type=jnp.float32) + bqkv_ref[l]
        q = qkv[:, 0:D].reshape(B, S, D).astype(jnp.bfloat16)
        k = qkv[:, D:2 * D].reshape(B, S, D).astype(jnp.bfloat16)
        v = qkv[:, 2 * D:3 * D].reshape(B, S, D).astype(jnp.bfloat16)

        # ---- self-attention: batched over B per head, ctx -> VMEM scratch ---
        for h in range(num_heads):                           # static unroll
            sl = slice(h * dh, (h + 1) * dh)
            s = jnp.einsum('bqd,bkd->bqk', q[:, :, sl], k[:, :, sl],
                           preferred_element_type=jnp.float32) * scale
            s = s - jnp.max(s, axis=-1, keepdims=True)
            p = jnp.exp(s)
            p = p * pl.reciprocal(jnp.sum(p, axis=-1, keepdims=True), approx=True)
            ctx_h = jnp.einsum('bqk,bkd->bqd', p.astype(jnp.bfloat16), v[:, :, sl],
                               preferred_element_type=jnp.float32)
            ctx_ref[:, :, sl] = ctx_h.astype(jnp.bfloat16)

        attn = jnp.dot(ctx_ref[...].reshape(B * S, D), wo_ref[l],
                       preferred_element_type=jnp.float32) + bo_ref[l]

        # ---- residual + LayerNorm 1 (f32) ------------------------------------
        x2d = _layernorm(x2d + attn, ln1w_ref[l], ln1b_ref[l])

        # ---- ReLU MLP + residual + LayerNorm 2 -------------------------------
        h1 = jnp.maximum(
            jnp.dot(x2d.astype(jnp.bfloat16), w1_ref[l],
                    preferred_element_type=jnp.float32) + b1_ref[l], 0.0)
        ff = jnp.dot(h1.astype(jnp.bfloat16), w2_ref[l],
                     preferred_element_type=jnp.float32) + b2_ref[l]
        x2d = _layernorm(x2d + ff, ln2w_ref[l], ln2b_ref[l])

    # ---- final encoder LayerNorm + MaxPool1d(seq) + Linear(D->1) -------------
    xn = _layernorm(x2d, lnf_w_ref[...], lnf_b_ref[...]).reshape(B, S, D)
    pooled = jnp.max(xn, axis=1)                             # (B, D)
    # VPU multiply + lane reduce instead of a 1-wide MXU matmul.
    r = jnp.sum(pooled * out_w_ref[...], axis=-1, keepdims=True) + out_b_ref[...]
    o_ref[...] = jnp.broadcast_to(r, o_ref.shape)            # lane-dense store


def fused_forward(x, params, *, num_heads):
    B, S, D = x.shape
    L = len(params["layers"])

    def stack(name):
        return jnp.stack([lp[name] for lp in params["layers"]], axis=0)

    ws = [stack(n) for n in ("wqkv_t", "bqkv", "wo_t", "bo", "w1_t", "b1",
                             "w2_t", "b2", "ln1w", "ln1b", "ln2w", "ln2b")]
    ws += [params["ln_f_w"], params["ln_f_b"], params["out_w"], params["out_b"]]

    in_specs = [pl.BlockSpec((B, S, D), lambda i: (0, 0, 0))]
    in_specs += [pl.BlockSpec(w.shape, lambda i, nd=w.ndim: (0,) * nd) for w in ws]

    out = pl.pallas_call(
        functools.partial(_fused_forward_kernel,
                          num_heads=num_heads, num_layers=L),
        out_shape=jax.ShapeDtypeStruct((B, 128), jnp.float32),
        grid=(1,),
        in_specs=in_specs,
        out_specs=pl.BlockSpec((B, 128), lambda i: (0, 0)),
        scratch_shapes=[pltpu.VMEM((B, S, D), jnp.bfloat16)],
        compiler_params=pltpu.CompilerParams(
            dimension_semantics=("arbitrary",)),
    )(x, *ws)
    return out[:, 0]                                         # (B,)


# ----------------------------------------------------------------------------
# JAX glue: embeddings / encodings / parameter setup
# ----------------------------------------------------------------------------
def _sinusoidal(t, dim):
    """Standard sinusoidal encoding of continuous position t -> (..., dim)."""
    half_idx = jnp.arange(0, dim, 2, dtype=jnp.float32)
    div = jnp.exp(-math.log(10000.0) * half_idx / dim)
    ang = t[..., None].astype(jnp.float32) * div
    pe = jnp.zeros(t.shape + (dim,), jnp.float32)
    pe = pe.at[..., 0::2].set(jnp.sin(ang))
    pe = pe.at[..., 1::2].set(jnp.cos(ang))
    return pe


def ndvi_transformer_forward(params, ndvi, years, seasons, *,
                             num_heads, start_year):
    B, S = ndvi.shape
    D = params["embed_w"].shape[0]

    # ndvi_embed: Linear(1 -> D)  (elementwise scale + bias since in_features=1)
    emb = ndvi[..., None].astype(jnp.float32) * params["embed_w"][:, 0] + params["embed_b"]

    # TODO(synk): ContinuousTemporalEncoding / SequencePositionalEncoding are not
    # defined in the reference source; implemented as standard sinusoidal
    # encodings (continuous time = (year - start_year) + 0.5 * season).
    t_cont = (years.astype(jnp.float32) - float(start_year)) + 0.5 * seasons.astype(jnp.float32)
    temporal = _sinusoidal(t_cont, D)                                   # (B, S, D)
    positions = jnp.arange(S, dtype=jnp.float32)
    positional = jnp.broadcast_to(_sinusoidal(positions, D)[None], (B, S, D))

    x = emb + temporal + positional          # dropout == identity (eval mode)

    return fused_forward(x, params, num_heads=num_heads)     # (B,)


def init_params(key, embedding_dim, num_encoder_layers, num_features=1):
    D = embedding_dim
    F = D * 4
    keys = jax.random.split(key, 2 + num_encoder_layers * 4)

    def w(k, shape, dtype=jnp.bfloat16, scale=0.02):
        return (scale * jax.random.normal(k, shape, jnp.float32)).astype(dtype)

    params = {
        "embed_w": w(keys[0], (D, num_features), jnp.float32),
        "embed_b": jnp.zeros((D,), jnp.float32),
        "ln_f_w": jnp.ones((1, D), jnp.float32),
        "ln_f_b": jnp.zeros((1, D), jnp.float32),
        "out_w": w(keys[1], (1, D), jnp.float32),
        "out_b": jnp.zeros((1, 1), jnp.float32),
        "layers": [],
    }
    for l in range(num_encoder_layers):
        lk = keys[2 + l * 4: 2 + (l + 1) * 4]
        params["layers"].append({
            # matmul weights stored pre-transposed and in bf16 (MXU-native)
            "wqkv_t": w(lk[0], (D, 3 * D)),
            "bqkv": jnp.zeros((1, 3 * D), jnp.float32),
            "wo_t": w(lk[1], (D, D)),
            "bo": jnp.zeros((1, D), jnp.float32),
            "w1_t": w(lk[2], (D, F)),
            "b1": jnp.zeros((1, F), jnp.float32),
            "w2_t": w(lk[3], (F, D)),
            "b2": jnp.zeros((1, D), jnp.float32),
            "ln1w": jnp.ones((1, D), jnp.float32),
            "ln1b": jnp.zeros((1, D), jnp.float32),
            "ln2w": jnp.ones((1, D), jnp.float32),
            "ln2b": jnp.zeros((1, D), jnp.float32),
        })
    return params


# ----------------------------------------------------------------------------
if __name__ == "__main__":
    embedding_dim = 32
    attn_heads = 4
    num_encoder_layers = 2
    sequence_length = 8
    start_year, end_year = 2000, 2010
    batch = 2

    root = jax.random.PRNGKey(0)
    k_params, k_ndvi, k_years, k_seasons = jax.random.split(root, 4)

    params = init_params(k_params, embedding_dim, num_encoder_layers)

    ndvi = jax.random.uniform(k_ndvi, (batch, sequence_length), jnp.float32)
    years = jax.random.randint(k_years, (batch, sequence_length), start_year, end_year + 1)
    seasons = jax.random.randint(k_seasons, (batch, sequence_length), 0, 2)

    fwd = jax.jit(functools.partial(ndvi_transformer_forward,
                                    num_heads=attn_heads, start_year=start_year))
    out = fwd(params, ndvi, years, seasons)
    out = jax.block_until_ready(out)
    assert out.shape == (batch,)
    print("KERNEL_OK")
</pallas_src>

<mosaic_0001>
module attributes {stable_mosaic.version = 11 : i64} {
  func.func @_fused_forward_kernel(%arg0: i32, %arg1: memref<2x8x32xf32, #tpu.memory_space<vmem>>, %arg2: memref<2x32x96xbf16, #tpu.memory_space<vmem>>, %arg3: memref<2x1x96xf32, #tpu.memory_space<vmem>>, %arg4: memref<2x32x32xbf16, #tpu.memory_space<vmem>>, %arg5: memref<2x1x32xf32, #tpu.memory_space<vmem>>, %arg6: memref<2x32x128xbf16, #tpu.memory_space<vmem>>, %arg7: memref<2x1x128xf32, #tpu.memory_space<vmem>>, %arg8: memref<2x128x32xbf16, #tpu.memory_space<vmem>>, %arg9: memref<2x1x32xf32, #tpu.memory_space<vmem>>, %arg10: memref<2x1x32xf32, #tpu.memory_space<vmem>>, %arg11: memref<2x1x32xf32, #tpu.memory_space<vmem>>, %arg12: memref<2x1x32xf32, #tpu.memory_space<vmem>>, %arg13: memref<2x1x32xf32, #tpu.memory_space<vmem>>, %arg14: memref<1x32xf32, #tpu.memory_space<vmem>>, %arg15: memref<1x32xf32, #tpu.memory_space<vmem>>, %arg16: memref<1x32xf32, #tpu.memory_space<vmem>>, %arg17: memref<1x1xf32, #tpu.memory_space<vmem>>, %arg18: memref<2x128xf32, #tpu.memory_space<vmem>>, %arg19: memref<2x8x32xbf16, #tpu.memory_space<vmem>>) attributes {dimension_semantics = [#tpu.dimension_semantics<arbitrary>], iteration_bounds = array<i64: 1>, scalar_prefetch = 0 : i64, scratch_operands = 1 : i64, tpu.core_type = #tpu.core_type<tc>, window_params = [{pipeline_mode = #tpu.pipeline_mode<synchronous>, transform_indices = @transform_0, window_bounds = array<i64: 2, 8, 32>}, {pipeline_mode = #tpu.pipeline_mode<synchronous>, transform_indices = @transform_1, window_bounds = array<i64: 2, 32, 96>}, {pipeline_mode = #tpu.pipeline_mode<synchronous>, transform_indices = @transform_2, window_bounds = array<i64: 2, 1, 96>}, {pipeline_mode = #tpu.pipeline_mode<synchronous>, transform_indices = @transform_3, window_bounds = array<i64: 2, 32, 32>}, {pipeline_mode = #tpu.pipeline_mode<synchronous>, transform_indices = @transform_4, window_bounds = array<i64: 2, 1, 32>}, {pipeline_mode = #tpu.pipeline_mode<synchronous>, transform_indices = @transform_5, window_bounds = array<i64: 2, 32, 128>}, {pipeline_mode = #tpu.pipeline_mode<synchronous>, transform_indices = @transform_6, window_bounds = array<i64: 2, 1, 128>}, {pipeline_mode = #tpu.pipeline_mode<synchronous>, transform_indices = @transform_7, window_bounds = array<i64: 2, 128, 32>}, {pipeline_mode = #tpu.pipeline_mode<synchronous>, transform_indices = @transform_8, window_bounds = array<i64: 2, 1, 32>}, {pipeline_mode = #tpu.pipeline_mode<synchronous>, transform_indices = @transform_9, window_bounds = array<i64: 2, 1, 32>}, {pipeline_mode = #tpu.pipeline_mode<synchronous>, transform_indices = @transform_10, window_bounds = array<i64: 2, 1, 32>}, {pipeline_mode = #tpu.pipeline_mode<synchronous>, transform_indices = @transform_11, window_bounds = array<i64: 2, 1, 32>}, {pipeline_mode = #tpu.pipeline_mode<synchronous>, transform_indices = @transform_12, window_bounds = array<i64: 2, 1, 32>}, {pipeline_mode = #tpu.pipeline_mode<synchronous>, transform_indices = @transform_13, window_bounds = array<i64: 1, 32>}, {pipeline_mode = #tpu.pipeline_mode<synchronous>, transform_indices = @transform_14, window_bounds = array<i64: 1, 32>}, {pipeline_mode = #tpu.pipeline_mode<synchronous>, transform_indices = @transform_15, window_bounds = array<i64: 1, 32>}, {pipeline_mode = #tpu.pipeline_mode<synchronous>, transform_indices = @transform_16, window_bounds = array<i64: 1, 1>}, {pipeline_mode = #tpu.pipeline_mode<synchronous>, transform_indices = @transform_17, window_bounds = array<i64: 2, 128>}]} {
    %c0 = arith.constant 0 : index
    %c0_0 = arith.constant 0 : index
    %c0_1 = arith.constant 0 : index
    %0 = vector.load %arg1[%c0, %c0_0, %c0_1] : memref<2x8x32xf32, #tpu.memory_space<vmem>>, vector<2x8x32xf32>
    %1 = vector.shape_cast %0 : vector<2x8x32xf32> to vector<16x32xf32>
    %2 = arith.truncf %1 : vector<16x32xf32> to vector<16x32xbf16>
    %c0_2 = arith.constant 0 : index
    %c0_3 = arith.constant 0 : index
    %c0_4 = arith.constant 0 : index
    %3 = vector.load %arg2[%c0_2, %c0_3, %c0_4] : memref<2x32x96xbf16, #tpu.memory_space<vmem>>, vector<1x32x96xbf16>
    %4 = vector.shape_cast %3 : vector<1x32x96xbf16> to vector<32x96xbf16>
    %cst = arith.constant dense<0.000000e+00> : vector<16x96xf32>
    %5 = tpu.matmul %2, %4, %cst {dimension_numbers = #tpu.dot_dimension_numbers<[1], [0], [0], [1], [0, 0, 1, 1], [], []>} : vector<16x32xbf16>, vector<32x96xbf16>, vector<16x96xf32> -> vector<16x96xf32>
    %c0_5 = arith.constant 0 : index
    %c0_6 = arith.constant 0 : index
    %c0_7 = arith.constant 0 : index
    %6 = vector.load %arg3[%c0_5, %c0_6, %c0_7] : memref<2x1x96xf32, #tpu.memory_space<vmem>>, vector<1x1x96xf32>
    %7 = vector.shape_cast %6 : vector<1x1x96xf32> to vector<1x96xf32>
    %8 = vector.broadcast %7 : vector<1x96xf32> to vector<16x96xf32>
    %9 = arith.addf %5, %8 : vector<16x96xf32>
    %10 = vector.extract_strided_slice %9 {offsets = [0, 0], sizes = [16, 32], strides = [1, 1]} : vector<16x96xf32> to vector<16x32xf32>
    %11 = vector.shape_cast %10 : vector<16x32xf32> to vector<2x8x32xf32>
    %12 = arith.truncf %11 : vector<2x8x32xf32> to vector<2x8x32xbf16>
    %13 = vector.extract_strided_slice %9 {offsets = [0, 32], sizes = [16, 32], strides = [1, 1]} : vector<16x96xf32> to vector<16x32xf32>
    %14 = vector.shape_cast %13 : vector<16x32xf32> to vector<2x8x32xf32>
    %15 = arith.truncf %14 : vector<2x8x32xf32> to vector<2x8x32xbf16>
    %16 = vector.extract_strided_slice %9 {offsets = [0, 64], sizes = [16, 32], strides = [1, 1]} : vector<16x96xf32> to vector<16x32xf32>
    %17 = vector.shape_cast %16 : vector<16x32xf32> to vector<2x8x32xf32>
    %18 = arith.truncf %17 : vector<2x8x32xf32> to vector<2x8x32xbf16>
    %19 = vector.extract_strided_slice %12 {offsets = [0, 0, 0], sizes = [2, 8, 8], strides = [1, 1, 1]} : vector<2x8x32xbf16> to vector<2x8x8xbf16>
    %20 = vector.extract_strided_slice %15 {offsets = [0, 0, 0], sizes = [2, 8, 8], strides = [1, 1, 1]} : vector<2x8x32xbf16> to vector<2x8x8xbf16>
    "tpu.trace_start"() <{level = 10 : i32, message = "bqd,bkd->bqk"}> : () -> ()
    %cst_8 = arith.constant dense<0.000000e+00> : vector<2x8x8xf32>
    %21 = tpu.matmul %19, %20, %cst_8 {dimension_numbers = #tpu.dot_dimension_numbers<[2], [2], [1], [1], [0, 0, 0, 1, 1, 1], [0], [0]>} : vector<2x8x8xbf16>, vector<2x8x8xbf16>, vector<2x8x8xf32> -> vector<2x8x8xf32>
    "tpu.trace_stop"() : () -> ()
    %cst_9 = arith.constant 0.353553385 : f32
    %22 = vector.broadcast %cst_9 : f32 to vector<2x8x8xf32>
    %23 = arith.mulf %21, %22 : vector<2x8x8xf32>
    %cst_10 = arith.constant dense<0xFF800000> : vector<2x8xf32>
    %24 = vector.multi_reduction <maximumf>, %23, %cst_10 [2] : vector<2x8x8xf32> to vector<2x8xf32>
    %25 = vector.shape_cast %24 : vector<2x8xf32> to vector<2x8x1xf32>
    %26 = vector.broadcast %25 : vector<2x8x1xf32> to vector<2x8x8xf32>
    %27 = arith.subf %23, %26 : vector<2x8x8xf32>
    %28 = math.exp %27 : vector<2x8x8xf32>
    %cst_11 = arith.constant dense<0.000000e+00> : vector<2x8xf32>
    %29 = vector.multi_reduction <add>, %28, %cst_11 [2] : vector<2x8x8xf32> to vector<2x8xf32>
    %30 = vector.shape_cast %29 : vector<2x8xf32> to vector<2x8x1xf32>
    %31 = tpu.reciprocal %30 {approx = true} : vector<2x8x1xf32> -> vector<2x8x1xf32>
    %32 = vector.broadcast %31 : vector<2x8x1xf32> to vector<2x8x8xf32>
    %33 = arith.mulf %28, %32 : vector<2x8x8xf32>
    %34 = arith.truncf %33 : vector<2x8x8xf32> to vector<2x8x8xbf16>
    %35 = vector.extract_strided_slice %18 {offsets = [0, 0, 0], sizes = [2, 8, 8], strides = [1, 1, 1]} : vector<2x8x32xbf16> to vector<2x8x8xbf16>
    "tpu.trace_start"() <{level = 10 : i32, message = "bqk,bkd->bqd"}> : () -> ()
    %cst_12 = arith.constant dense<0.000000e+00> : vector<2x8x8xf32>
    %36 = tpu.matmul %34, %35, %cst_12 {dimension_numbers = #tpu.dot_dimension_numbers<[2], [1], [1], [2], [0, 0, 0, 1, 1, 2], [0], [0]>} : vector<2x8x8xbf16>, vector<2x8x8xbf16>, vector<2x8x8xf32> -> vector<2x8x8xf32>
    "tpu.trace_stop"() : () -> ()
    %37 = arith.truncf %36 : vector<2x8x8xf32> to vector<2x8x8xbf16>
    %c0_13 = arith.constant 0 : index
    %c0_14 = arith.constant 0 : index
    %c0_15 = arith.constant 0 : index
    %38 = vector.load %arg19[%c0_13, %c0_14, %c0_15] : memref<2x8x32xbf16, #tpu.memory_space<vmem>>, vector<2x8x8xbf16>
    tpu.vector_store %arg19[%c0_13, %c0_14, %c0_15], %37 {strides = array<i32>} : memref<2x8x32xbf16, #tpu.memory_space<vmem>>, vector<2x8x8xbf16>,
    %39 = vector.extract_strided_slice %12 {offsets = [0, 0, 8], sizes = [2, 8, 8], strides = [1, 1, 1]} : vector<2x8x32xbf16> to vector<2x8x8xbf16>
    %40 = vector.extract_strided_slice %15 {offsets = [0, 0, 8], sizes = [2, 8, 8], strides = [1, 1, 1]} : vector<2x8x32xbf16> to vector<2x8x8xbf16>
    "tpu.trace_start"() <{level = 10 : i32, message = "bqd,bkd->bqk"}> : () -> ()
    %cst_16 = arith.constant dense<0.000000e+00> : vector<2x8x8xf32>
    %41 = tpu.matmul %39, %40, %cst_16 {dimension_numbers = #tpu.dot_dimension_numbers<[2], [2], [1], [1], [0, 0, 0, 1, 1, 1], [0], [0]>} : vector<2x8x8xbf16>, vector<2x8x8xbf16>, vector<2x8x8xf32> -> vector<2x8x8xf32>
    "tpu.trace_stop"() : () -> ()
    %cst_17 = arith.constant 0.353553385 : f32
    %42 = vector.broadcast %cst_17 : f32 to vector<2x8x8xf32>
    %43 = arith.mulf %41, %42 : vector<2x8x8xf32>
    %cst_18 = arith.constant dense<0xFF800000> : vector<2x8xf32>
    %44 = vector.multi_reduction <maximumf>, %43, %cst_18 [2] : vector<2x8x8xf32> to vector<2x8xf32>
    %45 = vector.shape_cast %44 : vector<2x8xf32> to vector<2x8x1xf32>
    %46 = vector.broadcast %45 : vector<2x8x1xf32> to vector<2x8x8xf32>
    %47 = arith.subf %43, %46 : vector<2x8x8xf32>
    %48 = math.exp %47 : vector<2x8x8xf32>
    %cst_19 = arith.constant dense<0.000000e+00> : vector<2x8xf32>
    %49 = vector.multi_reduction <add>, %48, %cst_19 [2] : vector<2x8x8xf32> to vector<2x8xf32>
    %50 = vector.shape_cast %49 : vector<2x8xf32> to vector<2x8x1xf32>
    %51 = tpu.reciprocal %50 {approx = true} : vector<2x8x1xf32> -> vector<2x8x1xf32>
    %52 = vector.broadcast %51 : vector<2x8x1xf32> to vector<2x8x8xf32>
    %53 = arith.mulf %48, %52 : vector<2x8x8xf32>
    %54 = arith.truncf %53 : vector<2x8x8xf32> to vector<2x8x8xbf16>
    %55 = vector.extract_strided_slice %18 {offsets = [0, 0, 8], sizes = [2, 8, 8], strides = [1, 1, 1]} : vector<2x8x32xbf16> to vector<2x8x8xbf16>
    "tpu.trace_start"() <{level = 10 : i32, message = "bqk,bkd->bqd"}> : () -> ()
    %cst_20 = arith.constant dense<0.000000e+00> : vector<2x8x8xf32>
    %56 = tpu.matmul %54, %55, %cst_20 {dimension_numbers = #tpu.dot_dimension_numbers<[2], [1], [1], [2], [0, 0, 0, 1, 1, 2], [0], [0]>} : vector<2x8x8xbf16>, vector<2x8x8xbf16>, vector<2x8x8xf32> -> vector<2x8x8xf32>
    "tpu.trace_stop"() : () -> ()
    %57 = arith.truncf %56 : vector<2x8x8xf32> to vector<2x8x8xbf16>
    %c0_21 = arith.constant 0 : index
    %c0_22 = arith.constant 0 : index
    %c8 = arith.constant 8 : index
    %58 = vector.load %arg19[%c0_21, %c0_22, %c8] : memref<2x8x32xbf16, #tpu.memory_space<vmem>>, vector<2x8x8xbf16>
    tpu.vector_store %arg19[%c0_21, %c0_22, %c8], %57 {strides = array<i32>} : memref<2x8x32xbf16, #tpu.memory_space<vmem>>, vector<2x8x8xbf16>,
    %59 = vector.extract_strided_slice %12 {offsets = [0, 0, 16], sizes = [2, 8, 8], strides = [1, 1, 1]} : vector<2x8x32xbf16> to vector<2x8x8xbf16>
    %60 = vector.extract_strided_slice %15 {offsets = [0, 0, 16], sizes = [2, 8, 8], strides = [1, 1, 1]} : vector<2x8x32xbf16> to vector<2x8x8xbf16>
    "tpu.trace_start"() <{level = 10 : i32, message = "bqd,bkd->bqk"}> : () -> ()
    %cst_23 = arith.constant dense<0.000000e+00> : vector<2x8x8xf32>
    %61 = tpu.matmul %59, %60, %cst_23 {dimension_numbers = #tpu.dot_dimension_numbers<[2], [2], [1], [1], [0, 0, 0, 1, 1, 1], [0], [0]>} : vector<2x8x8xbf16>, vector<2x8x8xbf16>, vector<2x8x8xf32> -> vector<2x8x8xf32>
    "tpu.trace_stop"() : () -> ()
    %cst_24 = arith.constant 0.353553385 : f32
    %62 = vector.broadcast %cst_24 : f32 to vector<2x8x8xf32>
    %63 = arith.mulf %61, %62 : vector<2x8x8xf32>
    %cst_25 = arith.constant dense<0xFF800000> : vector<2x8xf32>
    %64 = vector.multi_reduction <maximumf>, %63, %cst_25 [2] : vector<2x8x8xf32> to vector<2x8xf32>
    %65 = vector.shape_cast %64 : vector<2x8xf32> to vector<2x8x1xf32>
    %66 = vector.broadcast %65 : vector<2x8x1xf32> to vector<2x8x8xf32>
    %67 = arith.subf %63, %66 : vector<2x8x8xf32>
    %68 = math.exp %67 : vector<2x8x8xf32>
    %cst_26 = arith.constant dense<0.000000e+00> : vector<2x8xf32>
    %69 = vector.multi_reduction <add>, %68, %cst_26 [2] : vector<2x8x8xf32> to vector<2x8xf32>
    %70 = vector.shape_cast %69 : vector<2x8xf32> to vector<2x8x1xf32>
    %71 = tpu.reciprocal %70 {approx = true} : vector<2x8x1xf32> -> vector<2x8x1xf32>
    %72 = vector.broadcast %71 : vector<2x8x1xf32> to vector<2x8x8xf32>
    %73 = arith.mulf %68, %72 : vector<2x8x8xf32>
    %74 = arith.truncf %73 : vector<2x8x8xf32> to vector<2x8x8xbf16>
    %75 = vector.extract_strided_slice %18 {offsets = [0, 0, 16], sizes = [2, 8, 8], strides = [1, 1, 1]} : vector<2x8x32xbf16> to vector<2x8x8xbf16>
    "tpu.trace_start"() <{level = 10 : i32, message = "bqk,bkd->bqd"}> : () -> ()
    %cst_27 = arith.constant dense<0.000000e+00> : vector<2x8x8xf32>
    %76 = tpu.matmul %74, %75, %cst_27 {dimension_numbers = #tpu.dot_dimension_numbers<[2], [1], [1], [2], [0, 0, 0, 1, 1, 2], [0], [0]>} : vector<2x8x8xbf16>, vector<2x8x8xbf16>, vector<2x8x8xf32> -> vector<2x8x8xf32>
    "tpu.trace_stop"() : () -> ()
    %77 = arith.truncf %76 : vector<2x8x8xf32> to vector<2x8x8xbf16>
    %c0_28 = arith.constant 0 : index
    %c0_29 = arith.constant 0 : index
    %c16 = arith.constant 16 : index
    %78 = vector.load %arg19[%c0_28, %c0_29, %c16] : memref<2x8x32xbf16, #tpu.memory_space<vmem>>, vector<2x8x8xbf16>
    tpu.vector_store %arg19[%c0_28, %c0_29, %c16], %77 {strides = array<i32>} : memref<2x8x32xbf16, #tpu.memory_space<vmem>>, vector<2x8x8xbf16>,
    %79 = vector.extract_strided_slice %12 {offsets = [0, 0, 24], sizes = [2, 8, 8], strides = [1, 1, 1]} : vector<2x8x32xbf16> to vector<2x8x8xbf16>
    %80 = vector.extract_strided_slice %15 {offsets = [0, 0, 24], sizes = [2, 8, 8], strides = [1, 1, 1]} : vector<2x8x32xbf16> to vector<2x8x8xbf16>
    "tpu.trace_start"() <{level = 10 : i32, message = "bqd,bkd->bqk"}> : () -> ()
    %cst_30 = arith.constant dense<0.000000e+00> : vector<2x8x8xf32>
    %81 = tpu.matmul %79, %80, %cst_30 {dimension_numbers = #tpu.dot_dimension_numbers<[2], [2], [1], [1], [0, 0, 0, 1, 1, 1], [0], [0]>} : vector<2x8x8xbf16>, vector<2x8x8xbf16>, vector<2x8x8xf32> -> vector<2x8x8xf32>
    "tpu.trace_stop"() : () -> ()
    %cst_31 = arith.constant 0.353553385 : f32
    %82 = vector.broadcast %cst_31 : f32 to vector<2x8x8xf32>
    %83 = arith.mulf %81, %82 : vector<2x8x8xf32>
    %cst_32 = arith.constant dense<0xFF800000> : vector<2x8xf32>
    %84 = vector.multi_reduction <maximumf>, %83, %cst_32 [2] : vector<2x8x8xf32> to vector<2x8xf32>
    %85 = vector.shape_cast %84 : vector<2x8xf32> to vector<2x8x1xf32>
    %86 = vector.broadcast %85 : vector<2x8x1xf32> to vector<2x8x8xf32>
    %87 = arith.subf %83, %86 : vector<2x8x8xf32>
    %88 = math.exp %87 : vector<2x8x8xf32>
    %cst_33 = arith.constant dense<0.000000e+00> : vector<2x8xf32>
    %89 = vector.multi_reduction <add>, %88, %cst_33 [2] : vector<2x8x8xf32> to vector<2x8xf32>
    %90 = vector.shape_cast %89 : vector<2x8xf32> to vector<2x8x1xf32>
    %91 = tpu.reciprocal %90 {approx = true} : vector<2x8x1xf32> -> vector<2x8x1xf32>
    %92 = vector.broadcast %91 : vector<2x8x1xf32> to vector<2x8x8xf32>
    %93 = arith.mulf %88, %92 : vector<2x8x8xf32>
    %94 = arith.truncf %93 : vector<2x8x8xf32> to vector<2x8x8xbf16>
    %95 = vector.extract_strided_slice %18 {offsets = [0, 0, 24], sizes = [2, 8, 8], strides = [1, 1, 1]} : vector<2x8x32xbf16> to vector<2x8x8xbf16>
    "tpu.trace_start"() <{level = 10 : i32, message = "bqk,bkd->bqd"}> : () -> ()
    %cst_34 = arith.constant dense<0.000000e+00> : vector<2x8x8xf32>
    %96 = tpu.matmul %94, %95, %cst_34 {dimension_numbers = #tpu.dot_dimension_numbers<[2], [1], [1], [2], [0, 0, 0, 1, 1, 2], [0], [0]>} : vector<2x8x8xbf16>, vector<2x8x8xbf16>, vector<2x8x8xf32> -> vector<2x8x8xf32>
    "tpu.trace_stop"() : () -> ()
    %97 = arith.truncf %96 : vector<2x8x8xf32> to vector<2x8x8xbf16>
    %c0_35 = arith.constant 0 : index
    %c0_36 = arith.constant 0 : index
    %c24 = arith.constant 24 : index
    %98 = vector.load %arg19[%c0_35, %c0_36, %c24] : memref<2x8x32xbf16, #tpu.memory_space<vmem>>, vector<2x8x8xbf16>
    tpu.vector_store %arg19[%c0_35, %c0_36, %c24], %97 {strides = array<i32>} : memref<2x8x32xbf16, #tpu.memory_space<vmem>>, vector<2x8x8xbf16>,
    %c0_37 = arith.constant 0 : index
    %c0_38 = arith.constant 0 : index
    %c0_39 = arith.constant 0 : index
    %99 = vector.load %arg19[%c0_37, %c0_38, %c0_39] : memref<2x8x32xbf16, #tpu.memory_space<vmem>>, vector<2x8x32xbf16>
    %100 = vector.shape_cast %99 : vector<2x8x32xbf16> to vector<16x32xbf16>
    %c0_40 = arith.constant 0 : index
    %c0_41 = arith.constant 0 : index
    %c0_42 = arith.constant 0 : index
    %101 = vector.load %arg4[%c0_40, %c0_41, %c0_42] : memref<2x32x32xbf16, #tpu.memory_space<vmem>>, vector<1x32x32xbf16>
    %102 = vector.shape_cast %101 : vector<1x32x32xbf16> to vector<32x32xbf16>
    %cst_43 = arith.constant dense<0.000000e+00> : vector<16x32xf32>
    %103 = tpu.matmul %100, %102, %cst_43 {dimension_numbers = #tpu.dot_dimension_numbers<[1], [0], [0], [1], [0, 0, 1, 1], [], []>} : vector<16x32xbf16>, vector<32x32xbf16>, vector<16x32xf32> -> vector<16x32xf32>
    %c0_44 = arith.constant 0 : index
    %c0_45 = arith.constant 0 : index
    %c0_46 = arith.constant 0 : index
    %104 = vector.load %arg5[%c0_44, %c0_45, %c0_46] : memref<2x1x32xf32, #tpu.memory_space<vmem>>, vector<1x1x32xf32>
    %105 = vector.shape_cast %104 : vector<1x1x32xf32> to vector<1x32xf32>
    %106 = vector.broadcast %105 : vector<1x32xf32> to vector<16x32xf32>
    %107 = arith.addf %103, %106 : vector<16x32xf32>
    %108 = arith.addf %1, %107 : vector<16x32xf32>
    %c0_47 = arith.constant 0 : index
    %c0_48 = arith.constant 0 : index
    %c0_49 = arith.constant 0 : index
    %109 = vector.load %arg10[%c0_47, %c0_48, %c0_49] : memref<2x1x32xf32, #tpu.memory_space<vmem>>, vector<1x1x32xf32>
    %110 = vector.shape_cast %109 : vector<1x1x32xf32> to vector<1x32xf32>
    %c0_50 = arith.constant 0 : index
    %c0_51 = arith.constant 0 : index
    %c0_52 = arith.constant 0 : index
    %111 = vector.load %arg11[%c0_50, %c0_51, %c0_52] : memref<2x1x32xf32, #tpu.memory_space<vmem>>, vector<1x1x32xf32>
    %112 = vector.shape_cast %111 : vector<1x1x32xf32> to vector<1x32xf32>
    %cst_53 = arith.constant dense<0.000000e+00> : vector<16xf32>
    %113 = vector.multi_reduction <add>, %108, %cst_53 [1] : vector<16x32xf32> to vector<16xf32>
    %114 = vector.shape_cast %113 : vector<16xf32> to vector<16x1xf32>
    %cst_54 = arith.constant 3.200000e+01 : f32
    %115 = vector.broadcast %cst_54 : f32 to vector<16x1xf32>
    %116 = arith.divf %114, %115 : vector<16x1xf32>
    %117 = vector.broadcast %116 : vector<16x1xf32> to vector<16x32xf32>
    %118 = arith.subf %108, %117 : vector<16x32xf32>
    %119 = arith.mulf %118, %118 : vector<16x32xf32>
    %cst_55 = arith.constant dense<0.000000e+00> : vector<16xf32>
    %120 = vector.multi_reduction <add>, %119, %cst_55 [1] : vector<16x32xf32> to vector<16xf32>
    %121 = vector.shape_cast %120 : vector<16xf32> to vector<16x1xf32>
    %cst_56 = arith.constant 3.200000e+01 : f32
    %122 = vector.broadcast %cst_56 : f32 to vector<16x1xf32>
    %123 = arith.divf %121, %122 : vector<16x1xf32>
    %124 = vector.broadcast %116 : vector<16x1xf32> to vector<16x32xf32>
    %125 = arith.subf %108, %124 : vector<16x32xf32>
    %cst_57 = arith.constant 9.99999974E-6 : f32
    %126 = vector.broadcast %cst_57 : f32 to vector<16x1xf32>
    %127 = arith.addf %123, %126 : vector<16x1xf32>
    %128 = math.rsqrt %127 : vector<16x1xf32>
    %129 = vector.broadcast %128 : vector<16x1xf32> to vector<16x32xf32>
    %130 = arith.mulf %125, %129 : vector<16x32xf32>
    %131 = vector.broadcast %110 : vector<1x32xf32> to vector<16x32xf32>
    %132 = arith.mulf %130, %131 : vector<16x32xf32>
    %133 = vector.broadcast %112 : vector<1x32xf32> to vector<16x32xf32>
    %134 = arith.addf %132, %133 : vector<16x32xf32>
    %135 = arith.truncf %134 : vector<16x32xf32> to vector<16x32xbf16>
    %c0_58 = arith.constant 0 : index
    %c0_59 = arith.constant 0 : index
    %c0_60 = arith.constant 0 : index
    %136 = vector.load %arg6[%c0_58, %c0_59, %c0_60] : memref<2x32x128xbf16, #tpu.memory_space<vmem>>, vector<1x32x128xbf16>
    %137 = vector.shape_cast %136 : vector<1x32x128xbf16> to vector<32x128xbf16>
    %cst_61 = arith.constant dense<0.000000e+00> : vector<16x128xf32>
    %138 = tpu.matmul %135, %137, %cst_61 {dimension_numbers = #tpu.dot_dimension_numbers<[1], [0], [0], [1], [0, 0, 1, 1], [], []>} : vector<16x32xbf16>, vector<32x128xbf16>, vector<16x128xf32> -> vector<16x128xf32>
    %c0_62 = arith.constant 0 : index
    %c0_63 = arith.constant 0 : index
    %c0_64 = arith.constant 0 : index
    %139 = vector.load %arg7[%c0_62, %c0_63, %c0_64] : memref<2x1x128xf32, #tpu.memory_space<vmem>>, vector<1x1x128xf32>
    %140 = vector.shape_cast %139 : vector<1x1x128xf32> to vector<1x128xf32>
    %141 = vector.broadcast %140 : vector<1x128xf32> to vector<16x128xf32>
    %142 = arith.addf %138, %141 : vector<16x128xf32>
    %cst_65 = arith.constant 0.000000e+00 : f32
    %143 = vector.broadcast %cst_65 : f32 to vector<16x128xf32>
    %144 = arith.maximumf %142, %143 : vector<16x128xf32>
    %145 = arith.truncf %144 : vector<16x128xf32> to vector<16x128xbf16>
    %c0_66 = arith.constant 0 : index
    %c0_67 = arith.constant 0 : index
    %c0_68 = arith.constant 0 : index
    %146 = vector.load %arg8[%c0_66, %c0_67, %c0_68] : memref<2x128x32xbf16, #tpu.memory_space<vmem>>, vector<1x128x32xbf16>
    %147 = vector.shape_cast %146 : vector<1x128x32xbf16> to vector<128x32xbf16>
    %cst_69 = arith.constant dense<0.000000e+00> : vector<16x32xf32>
    %148 = tpu.matmul %145, %147, %cst_69 {dimension_numbers = #tpu.dot_dimension_numbers<[1], [0], [0], [1], [0, 0, 1, 1], [], []>} : vector<16x128xbf16>, vector<128x32xbf16>, vector<16x32xf32> -> vector<16x32xf32>
    %c0_70 = arith.constant 0 : index
    %c0_71 = arith.constant 0 : index
    %c0_72 = arith.constant 0 : index
    %149 = vector.load %arg9[%c0_70, %c0_71, %c0_72] : memref<2x1x32xf32, #tpu.memory_space<vmem>>, vector<1x1x32xf32>
    %150 = vector.shape_cast %149 : vector<1x1x32xf32> to vector<1x32xf32>
    %151 = vector.broadcast %150 : vector<1x32xf32> to vector<16x32xf32>
    %152 = arith.addf %148, %151 : vector<16x32xf32>
    %153 = arith.addf %134, %152 : vector<16x32xf32>
    %c0_73 = arith.constant 0 : index
    %c0_74 = arith.constant 0 : index
    %c0_75 = arith.constant 0 : index
    %154 = vector.load %arg12[%c0_73, %c0_74, %c0_75] : memref<2x1x32xf32, #tpu.memory_space<vmem>>, vector<1x1x32xf32>
    %155 = vector.shape_cast %154 : vector<1x1x32xf32> to vector<1x32xf32>
    %c0_76 = arith.constant 0 : index
    %c0_77 = arith.constant 0 : index
    %c0_78 = arith.constant 0 : index
    %156 = vector.load %arg13[%c0_76, %c0_77, %c0_78] : memref<2x1x32xf32, #tpu.memory_space<vmem>>, vector<1x1x32xf32>
    %157 = vector.shape_cast %156 : vector<1x1x32xf32> to vector<1x32xf32>
    %cst_79 = arith.constant dense<0.000000e+00> : vector<16xf32>
    %158 = vector.multi_reduction <add>, %153, %cst_79 [1] : vector<16x32xf32> to vector<16xf32>
    %159 = vector.shape_cast %158 : vector<16xf32> to vector<16x1xf32>
    %cst_80 = arith.constant 3.200000e+01 : f32
    %160 = vector.broadcast %cst_80 : f32 to vector<16x1xf32>
    %161 = arith.divf %159, %160 : vector<16x1xf32>
    %162 = vector.broadcast %161 : vector<16x1xf32> to vector<16x32xf32>
    %163 = arith.subf %153, %162 : vector<16x32xf32>
    %164 = arith.mulf %163, %163 : vector<16x32xf32>
    %cst_81 = arith.constant dense<0.000000e+00> : vector<16xf32>
    %165 = vector.multi_reduction <add>, %164, %cst_81 [1] : vector<16x32xf32> to vector<16xf32>
    %166 = vector.shape_cast %165 : vector<16xf32> to vector<16x1xf32>
    %cst_82 = arith.constant 3.200000e+01 : f32
    %167 = vector.broadcast %cst_82 : f32 to vector<16x1xf32>
    %168 = arith.divf %166, %167 : vector<16x1xf32>
    %169 = vector.broadcast %161 : vector<16x1xf32> to vector<16x32xf32>
    %170 = arith.subf %153, %169 : vector<16x32xf32>
    %cst_83 = arith.constant 9.99999974E-6 : f32
    %171 = vector.broadcast %cst_83 : f32 to vector<16x1xf32>
    %172 = arith.addf %168, %171 : vector<16x1xf32>
    %173 = math.rsqrt %172 : vector<16x1xf32>
    %174 = vector.broadcast %173 : vector<16x1xf32> to vector<16x32xf32>
    %175 = arith.mulf %170, %174 : vector<16x32xf32>
    %176 = vector.broadcast %155 : vector<1x32xf32> to vector<16x32xf32>
    %177 = arith.mulf %175, %176 : vector<16x32xf32>
    %178 = vector.broadcast %157 : vector<1x32xf32> to vector<16x32xf32>
    %179 = arith.addf %177, %178 : vector<16x32xf32>
    %180 = arith.truncf %179 : vector<16x32xf32> to vector<16x32xbf16>
    %c1 = arith.constant 1 : index
    %c0_84 = arith.constant 0 : index
    %c0_85 = arith.constant 0 : index
    %181 = vector.load %arg2[%c1, %c0_84, %c0_85] : memref<2x32x96xbf16, #tpu.memory_space<vmem>>, vector<1x32x96xbf16>
    %182 = vector.shape_cast %181 : vector<1x32x96xbf16> to vector<32x96xbf16>
    %cst_86 = arith.constant dense<0.000000e+00> : vector<16x96xf32>
    %183 = tpu.matmul %180, %182, %cst_86 {dimension_numbers = #tpu.dot_dimension_numbers<[1], [0], [0], [1], [0, 0, 1, 1], [], []>} : vector<16x32xbf16>, vector<32x96xbf16>, vector<16x96xf32> -> vector<16x96xf32>
    %c1_87 = arith.constant 1 : index
    %c0_88 = arith.constant 0 : index
    %c0_89 = arith.constant 0 : index
    %184 = vector.load %arg3[%c1_87, %c0_88, %c0_89] : memref<2x1x96xf32, #tpu.memory_space<vmem>>, vector<1x1x96xf32>
    %185 = vector.shape_cast %184 : vector<1x1x96xf32> to vector<1x96xf32>
    %186 = vector.broadcast %185 : vector<1x96xf32> to vector<16x96xf32>
    %187 = arith.addf %183, %186 : vector<16x96xf32>
    %188 = vector.extract_strided_slice %187 {offsets = [0, 0], sizes = [16, 32], strides = [1, 1]} : vector<16x96xf32> to vector<16x32xf32>
    %189 = vector.shape_cast %188 : vector<16x32xf32> to vector<2x8x32xf32>
    %190 = arith.truncf %189 : vector<2x8x32xf32> to vector<2x8x32xbf16>
    %191 = vector.extract_strided_slice %187 {offsets = [0, 32], sizes = [16, 32], strides = [1, 1]} : vector<16x96xf32> to vector<16x32xf32>
    %192 = vector.shape_cast %191 : vector<16x32xf32> to vector<2x8x32xf32>
    %193 = arith.truncf %192 : vector<2x8x32xf32> to vector<2x8x32xbf16>
    %194 = vector.extract_strided_slice %187 {offsets = [0, 64], sizes = [16, 32], strides = [1, 1]} : vector<16x96xf32> to vector<16x32xf32>
    %195 = vector.shape_cast %194 : vector<16x32xf32> to vector<2x8x32xf32>
    %196 = arith.truncf %195 : vector<2x8x32xf32> to vector<2x8x32xbf16>
    %197 = vector.extract_strided_slice %190 {offsets = [0, 0, 0], sizes = [2, 8, 8], strides = [1, 1, 1]} : vector<2x8x32xbf16> to vector<2x8x8xbf16>
    %198 = vector.extract_strided_slice %193 {offsets = [0, 0, 0], sizes = [2, 8, 8], strides = [1, 1, 1]} : vector<2x8x32xbf16> to vector<2x8x8xbf16>
    "tpu.trace_start"() <{level = 10 : i32, message = "bqd,bkd->bqk"}> : () -> ()
    %cst_90 = arith.constant dense<0.000000e+00> : vector<2x8x8xf32>
    %199 = tpu.matmul %197, %198, %cst_90 {dimension_numbers = #tpu.dot_dimension_numbers<[2], [2], [1], [1], [0, 0, 0, 1, 1, 1], [0], [0]>} : vector<2x8x8xbf16>, vector<2x8x8xbf16>, vector<2x8x8xf32> -> vector<2x8x8xf32>
    "tpu.trace_stop"() : () -> ()
    %cst_91 = arith.constant 0.353553385 : f32
    %200 = vector.broadcast %cst_91 : f32 to vector<2x8x8xf32>
    %201 = arith.mulf %199, %200 : vector<2x8x8xf32>
    %cst_92 = arith.constant dense<0xFF800000> : vector<2x8xf32>
    %202 = vector.multi_reduction <maximumf>, %201, %cst_92 [2] : vector<2x8x8xf32> to vector<2x8xf32>
    %203 = vector.shape_cast %202 : vector<2x8xf32> to vector<2x8x1xf32>
    %204 = vector.broadcast %203 : vector<2x8x1xf32> to vector<2x8x8xf32>
    %205 = arith.subf %201, %204 : vector<2x8x8xf32>
    %206 = math.exp %205 : vector<2x8x8xf32>
    %cst_93 = arith.constant dense<0.000000e+00> : vector<2x8xf32>
    %207 = vector.multi_reduction <add>, %206, %cst_93 [2] : vector<2x8x8xf32> to vector<2x8xf32>
    %208 = vector.shape_cast %207 : vector<2x8xf32> to vector<2x8x1xf32>
    %209 = tpu.reciprocal %208 {approx = true} : vector<2x8x1xf32> -> vector<2x8x1xf32>
    %210 = vector.broadcast %209 : vector<2x8x1xf32> to vector<2x8x8xf32>
    %211 = arith.mulf %206, %210 : vector<2x8x8xf32>
    %212 = arith.truncf %211 : vector<2x8x8xf32> to vector<2x8x8xbf16>
    %213 = vector.extract_strided_slice %196 {offsets = [0, 0, 0], sizes = [2, 8, 8], strides = [1, 1, 1]} : vector<2x8x32xbf16> to vector<2x8x8xbf16>
    "tpu.trace_start"() <{level = 10 : i32, message = "bqk,bkd->bqd"}> : () -> ()
    %cst_94 = arith.constant dense<0.000000e+00> : vector<2x8x8xf32>
    %214 = tpu.matmul %212, %213, %cst_94 {dimension_numbers = #tpu.dot_dimension_numbers<[2], [1], [1], [2], [0, 0, 0, 1, 1, 2], [0], [0]>} : vector<2x8x8xbf16>, vector<2x8x8xbf16>, vector<2x8x8xf32> -> vector<2x8x8xf32>
    "tpu.trace_stop"() : () -> ()
    %215 = arith.truncf %214 : vector<2x8x8xf32> to vector<2x8x8xbf16>
    %c0_95 = arith.constant 0 : index
    %c0_96 = arith.constant 0 : index
    %c0_97 = arith.constant 0 : index
    %216 = vector.load %arg19[%c0_95, %c0_96, %c0_97] : memref<2x8x32xbf16, #tpu.memory_space<vmem>>, vector<2x8x8xbf16>
    tpu.vector_store %arg19[%c0_95, %c0_96, %c0_97], %215 {strides = array<i32>} : memref<2x8x32xbf16, #tpu.memory_space<vmem>>, vector<2x8x8xbf16>,
    %217 = vector.extract_strided_slice %190 {offsets = [0, 0, 8], sizes = [2, 8, 8], strides = [1, 1, 1]} : vector<2x8x32xbf16> to vector<2x8x8xbf16>
    %218 = vector.extract_strided_slice %193 {offsets = [0, 0, 8], sizes = [2, 8, 8], strides = [1, 1, 1]} : vector<2x8x32xbf16> to vector<2x8x8xbf16>
    "tpu.trace_start"() <{level = 10 : i32, message = "bqd,bkd->bqk"}> : () -> ()
    %cst_98 = arith.constant dense<0.000000e+00> : vector<2x8x8xf32>
    %219 = tpu.matmul %217, %218, %cst_98 {dimension_numbers = #tpu.dot_dimension_numbers<[2], [2], [1], [1], [0, 0, 0, 1, 1, 1], [0], [0]>} : vector<2x8x8xbf16>, vector<2x8x8xbf16>, vector<2x8x8xf32> -> vector<2x8x8xf32>
    "tpu.trace_stop"() : () -> ()
    %cst_99 = arith.constant 0.353553385 : f32
    %220 = vector.broadcast %cst_99 : f32 to vector<2x8x8xf32>
    %221 = arith.mulf %219, %220 : vector<2x8x8xf32>
    %cst_100 = arith.constant dense<0xFF800000> : vector<2x8xf32>
    %222 = vector.multi_reduction <maximumf>, %221, %cst_100 [2] : vector<2x8x8xf32> to vector<2x8xf32>
    %223 = vector.shape_cast %222 : vector<2x8xf32> to vector<2x8x1xf32>
    %224 = vector.broadcast %223 : vector<2x8x1xf32> to vector<2x8x8xf32>
    %225 = arith.subf %221, %224 : vector<2x8x8xf32>
    %226 = math.exp %225 : vector<2x8x8xf32>
    %cst_101 = arith.constant dense<0.000000e+00> : vector<2x8xf32>
    %227 = vector.multi_reduction <add>, %226, %cst_101 [2] : vector<2x8x8xf32> to vector<2x8xf32>
    %228 = vector.shape_cast %227 : vector<2x8xf32> to vector<2x8x1xf32>
    %229 = tpu.reciprocal %228 {approx = true} : vector<2x8x1xf32> -> vector<2x8x1xf32>
    %230 = vector.broadcast %229 : vector<2x8x1xf32> to vector<2x8x8xf32>
    %231 = arith.mulf %226, %230 : vector<2x8x8xf32>
    %232 = arith.truncf %231 : vector<2x8x8xf32> to vector<2x8x8xbf16>
    %233 = vector.extract_strided_slice %196 {offsets = [0, 0, 8], sizes = [2, 8, 8], strides = [1, 1, 1]} : vector<2x8x32xbf16> to vector<2x8x8xbf16>
    "tpu.trace_start"() <{level = 10 : i32, message = "bqk,bkd->bqd"}> : () -> ()
    %cst_102 = arith.constant dense<0.000000e+00> : vector<2x8x8xf32>
    %234 = tpu.matmul %232, %233, %cst_102 {dimension_numbers = #tpu.dot_dimension_numbers<[2], [1], [1], [2], [0, 0, 0, 1, 1, 2], [0], [0]>} : vector<2x8x8xbf16>, vector<2x8x8xbf16>, vector<2x8x8xf32> -> vector<2x8x8xf32>
    "tpu.trace_stop"() : () -> ()
    %235 = arith.truncf %234 : vector<2x8x8xf32> to vector<2x8x8xbf16>
    %c0_103 = arith.constant 0 : index
    %c0_104 = arith.constant 0 : index
    %c8_105 = arith.constant 8 : index
    %236 = vector.load %arg19[%c0_103, %c0_104, %c8_105] : memref<2x8x32xbf16, #tpu.memory_space<vmem>>, vector<2x8x8xbf16>
    tpu.vector_store %arg19[%c0_103, %c0_104, %c8_105], %235 {strides = array<i32>} : memref<2x8x32xbf16, #tpu.memory_space<vmem>>, vector<2x8x8xbf16>,
    %237 = vector.extract_strided_slice %190 {offsets = [0, 0, 16], sizes = [2, 8, 8], strides = [1, 1, 1]} : vector<2x8x32xbf16> to vector<2x8x8xbf16>
    %238 = vector.extract_strided_slice %193 {offsets = [0, 0, 16], sizes = [2, 8, 8], strides = [1, 1, 1]} : vector<2x8x32xbf16> to vector<2x8x8xbf16>
    "tpu.trace_start"() <{level = 10 : i32, message = "bqd,bkd->bqk"}> : () -> ()
    %cst_106 = arith.constant dense<0.000000e+00> : vector<2x8x8xf32>
    %239 = tpu.matmul %237, %238, %cst_106 {dimension_numbers = #tpu.dot_dimension_numbers<[2], [2], [1], [1], [0, 0, 0, 1, 1, 1], [0], [0]>} : vector<2x8x8xbf16>, vector<2x8x8xbf16>, vector<2x8x8xf32> -> vector<2x8x8xf32>
    "tpu.trace_stop"() : () -> ()
    %cst_107 = arith.constant 0.353553385 : f32
    %240 = vector.broadcast %cst_107 : f32 to vector<2x8x8xf32>
    %241 = arith.mulf %239, %240 : vector<2x8x8xf32>
    %cst_108 = arith.constant dense<0xFF800000> : vector<2x8xf32>
    %242 = vector.multi_reduction <maximumf>, %241, %cst_108 [2] : vector<2x8x8xf32> to vector<2x8xf32>
    %243 = vector.shape_cast %242 : vector<2x8xf32> to vector<2x8x1xf32>
    %244 = vector.broadcast %243 : vector<2x8x1xf32> to vector<2x8x8xf32>
    %245 = arith.subf %241, %244 : vector<2x8x8xf32>
    %246 = math.exp %245 : vector<2x8x8xf32>
    %cst_109 = arith.constant dense<0.000000e+00> : vector<2x8xf32>
    %247 = vector.multi_reduction <add>, %246, %cst_109 [2] : vector<2x8x8xf32> to vector<2x8xf32>
    %248 = vector.shape_cast %247 : vector<2x8xf32> to vector<2x8x1xf32>
    %249 = tpu.reciprocal %248 {approx = true} : vector<2x8x1xf32> -> vector<2x8x1xf32>
    %250 = vector.broadcast %249 : vector<2x8x1xf32> to vector<2x8x8xf32>
    %251 = arith.mulf %246, %250 : vector<2x8x8xf32>
    %252 = arith.truncf %251 : vector<2x8x8xf32> to vector<2x8x8xbf16>
    %253 = vector.extract_strided_slice %196 {offsets = [0, 0, 16], sizes = [2, 8, 8], strides = [1, 1, 1]} : vector<2x8x32xbf16> to vector<2x8x8xbf16>
    "tpu.trace_start"() <{level = 10 : i32, message = "bqk,bkd->bqd"}> : () -> ()
    %cst_110 = arith.constant dense<0.000000e+00> : vector<2x8x8xf32>
    %254 = tpu.matmul %252, %253, %cst_110 {dimension_numbers = #tpu.dot_dimension_numbers<[2], [1], [1], [2], [0, 0, 0, 1, 1, 2], [0], [0]>} : vector<2x8x8xbf16>, vector<2x8x8xbf16>, vector<2x8x8xf32> -> vector<2x8x8xf32>
    "tpu.trace_stop"() : () -> ()
    %255 = arith.truncf %254 : vector<2x8x8xf32> to vector<2x8x8xbf16>
    %c0_111 = arith.constant 0 : index
    %c0_112 = arith.constant 0 : index
    %c16_113 = arith.constant 16 : index
    %256 = vector.load %arg19[%c0_111, %c0_112, %c16_113] : memref<2x8x32xbf16, #tpu.memory_space<vmem>>, vector<2x8x8xbf16>
    tpu.vector_store %arg19[%c0_111, %c0_112, %c16_113], %255 {strides = array<i32>} : memref<2x8x32xbf16, #tpu.memory_space<vmem>>, vector<2x8x8xbf16>,
    %257 = vector.extract_strided_slice %190 {offsets = [0, 0, 24], sizes = [2, 8, 8], strides = [1, 1, 1]} : vector<2x8x32xbf16> to vector<2x8x8xbf16>
    %258 = vector.extract_strided_slice %193 {offsets = [0, 0, 24], sizes = [2, 8, 8], strides = [1, 1, 1]} : vector<2x8x32xbf16> to vector<2x8x8xbf16>
    "tpu.trace_start"() <{level = 10 : i32, message = "bqd,bkd->bqk"}> : () -> ()
    %cst_114 = arith.constant dense<0.000000e+00> : vector<2x8x8xf32>
    %259 = tpu.matmul %257, %258, %cst_114 {dimension_numbers = #tpu.dot_dimension_numbers<[2], [2], [1], [1], [0, 0, 0, 1, 1, 1], [0], [0]>} : vector<2x8x8xbf16>, vector<2x8x8xbf16>, vector<2x8x8xf32> -> vector<2x8x8xf32>
    "tpu.trace_stop"() : () -> ()
    %cst_115 = arith.constant 0.353553385 : f32
    %260 = vector.broadcast %cst_115 : f32 to vector<2x8x8xf32>
    %261 = arith.mulf %259, %260 : vector<2x8x8xf32>
    %cst_116 = arith.constant dense<0xFF800000> : vector<2x8xf32>
    %262 = vector.multi_reduction <maximumf>, %261, %cst_116 [2] : vector<2x8x8xf32> to vector<2x8xf32>
    %263 = vector.shape_cast %262 : vector<2x8xf32> to vector<2x8x1xf32>
    %264 = vector.broadcast %263 : vector<2x8x1xf32> to vector<2x8x8xf32>
    %265 = arith.subf %261, %264 : vector<2x8x8xf32>
    %266 = math.exp %265 : vector<2x8x8xf32>
    %cst_117 = arith.constant dense<0.000000e+00> : vector<2x8xf32>
    %267 = vector.multi_reduction <add>, %266, %cst_117 [2] : vector<2x8x8xf32> to vector<2x8xf32>
    %268 = vector.shape_cast %267 : vector<2x8xf32> to vector<2x8x1xf32>
    %269 = tpu.reciprocal %268 {approx = true} : vector<2x8x1xf32> -> vector<2x8x1xf32>
    %270 = vector.broadcast %269 : vector<2x8x1xf32> to vector<2x8x8xf32>
    %271 = arith.mulf %266, %270 : vector<2x8x8xf32>
    %272 = arith.truncf %271 : vector<2x8x8xf32> to vector<2x8x8xbf16>
    %273 = vector.extract_strided_slice %196 {offsets = [0, 0, 24], sizes = [2, 8, 8], strides = [1, 1, 1]} : vector<2x8x32xbf16> to vector<2x8x8xbf16>
    "tpu.trace_start"() <{level = 10 : i32, message = "bqk,bkd->bqd"}> : () -> ()
    %cst_118 = arith.constant dense<0.000000e+00> : vector<2x8x8xf32>
    %274 = tpu.matmul %272, %273, %cst_118 {dimension_numbers = #tpu.dot_dimension_numbers<[2], [1], [1], [2], [0, 0, 0, 1, 1, 2], [0], [0]>} : vector<2x8x8xbf16>, vector<2x8x8xbf16>, vector<2x8x8xf32> -> vector<2x8x8xf32>
    "tpu.trace_stop"() : () -> ()
    %275 = arith.truncf %274 : vector<2x8x8xf32> to vector<2x8x8xbf16>
    %c0_119 = arith.constant 0 : index
    %c0_120 = arith.constant 0 : index
    %c24_121 = arith.constant 24 : index
    %276 = vector.load %arg19[%c0_119, %c0_120, %c24_121] : memref<2x8x32xbf16, #tpu.memory_space<vmem>>, vector<2x8x8xbf16>
    tpu.vector_store %arg19[%c0_119, %c0_120, %c24_121], %275 {strides = array<i32>} : memref<2x8x32xbf16, #tpu.memory_space<vmem>>, vector<2x8x8xbf16>,
    %c0_122 = arith.constant 0 : index
    %c0_123 = arith.constant 0 : index
    %c0_124 = arith.constant 0 : index
    %277 = vector.load %arg19[%c0_122, %c0_123, %c0_124] : memref<2x8x32xbf16, #tpu.memory_space<vmem>>, vector<2x8x32xbf16>
    %278 = vector.shape_cast %277 : vector<2x8x32xbf16> to vector<16x32xbf16>
    %c1_125 = arith.constant 1 : index
    %c0_126 = arith.constant 0 : index
    %c0_127 = arith.constant 0 : index
    %279 = vector.load %arg4[%c1_125, %c0_126, %c0_127] : memref<2x32x32xbf16, #tpu.memory_space<vmem>>, vector<1x32x32xbf16>
    %280 = vector.shape_cast %279 : vector<1x32x32xbf16> to vector<32x32xbf16>
    %cst_128 = arith.constant dense<0.000000e+00> : vector<16x32xf32>
    %281 = tpu.matmul %278, %280, %cst_128 {dimension_numbers = #tpu.dot_dimension_numbers<[1], [0], [0], [1], [0, 0, 1, 1], [], []>} : vector<16x32xbf16>, vector<32x32xbf16>, vector<16x32xf32> -> vector<16x32xf32>
    %c1_129 = arith.constant 1 : index
    %c0_130 = arith.constant 0 : index
    %c0_131 = arith.constant 0 : index
    %282 = vector.load %arg5[%c1_129, %c0_130, %c0_131] : memref<2x1x32xf32, #tpu.memory_space<vmem>>, vector<1x1x32xf32>
    %283 = vector.shape_cast %282 : vector<1x1x32xf32> to vector<1x32xf32>
    %284 = vector.broadcast %283 : vector<1x32xf32> to vector<16x32xf32>
    %285 = arith.addf %281, %284 : vector<16x32xf32>
    %286 = arith.addf %179, %285 : vector<16x32xf32>
    %c1_132 = arith.constant 1 : index
    %c0_133 = arith.constant 0 : index
    %c0_134 = arith.constant 0 : index
    %287 = vector.load %arg10[%c1_132, %c0_133, %c0_134] : memref<2x1x32xf32, #tpu.memory_space<vmem>>, vector<1x1x32xf32>
    %288 = vector.shape_cast %287 : vector<1x1x32xf32> to vector<1x32xf32>
    %c1_135 = arith.constant 1 : index
    %c0_136 = arith.constant 0 : index
    %c0_137 = arith.constant 0 : index
    %289 = vector.load %arg11[%c1_135, %c0_136, %c0_137] : memref<2x1x32xf32, #tpu.memory_space<vmem>>, vector<1x1x32xf32>
    %290 = vector.shape_cast %289 : vector<1x1x32xf32> to vector<1x32xf32>
    %cst_138 = arith.constant dense<0.000000e+00> : vector<16xf32>
    %291 = vector.multi_reduction <add>, %286, %cst_138 [1] : vector<16x32xf32> to vector<16xf32>
    %292 = vector.shape_cast %291 : vector<16xf32> to vector<16x1xf32>
    %cst_139 = arith.constant 3.200000e+01 : f32
    %293 = vector.broadcast %cst_139 : f32 to vector<16x1xf32>
    %294 = arith.divf %292, %293 : vector<16x1xf32>
    %295 = vector.broadcast %294 : vector<16x1xf32> to vector<16x32xf32>
    %296 = arith.subf %286, %295 : vector<16x32xf32>
    %297 = arith.mulf %296, %296 : vector<16x32xf32>
    %cst_140 = arith.constant dense<0.000000e+00> : vector<16xf32>
    %298 = vector.multi_reduction <add>, %297, %cst_140 [1] : vector<16x32xf32> to vector<16xf32>
    %299 = vector.shape_cast %298 : vector<16xf32> to vector<16x1xf32>
    %cst_141 = arith.constant 3.200000e+01 : f32
    %300 = vector.broadcast %cst_141 : f32 to vector<16x1xf32>
    %301 = arith.divf %299, %300 : vector<16x1xf32>
    %302 = vector.broadcast %294 : vector<16x1xf32> to vector<16x32xf32>
    %303 = arith.subf %286, %302 : vector<16x32xf32>
    %cst_142 = arith.constant 9.99999974E-6 : f32
    %304 = vector.broadcast %cst_142 : f32 to vector<16x1xf32>
    %305 = arith.addf %301, %304 : vector<16x1xf32>
    %306 = math.rsqrt %305 : vector<16x1xf32>
    %307 = vector.broadcast %306 : vector<16x1xf32> to vector<16x32xf32>
    %308 = arith.mulf %303, %307 : vector<16x32xf32>
    %309 = vector.broadcast %288 : vector<1x32xf32> to vector<16x32xf32>
    %310 = arith.mulf %308, %309 : vector<16x32xf32>
    %311 = vector.broadcast %290 : vector<1x32xf32> to vector<16x32xf32>
    %312 = arith.addf %310, %311 : vector<16x32xf32>
    %313 = arith.truncf %312 : vector<16x32xf32> to vector<16x32xbf16>
    %c1_143 = arith.constant 1 : index
    %c0_144 = arith.constant 0 : index
    %c0_145 = arith.constant 0 : index
    %314 = vector.load %arg6[%c1_143, %c0_144, %c0_145] : memref<2x32x128xbf16, #tpu.memory_space<vmem>>, vector<1x32x128xbf16>
    %315 = vector.shape_cast %314 : vector<1x32x128xbf16> to vector<32x128xbf16>
    %cst_146 = arith.constant dense<0.000000e+00> : vector<16x128xf32>
    %316 = tpu.matmul %313, %315, %cst_146 {dimension_numbers = #tpu.dot_dimension_numbers<[1], [0], [0], [1], [0, 0, 1, 1], [], []>} : vector<16x32xbf16>, vector<32x128xbf16>, vector<16x128xf32> -> vector<16x128xf32>
    %c1_147 = arith.constant 1 : index
    %c0_148 = arith.constant 0 : index
    %c0_149 = arith.constant 0 : index
    %317 = vector.load %arg7[%c1_147, %c0_148, %c0_149] : memref<2x1x128xf32, #tpu.memory_space<vmem>>, vector<1x1x128xf32>
    %318 = vector.shape_cast %317 : vector<1x1x128xf32> to vector<1x128xf32>
    %319 = vector.broadcast %318 : vector<1x128xf32> to vector<16x128xf32>
    %320 = arith.addf %316, %319 : vector<16x128xf32>
    %cst_150 = arith.constant 0.000000e+00 : f32
    %321 = vector.broadcast %cst_150 : f32 to vector<16x128xf32>
    %322 = arith.maximumf %320, %321 : vector<16x128xf32>
    %323 = arith.truncf %322 : vector<16x128xf32> to vector<16x128xbf16>
    %c1_151 = arith.constant 1 : index
    %c0_152 = arith.constant 0 : index
    %c0_153 = arith.constant 0 : index
    %324 = vector.load %arg8[%c1_151, %c0_152, %c0_153] : memref<2x128x32xbf16, #tpu.memory_space<vmem>>, vector<1x128x32xbf16>
    %325 = vector.shape_cast %324 : vector<1x128x32xbf16> to vector<128x32xbf16>
    %cst_154 = arith.constant dense<0.000000e+00> : vector<16x32xf32>
    %326 = tpu.matmul %323, %325, %cst_154 {dimension_numbers = #tpu.dot_dimension_numbers<[1], [0], [0], [1], [0, 0, 1, 1], [], []>} : vector<16x128xbf16>, vector<128x32xbf16>, vector<16x32xf32> -> vector<16x32xf32>
    %c1_155 = arith.constant 1 : index
    %c0_156 = arith.constant 0 : index
    %c0_157 = arith.constant 0 : index
    %327 = vector.load %arg9[%c1_155, %c0_156, %c0_157] : memref<2x1x32xf32, #tpu.memory_space<vmem>>, vector<1x1x32xf32>
    %328 = vector.shape_cast %327 : vector<1x1x32xf32> to vector<1x32xf32>
    %329 = vector.broadcast %328 : vector<1x32xf32> to vector<16x32xf32>
    %330 = arith.addf %326, %329 : vector<16x32xf32>
    %331 = arith.addf %312, %330 : vector<16x32xf32>
    %c1_158 = arith.constant 1 : index
    %c0_159 = arith.constant 0 : index
    %c0_160 = arith.constant 0 : index
    %332 = vector.load %arg12[%c1_158, %c0_159, %c0_160] : memref<2x1x32xf32, #tpu.memory_space<vmem>>, vector<1x1x32xf32>
    %333 = vector.shape_cast %332 : vector<1x1x32xf32> to vector<1x32xf32>
    %c1_161 = arith.constant 1 : index
    %c0_162 = arith.constant 0 : index
    %c0_163 = arith.constant 0 : index
    %334 = vector.load %arg13[%c1_161, %c0_162, %c0_163] : memref<2x1x32xf32, #tpu.memory_space<vmem>>, vector<1x1x32xf32>
    %335 = vector.shape_cast %334 : vector<1x1x32xf32> to vector<1x32xf32>
    %cst_164 = arith.constant dense<0.000000e+00> : vector<16xf32>
    %336 = vector.multi_reduction <add>, %331, %cst_164 [1] : vector<16x32xf32> to vector<16xf32>
    %337 = vector.shape_cast %336 : vector<16xf32> to vector<16x1xf32>
    %cst_165 = arith.constant 3.200000e+01 : f32
    %338 = vector.broadcast %cst_165 : f32 to vector<16x1xf32>
    %339 = arith.divf %337, %338 : vector<16x1xf32>
    %340 = vector.broadcast %339 : vector<16x1xf32> to vector<16x32xf32>
    %341 = arith.subf %331, %340 : vector<16x32xf32>
    %342 = arith.mulf %341, %341 : vector<16x32xf32>
    %cst_166 = arith.constant dense<0.000000e+00> : vector<16xf32>
    %343 = vector.multi_reduction <add>, %342, %cst_166 [1] : vector<16x32xf32> to vector<16xf32>
    %344 = vector.shape_cast %343 : vector<16xf32> to vector<16x1xf32>
    %cst_167 = arith.constant 3.200000e+01 : f32
    %345 = vector.broadcast %cst_167 : f32 to vector<16x1xf32>
    %346 = arith.divf %344, %345 : vector<16x1xf32>
    %347 = vector.broadcast %339 : vector<16x1xf32> to vector<16x32xf32>
    %348 = arith.subf %331, %347 : vector<16x32xf32>
    %cst_168 = arith.constant 9.99999974E-6 : f32
    %349 = vector.broadcast %cst_168 : f32 to vector<16x1xf32>
    %350 = arith.addf %346, %349 : vector<16x1xf32>
    %351 = math.rsqrt %350 : vector<16x1xf32>
    %352 = vector.broadcast %351 : vector<16x1xf32> to vector<16x32xf32>
    %353 = arith.mulf %348, %352 : vector<16x32xf32>
    %354 = vector.broadcast %333 : vector<1x32xf32> to vector<16x32xf32>
    %355 = arith.mulf %353, %354 : vector<16x32xf32>
    %356 = vector.broadcast %335 : vector<1x32xf32> to vector<16x32xf32>
    %357 = arith.addf %355, %356 : vector<16x32xf32>
    %c0_169 = arith.constant 0 : index
    %c0_170 = arith.constant 0 : index
    %358 = vector.load %arg14[%c0_169, %c0_170] : memref<1x32xf32, #tpu.memory_space<vmem>>, vector<1x32xf32>
    %c0_171 = arith.constant 0 : index
    %c0_172 = arith.constant 0 : index
    %359 = vector.load %arg15[%c0_171, %c0_172] : memref<1x32xf32, #tpu.memory_space<vmem>>, vector<1x32xf32>
    %cst_173 = arith.constant dense<0.000000e+00> : vector<16xf32>
    %360 = vector.multi_reduction <add>, %357, %cst_173 [1] : vector<16x32xf32> to vector<16xf32>
    %361 = vector.shape_cast %360 : vector<16xf32> to vector<16x1xf32>
    %cst_174 = arith.constant 3.200000e+01 : f32
    %362 = vector.broadcast %cst_174 : f32 to vector<16x1xf32>
    %363 = arith.divf %361, %362 : vector<16x1xf32>
    %364 = vector.broadcast %363 : vector<16x1xf32> to vector<16x32xf32>
    %365 = arith.subf %357, %364 : vector<16x32xf32>
    %366 = arith.mulf %365, %365 : vector<16x32xf32>
    %cst_175 = arith.constant dense<0.000000e+00> : vector<16xf32>
    %367 = vector.multi_reduction <add>, %366, %cst_175 [1] : vector<16x32xf32> to vector<16xf32>
    %368 = vector.shape_cast %367 : vector<16xf32> to vector<16x1xf32>
    %cst_176 = arith.constant 3.200000e+01 : f32
    %369 = vector.broadcast %cst_176 : f32 to vector<16x1xf32>
    %370 = arith.divf %368, %369 : vector<16x1xf32>
    %371 = vector.broadcast %363 : vector<16x1xf32> to vector<16x32xf32>
    %372 = arith.subf %357, %371 : vector<16x32xf32>
    %cst_177 = arith.constant 9.99999974E-6 : f32
    %373 = vector.broadcast %cst_177 : f32 to vector<16x1xf32>
    %374 = arith.addf %370, %373 : vector<16x1xf32>
    %375 = math.rsqrt %374 : vector<16x1xf32>
    %376 = vector.broadcast %375 : vector<16x1xf32> to vector<16x32xf32>
    %377 = arith.mulf %372, %376 : vector<16x32xf32>
    %378 = vector.broadcast %358 : vector<1x32xf32> to vector<16x32xf32>
    %379 = arith.mulf %377, %378 : vector<16x32xf32>
    %380 = vector.broadcast %359 : vector<1x32xf32> to vector<16x32xf32>
    %381 = arith.addf %379, %380 : vector<16x32xf32>
    %382 = vector.shape_cast %381 : vector<16x32xf32> to vector<2x8x32xf32>
    %cst_178 = arith.constant dense<0xFF800000> : vector<2x32xf32>
    %383 = vector.multi_reduction <maximumf>, %382, %cst_178 [1] : vector<2x8x32xf32> to vector<2x32xf32>
    %c0_179 = arith.constant 0 : index
    %c0_180 = arith.constant 0 : index
    %384 = vector.load %arg16[%c0_179, %c0_180] : memref<1x32xf32, #tpu.memory_space<vmem>>, vector<1x32xf32>
    %385 = vector.broadcast %384 : vector<1x32xf32> to vector<2x32xf32>
    %386 = arith.mulf %383, %385 : vector<2x32xf32>
    %cst_181 = arith.constant dense<0.000000e+00> : vector<2xf32>
    %387 = vector.multi_reduction <add>, %386, %cst_181 [1] : vector<2x32xf32> to vector<2xf32>
    %388 = vector.shape_cast %387 : vector<2xf32> to vector<2x1xf32>
    %c0_182 = arith.constant 0 : index
    %c0_183 = arith.constant 0 : index
    %389 = vector.load %arg17[%c0_182, %c0_183] : memref<1x1xf32, #tpu.memory_space<vmem>>, vector<1x1xf32>
    %390 = vector.broadcast %389 : vector<1x1xf32> to vector<2x1xf32>
    %391 = arith.addf %388, %390 : vector<2x1xf32>
    %392 = vector.shape_cast %391 : vector<2x1xf32> to vector<2x1xf32>
    %393 = vector.broadcast %392 : vector<2x1xf32> to vector<2x128xf32>
    %c0_184 = arith.constant 0 : index
    %c0_185 = arith.constant 0 : index
    %394 = vector.load %arg18[%c0_184, %c0_185] : memref<2x128xf32, #tpu.memory_space<vmem>>, vector<2x128xf32>
    tpu.vector_store %arg18[%c0_184, %c0_185], %393 {strides = array<i32>} : memref<2x128xf32, #tpu.memory_space<vmem>>, vector<2x128xf32>,
    return
  }
  func.func @transform_0(%arg0: i32) -> (i32, i32, i32) {
    %c0_i32 = arith.constant 0 : i32
    %c0_i32_0 = arith.constant 0 : i32
    %c0_i32_1 = arith.constant 0 : i32
    %c0_i32_2 = arith.constant 0 : i32
    return %c0_i32, %c0_i32_0, %c0_i32_1 : i32, i32, i32
  }
  func.func @transform_1(%arg0: i32) -> (i32, i32, i32) {
    %c0_i32 = arith.constant 0 : i32
    %c0_i32_0 = arith.constant 0 : i32
    %c0_i32_1 = arith.constant 0 : i32
    %c0_i32_2 = arith.constant 0 : i32
    return %c0_i32, %c0_i32_0, %c0_i32_1 : i32, i32, i32
  }
  func.func @transform_2(%arg0: i32) -> (i32, i32, i32) {
    %c0_i32 = arith.constant 0 : i32
    %c0_i32_0 = arith.constant 0 : i32
    %c0_i32_1 = arith.constant 0 : i32
    %c0_i32_2 = arith.constant 0 : i32
    return %c0_i32, %c0_i32_0, %c0_i32_1 : i32, i32, i32
  }
  func.func @transform_3(%arg0: i32) -> (i32, i32, i32) {
    %c0_i32 = arith.constant 0 : i32
    %c0_i32_0 = arith.constant 0 : i32
    %c0_i32_1 = arith.constant 0 : i32
    %c0_i32_2 = arith.constant 0 : i32
    return %c0_i32, %c0_i32_0, %c0_i32_1 : i32, i32, i32
  }
  func.func @transform_4(%arg0: i32) -> (i32, i32, i32) {
    %c0_i32 = arith.constant 0 : i32
    %c0_i32_0 = arith.constant 0 : i32
    %c0_i32_1 = arith.constant 0 : i32
    %c0_i32_2 = arith.constant 0 : i32
    return %c0_i32, %c0_i32_0, %c0_i32_1 : i32, i32, i32
  }
  func.func @transform_5(%arg0: i32) -> (i32, i32, i32) {
    %c0_i32 = arith.constant 0 : i32
    %c0_i32_0 = arith.constant 0 : i32
    %c0_i32_1 = arith.constant 0 : i32
    %c0_i32_2 = arith.constant 0 : i32
    return %c0_i32, %c0_i32_0, %c0_i32_1 : i32, i32, i32
  }
  func.func @transform_6(%arg0: i32) -> (i32, i32, i32) {
    %c0_i32 = arith.constant 0 : i32
    %c0_i32_0 = arith.constant 0 : i32
    %c0_i32_1 = arith.constant 0 : i32
    %c0_i32_2 = arith.constant 0 : i32
    return %c0_i32, %c0_i32_0, %c0_i32_1 : i32, i32, i32
  }
  func.func @transform_7(%arg0: i32) -> (i32, i32, i32) {
    %c0_i32 = arith.constant 0 : i32
    %c0_i32_0 = arith.constant 0 : i32
    %c0_i32_1 = arith.constant 0 : i32
    %c0_i32_2 = arith.constant 0 : i32
    return %c0_i32, %c0_i32_0, %c0_i32_1 : i32, i32, i32
  }
  func.func @transform_8(%arg0: i32) -> (i32, i32, i32) {
    %c0_i32 = arith.constant 0 : i32
    %c0_i32_0 = arith.constant 0 : i32
    %c0_i32_1 = arith.constant 0 : i32
    %c0_i32_2 = arith.constant 0 : i32
    return %c0_i32, %c0_i32_0, %c0_i32_1 : i32, i32, i32
  }
  func.func @transform_9(%arg0: i32) -> (i32, i32, i32) {
    %c0_i32 = arith.constant 0 : i32
    %c0_i32_0 = arith.constant 0 : i32
    %c0_i32_1 = arith.constant 0 : i32
    %c0_i32_2 = arith.constant 0 : i32
    return %c0_i32, %c0_i32_0, %c0_i32_1 : i32, i32, i32
  }
  func.func @transform_10(%arg0: i32) -> (i32, i32, i32) {
    %c0_i32 = arith.constant 0 : i32
    %c0_i32_0 = arith.constant 0 : i32
    %c0_i32_1 = arith.constant 0 : i32
    %c0_i32_2 = arith.constant 0 : i32
    return %c0_i32, %c0_i32_0, %c0_i32_1 : i32, i32, i32
  }
  func.func @transform_11(%arg0: i32) -> (i32, i32, i32) {
    %c0_i32 = arith.constant 0 : i32
    %c0_i32_0 = arith.constant 0 : i32
    %c0_i32_1 = arith.constant 0 : i32
    %c0_i32_2 = arith.constant 0 : i32
    return %c0_i32, %c0_i32_0, %c0_i32_1 : i32, i32, i32
  }
  func.func @transform_12(%arg0: i32) -> (i32, i32, i32) {
    %c0_i32 = arith.constant 0 : i32
    %c0_i32_0 = arith.constant 0 : i32
    %c0_i32_1 = arith.constant 0 : i32
    %c0_i32_2 = arith.constant 0 : i32
    return %c0_i32, %c0_i32_0, %c0_i32_1 : i32, i32, i32
  }
  func.func @transform_13(%arg0: i32) -> (i32, i32) {
    %c0_i32 = arith.constant 0 : i32
    %c0_i32_0 = arith.constant 0 : i32
    %c0_i32_1 = arith.constant 0 : i32
    return %c0_i32, %c0_i32_0 : i32, i32
  }
  func.func @transform_14(%arg0: i32) -> (i32, i32) {
    %c0_i32 = arith.constant 0 : i32
    %c0_i32_0 = arith.constant 0 : i32
    %c0_i32_1 = arith.constant 0 : i32
    return %c0_i32, %c0_i32_0 : i32, i32
  }
  func.func @transform_15(%arg0: i32) -> (i32, i32) {
    %c0_i32 = arith.constant 0 : i32
    %c0_i32_0 = arith.constant 0 : i32
    %c0_i32_1 = arith.constant 0 : i32
    return %c0_i32, %c0_i32_0 : i32, i32
  }
  func.func @transform_16(%arg0: i32) -> (i32, i32) {
    %c0_i32 = arith.constant 0 : i32
    %c0_i32_0 = arith.constant 0 : i32
    %c0_i32_1 = arith.constant 0 : i32
    return %c0_i32, %c0_i32_0 : i32, i32
  }
  func.func @transform_17(%arg0: i32) -> (i32, i32) {
    %c0_i32 = arith.constant 0 : i32
    %c0_i32_0 = arith.constant 0 : i32
    %c0_i32_1 = arith.constant 0 : i32
    return %c0_i32, %c0_i32_0 : i32, i32
  }
}

</mosaic_0001>

<llo_original>
// kernel: ndvi_transformer_forward.1
$region0: #{ndvi_transformer_forward.1}
  #allocation0 [shape = 'u32[]', space=smem, size = 0x4, offset = 0x4, fixed_abs, tag = 'smem constant byte address 0x4 - core index']
  #allocation1 [shape = 'u32[144,128]{1,0:T(1,128)}', space=vmem, size = 0x12000, scoped, tag = 'internal scratch']
  #allocation2 [shape = 'bf16[2,8,32]{2,1,0:T(8,128)(2,1)}', space=vmem, size = 0x1000, scoped, tag = 'scratch operand']
  #allocation3 [shape = 'f32[1,1]{1,0:T(1,128)S(1)}', space=vmem, size = 0x200, scoped, tag = 'scoped memory for ndvi_transformer_forward.1']
  %s0 = inlined_call_operand.vmem [shape: f32[2,8,32], index: 0, kind: input, shape index: {}]
  %s1 = inlined_call_operand.vmem [shape: bf16[2,32,96], index: 1, kind: input, shape index: {}]
  %s2 = inlined_call_operand.vmem [shape: f32[2,1,96], index: 2, kind: input, shape index: {}]
  %s3 = inlined_call_operand.vmem [shape: bf16[2,32,32], index: 3, kind: input, shape index: {}]
  %s4 = inlined_call_operand.vmem [shape: f32[2,1,32], index: 4, kind: input, shape index: {}]
  %s5 = inlined_call_operand.vmem [shape: bf16[2,32,128], index: 5, kind: input, shape index: {}]
  %s6 = inlined_call_operand.vmem [shape: f32[2,1,128], index: 6, kind: input, shape index: {}]
  %s7 = inlined_call_operand.vmem [shape: bf16[2,128,32], index: 7, kind: input, shape index: {}]
  %s8 = inlined_call_operand.vmem [shape: f32[2,1,32], index: 8, kind: input, shape index: {}]
  %s9 = inlined_call_operand.vmem [shape: f32[2,1,32], index: 9, kind: input, shape index: {}]
  %s10 = inlined_call_operand.vmem [shape: f32[2,1,32], index: 10, kind: input, shape index: {}]
  %s11 = inlined_call_operand.vmem [shape: f32[2,1,32], index: 11, kind: input, shape index: {}]
  %s12 = inlined_call_operand.vmem [shape: f32[2,1,32], index: 12, kind: input, shape index: {}]
  %s13 = inlined_call_operand.vmem [shape: f32[1,32], index: 13, kind: input, shape index: {}]
  %s14 = inlined_call_operand.vmem [shape: f32[1,32], index: 14, kind: input, shape index: {}]
  %s15 = inlined_call_operand.vmem [shape: f32[1,32], index: 15, kind: input, shape index: {}]
  %s16 = inlined_call_operand.<no memory space> [shape: f32[1,1], index: 16, kind: input, shape index: {}]
  %s17 = inlined_call_operand.vmem [shape: f32[2,128], index: 17, kind: output, shape index: {}]
  %s18 = sld [smem:[#allocation0]]
  $region78: #{ndvi_transformer_forward.1} parent=0
    _
  %s20 = ssub.s32 1, %s18
  %s21 = scalar_select 0, %s20, %s18
  %v22 = vstv %s16
  %23 = vst [vmem:[#allocation3] sm:$0x1] %v22
  // Predicated region
  $region2: #{ndvi_transformer_forward.1} parent=0 // pred_check
    _
  $region3: #{ndvi_transformer_forward.1} parent=0 // pred_check_branch
    %25 = sbr.rel (0) target = $region5
  $region4: #{ndvi_transformer_forward.1} parent=0 // pred_region
    _
  $region5: #{ndvi_transformer_forward.1} parent=0 // pred_fallthru
    _
  // Predicated region
  $region6: #{ndvi_transformer_forward.1} parent=0 // pred_check
    _
  $region7: #{ndvi_transformer_forward.1} parent=0 // pred_check_branch
    %27 = sbr.rel (0) target = $region9
  $region8: #{ndvi_transformer_forward.1} parent=0 // pred_region
    _
  $region9: #{ndvi_transformer_forward.1} parent=0 // pred_fallthru
    _
  // Predicated region
  $region10: #{ndvi_transformer_forward.1} parent=0 // pred_check
    _
  $region11: #{ndvi_transformer_forward.1} parent=0 // pred_check_branch
    %29 = sbr.rel (0) target = $region13
  $region12: #{ndvi_transformer_forward.1} parent=0 // pred_region
    _
  $region13: #{ndvi_transformer_forward.1} parent=0 // pred_fallthru
    _
  // Predicated region
  $region14: #{ndvi_transformer_forward.1} parent=0 // pred_check
    _
  $region15: #{ndvi_transformer_forward.1} parent=0 // pred_check_branch
    %31 = sbr.rel (0) target = $region17
  $region16: #{ndvi_transformer_forward.1} parent=0 // pred_region
    _
  $region17: #{ndvi_transformer_forward.1} parent=0 // pred_fallthru
    _
  // Predicated region
  $region18: #{ndvi_transformer_forward.1} parent=0 // pred_check
    _
  $region19: #{ndvi_transformer_forward.1} parent=0 // pred_check_branch
    %33 = sbr.rel (0) target = $region21
  $region20: #{ndvi_transformer_forward.1} parent=0 // pred_region
    _
  $region21: #{ndvi_transformer_forward.1} parent=0 // pred_fallthru
    _
  // Predicated region
  $region22: #{ndvi_transformer_forward.1} parent=0 // pred_check
    _
  $region23: #{ndvi_transformer_forward.1} parent=0 // pred_check_branch
    %35 = sbr.rel (0) target = $region25
  $region24: #{ndvi_transformer_forward.1} parent=0 // pred_region
    _
  $region25: #{ndvi_transformer_forward.1} parent=0 // pred_fallthru
    _
  // Predicated region
  $region26: #{ndvi_transformer_forward.1} parent=0 // pred_check
    _
  $region27: #{ndvi_transformer_forward.1} parent=0 // pred_check_branch
    %37 = sbr.rel (0) target = $region29
  $region28: #{ndvi_transformer_forward.1} parent=0 // pred_region
    _
  $region29: #{ndvi_transformer_forward.1} parent=0 // pred_fallthru
    _
  // Predicated region
  $region30: #{ndvi_transformer_forward.1} parent=0 // pred_check
    _
  $region31: #{ndvi_transformer_forward.1} parent=0 // pred_check_branch
    %39 = sbr.rel (0) target = $region33
  $region32: #{ndvi_transformer_forward.1} parent=0 // pred_region
    _
  $region33: #{ndvi_transformer_forward.1} parent=0 // pred_fallthru
    _
  // Predicated region
  $region34: #{ndvi_transformer_forward.1} parent=0 // pred_check
    _
  $region35: #{ndvi_transformer_forward.1} parent=0 // pred_check_branch
    %41 = sbr.rel (0) target = $region37
  $region36: #{ndvi_transformer_forward.1} parent=0 // pred_region
    _
  $region37: #{ndvi_transformer_forward.1} parent=0 // pred_fallthru
    _
  // Predicated region
  $region38: #{ndvi_transformer_forward.1} parent=0 // pred_check
    _
  $region39: #{ndvi_transformer_forward.1} parent=0 // pred_check_branch
    %43 = sbr.rel (0) target = $region41
  $region40: #{ndvi_transformer_forward.1} parent=0 // pred_region
    _
  $region41: #{ndvi_transformer_forward.1} parent=0 // pred_fallthru
    _
  // Predicated region
  $region42: #{ndvi_transformer_forward.1} parent=0 // pred_check
    _
  $region43: #{ndvi_transformer_forward.1} parent=0 // pred_check_branch
    %45 = sbr.rel (0) target = $region45
  $region44: #{ndvi_transformer_forward.1} parent=0 // pred_region
    _
  $region45: #{ndvi_transformer_forward.1} parent=0 // pred_fallthru
    _
  // Predicated region
  $region46: #{ndvi_transformer_forward.1} parent=0 // pred_check
    _
  $region47: #{ndvi_transformer_forward.1} parent=0 // pred_check_branch
    %47 = sbr.rel (0) target = $region49
  $region48: #{ndvi_transformer_forward.1} parent=0 // pred_region
    _
  $region49: #{ndvi_transformer_forward.1} parent=0 // pred_fallthru
    _
  // Predicated region
  $region50: #{ndvi_transformer_forward.1} parent=0 // pred_check
    _
  $region51: #{ndvi_transformer_forward.1} parent=0 // pred_check_branch
    %49 = sbr.rel (0) target = $region53
  $region52: #{ndvi_transformer_forward.1} parent=0 // pred_region
    _
  $region53: #{ndvi_transformer_forward.1} parent=0 // pred_fallthru
    _
  // Predicated region
  $region54: #{ndvi_transformer_forward.1} parent=0 // pred_check
    _
  $region55: #{ndvi_transformer_forward.1} parent=0 // pred_check_branch
    %51 = sbr.rel (0) target = $region57
  $region56: #{ndvi_transformer_forward.1} parent=0 // pred_region
    _
  $region57: #{ndvi_transformer_forward.1} parent=0 // pred_fallthru
    _
  // Predicated region
  $region58: #{ndvi_transformer_forward.1} parent=0 // pred_check
    _
  $region59: #{ndvi_transformer_forward.1} parent=0 // pred_check_branch
    %53 = sbr.rel (0) target = $region61
  $region60: #{ndvi_transformer_forward.1} parent=0 // pred_region
    _
  $region61: #{ndvi_transformer_forward.1} parent=0 // pred_fallthru
    _
  // Predicated region
  $region62: #{ndvi_transformer_forward.1} parent=0 // pred_check
    _
  $region63: #{ndvi_transformer_forward.1} parent=0 // pred_check_branch
    %55 = sbr.rel (0) target = $region65
  $region64: #{ndvi_transformer_forward.1} parent=0 // pred_region
    _
  $region65: #{ndvi_transformer_forward.1} parent=0 // pred_fallthru
    _
  // Predicated region
  $region66: #{ndvi_transformer_forward.1} parent=0 // pred_check
    _
  $region67: #{ndvi_transformer_forward.1} parent=0 // pred_check_branch
    %57 = sbr.rel (0) target = $region69
  $region68: #{ndvi_transformer_forward.1} parent=0 // pred_region
    _
  $region69: #{ndvi_transformer_forward.1} parent=0 // pred_fallthru
    _
  %v59 = vld [vmem:[%s0] sm:$0xff]
  %v60 = vld [vmem:[%s0 + $0x8] sm:$0xff]
  %v61 = vpack.c.bf16 %v60, %v59
  %v62 = vld [vmem:[%s1] sm:$0xf]
  %v63 = vld [vmem:[%s1 + $0x4] sm:$0xf]
  %v64 = vld [vmem:[%s1 + $0x8] sm:$0xf]
  %v65 = vld [vmem:[%s1 + $0xc] sm:$0xf]
  %v66 = vld [vmem:[%s2] sm:$0x1]
  %v68 = vlaneseq
  %v69 = vshrl.u32 %v68, 7
  %v70 = vsub.s32 0, %v69
  %v71 = vrot.slane %v66, %v70
  %v77 = vunpack.c.l.b16 %v62
  %v78 = vunpack.c.l.b16 %v63
  %v79 = vunpack.c.l.b16 %v64
  %v80 = vunpack.c.l.b16 %v65
  %v81 = vpack.c.b16 %v78, %v77
  %v82 = vpack.c.b16 %v80, %v79
  %vm85 = vcmask 261120
  %v87 = vsel %vm85, %v61, 0
  %89 = vmatprep.subr.bf16.mxu0 0
  %90 = vmatpush1.bf16.msra.mxu0 0
  %91 = vmatprep.subr.bf16.mxu0 0
  %92 = vmatpush1.bf16.msra.mxu0 0
  %93 = vmatprep.subr.bf16.mxu0 0
  %94 = vmatpush1.bf16.msra.mxu0 0
  %95 = vmatprep.subr.bf16.mxu0 0
  %96 = vmatpush1.bf16.msra.mxu0 0
  %97 = vmatprep.subr.bf16.mxu0 0
  %98 = vmatpush1.bf16.msra.mxu0 0
  %99 = vmatprep.subr.bf16.mxu0 0
  %100 = vmatpush1.bf16.msra.mxu0 0
  %101 = vmatprep.subr.bf16.mxu0 0
  %102 = vmatpush1.bf16.msra.mxu0 %v82
  %103 = vmatprep.subr.bf16.mxu0 0
  %104 = vmatpush1.bf16.msra.mxu0 %v81
  %105 = vmatprep.subr.bf16.mxu0 0
  %106 = vmatpush2.bf16.msra.mxu0 0
  %107 = vmatprep.subr.bf16.mxu0 0
  %108 = vmatpush2.bf16.msra.mxu0 0
  %109 = vmatprep.subr.bf16.mxu0 0
  %110 = vmatpush2.bf16.msra.mxu0 0
  %111 = vmatprep.subr.bf16.mxu0 0
  %112 = vmatpush2.bf16.msra.mxu0 0
  %113 = vmatprep.subr.bf16.mxu0 0
  %114 = vmatpush2.bf16.msra.mxu0 0
  %115 = vmatprep.subr.bf16.mxu0 0
  %116 = vmatpush2.bf16.msra.mxu0 0
  %117 = vmatprep.subr.bf16.mxu0 0
  %118 = vmatpush2.bf16.msra.mxu0 0
  %119 = vmatprep.subr.bf16.mxu0 0
  %120 = vmatpush2.bf16.msra.mxu0 0
  %121 = vmatprep.mubr.bf16.mxu0 0
  %122 = vmatmul.mubr.bf16.gmra.mxu0 %v87
  %v123 = vpop.f32.mrf.mxu0
  %v124 = vadd.f32 %v71, %v123
  %v125 = vpop.f32.mrf.mxu0
  %v126 = vpop.f32.mrf.mxu0
  %v127 = vadd.f32 %v71, %v126
  %v128 = vpop.f32.mrf.mxu0
  %129 = vdwg.mxu0
  %v130 = vpack.c.bf16 %v124, %v124
  %v131 = vpack.c.bf16 %v127, %v127
  %133 = vrot.lane.b32.xlu0 %v130, 96
  %v134 = vpop.permute.xlu0 %133
  %vm135 = vcmask 64512
  %v137 = vsel %vm135, %v130, 0
  %v140 = vsel %vm135, %v134, 0
  %142 = vmatprep.subr.bf16.mxu0 0
  %143 = vmatpush1.bf16.xpose.msra.mxu0 0
  %144 = vmatprep.subr.bf16.mxu0 0
  %145 = vmatpush1.bf16.xpose.msra.mxu0 0
  %146 = vmatprep.subr.bf16.mxu0 0
  %147 = vmatpush1.bf16.xpose.msra.mxu0 0
  %148 = vmatprep.subr.bf16.mxu0 0
  %149 = vmatpush1.bf16.xpose.msra.mxu0 0
  %150 = vmatprep.subr.bf16.mxu0 0
  %151 = vmatpush1.bf16.xpose.msra.mxu0 0
  %152 = vmatprep.subr.bf16.mxu0 0
  %153 = vmatpush1.bf16.xpose.msra.mxu0 0
  %154 = vmatprep.subr.bf16.mxu0 0
  %155 = vmatpush1.bf16.xpose.msra.mxu0 0
  %156 = vmatprep.subr.bf16.mxu0 0
  %157 = vmatpush1.bf16.xpose.msra.mxu0 %v140
  %158 = vmatprep.subr.bf16.mxu0 0
  %159 = vmatpush2.bf16.xpose.msra.mxu0 0
  %160 = vmatprep.subr.bf16.mxu0 0
  %161 = vmatpush2.bf16.xpose.msra.mxu0 0
  %162 = vmatprep.subr.bf16.mxu0 0
  %163 = vmatpush2.bf16.xpose.msra.mxu0 0
  %164 = vmatprep.subr.bf16.mxu0 0
  %165 = vmatpush2.bf16.xpose.msra.mxu0 0
  %166 = vmatprep.subr.bf16.mxu0 0
  %167 = vmatpush2.bf16.xpose.msra.mxu0 0
  %168 = vmatprep.subr.bf16.mxu0 0
  %169 = vmatpush2.bf16.xpose.msra.mxu0 0
  %170 = vmatprep.subr.bf16.mxu0 0
  %171 = vmatpush2.bf16.xpose.msra.mxu0 0
  %172 = vmatprep.subr.bf16.mxu0 0
  %173 = vmatpush2.bf16.xpose.msra.mxu0 0
  %174 = vmatprep.mubr.bf16.mxu0 0
  %175 = vmatmul.mubr.bf16.gmra.mxu0 %v137
  %v176 = vpop.f32.mrf.mxu0
  %v177 = vadd.f32 0.0, %v176
  %v178 = vpop.f32.mrf.mxu0
  %v179 = vpop.f32.mrf.mxu0
  %v180 = vpop.f32.mrf.mxu0
  %181 = vdwg.mxu0
  %183 = vrot.lane.b32.xlu0 %v131, 96
  %v184 = vpop.permute.xlu0 %183
  %v186 = vsel %vm135, %v131, 0
  %v189 = vsel %vm135, %v184, 0
  %191 = vmatprep.subr.bf16.mxu0 0
  %192 = vmatpush1.bf16.xpose.msra.mxu0 0
  %193 = vmatprep.subr.bf16.mxu0 0
  %194 = vmatpush1.bf16.xpose.msra.mxu0 0
  %195 = vmatprep.subr.bf16.mxu0 0
  %196 = vmatpush1.bf16.xpose.msra.mxu0 0
  %197 = vmatprep.subr.bf16.mxu0 0
  %198 = vmatpush1.bf16.xpose.msra.mxu0 0
  %199 = vmatprep.subr.bf16.mxu0 0
  %200 = vmatpush1.bf16.xpose.msra.mxu0 0
  %201 = vmatprep.subr.bf16.mxu0 0
  %202 = vmatpush1.bf16.xpose.msra.mxu0 0
  %203 = vmatprep.subr.bf16.mxu0 0
  %204 = vmatpush1.bf16.xpose.msra.mxu0 0
  %205 = vmatprep.subr.bf16.mxu0 0
  %206 = vmatpush1.bf16.xpose.msra.mxu0 %v189
  %207 = vmatprep.subr.bf16.mxu0 0
  %208 = vmatpush2.bf16.xpose.msra.mxu0 0
  %209 = vmatprep.subr.bf16.mxu0 0
  %210 = vmatpush2.bf16.xpose.msra.mxu0 0
  %211 = vmatprep.subr.bf16.mxu0 0
  %212 = vmatpush2.bf16.xpose.msra.mxu0 0
  %213 = vmatprep.subr.bf16.mxu0 0
  %214 = vmatpush2.bf16.xpose.msra.mxu0 0
  %215 = vmatprep.subr.bf16.mxu0 0
  %216 = vmatpush2.bf16.xpose.msra.mxu0 0
  %217 = vmatprep.subr.bf16.mxu0 0
  %218 = vmatpush2.bf16.xpose.msra.mxu0 0
  %219 = vmatprep.subr.bf16.mxu0 0
  %220 = vmatpush2.bf16.xpose.msra.mxu0 0
  %221 = vmatprep.subr.bf16.mxu0 0
  %222 = vmatpush2.bf16.xpose.msra.mxu0 0
  %223 = vmatprep.mubr.bf16.mxu0 0
  %224 = vmatmul.mubr.bf16.gmra.mxu0 %v186
  %v225 = vpop.f32.mrf.mxu0
  %v226 = vadd.f32 0.0, %v225
  %v227 = vpop.f32.mrf.mxu0
  %v228 = vpop.f32.mrf.mxu0
  %v229 = vpop.f32.mrf.mxu0
  %230 = vdwg.mxu0
  %v231 = vmul.f32 %v177, 0.35355338
  %v232 = vmul.f32 %v226, 0.35355338
  %v233 = vsel %vm135, %v231, -inf
  %234 = vmax.xlane.f32.xlu0 %v233
  %v235 = vpop.xlane.xlu0 %234
  %v236 = vsel %vm135, %v232, -inf
  %237 = vmax.xlane.f32.xlu0 %v236
  %v238 = vpop.xlane.xlu0 %237
  %v239 = vsub.f32 %v231, %v235
  %v240 = vsub.f32 %v232, %v238
  %v241 = vmul.f32 %v239, 1.442695
  %v242 = vpow.pop %v241
  %v243 = vmul.f32 %v240, 1.442695
  %v244 = vpow.pop %v243
  %v245 = vsel %vm135, %v242, 0.0
  %246 = vadd.xlane.f32.xlu0 %v245
  %v247 = vpop.xlane.xlu0 %246
  %v248 = vsel %vm135, %v244, 0.0
  %249 = vadd.xlane.f32.xlu0 %v248
  %v250 = vpop.xlane.xlu0 %249
  %v251 = vrcp.pop %v247
  %v252 = vrcp.pop %v250
  %v253 = vmul.f32 %v242, %v251
  %v254 = vmul.f32 %v244, %v252
  %v255 = vpack.c.bf16 %v253, %v253
  %v256 = vpack.c.bf16 %v254, %v254
  %257 = vrot.lane.b32.xlu0 %v130, 64
  %v258 = vpop.permute.xlu0 %257
  %v260 = vsel %vm135, %v255, 0
  %vm262 = vcmask 1043456
  %v264 = vsel %vm262, %v258, 0
  %266 = vmatprep.subr.bf16.mxu0 0
  %267 = vmatpush1.bf16.msra.mxu0 0
  %268 = vmatprep.subr.bf16.mxu0 0
  %269 = vmatpush1.bf16.msra.mxu0 0
  %270 = vmatprep.subr.bf16.mxu0 0
  %271 = vmatpush1.bf16.msra.mxu0 0
  %272 = vmatprep.subr.bf16.mxu0 0
  %273 = vmatpush1.bf16.msra.mxu0 0
  %274 = vmatprep.subr.bf16.mxu0 0
  %275 = vmatpush1.bf16.msra.mxu0 0
  %276 = vmatprep.subr.bf16.mxu0 0
  %277 = vmatpush1.bf16.msra.mxu0 0
  %278 = vmatprep.subr.bf16.mxu0 0
  %279 = vmatpush1.bf16.msra.mxu0 0
  %280 = vmatprep.subr.bf16.mxu0 0
  %281 = vmatpush1.bf16.msra.mxu0 %v264
  %282 = vmatprep.subr.bf16.mxu0 0
  %283 = vmatpush2.bf16.msra.mxu0 0
  %284 = vmatprep.subr.bf16.mxu0 0
  %285 = vmatpush2.bf16.msra.mxu0 0
  %286 = vmatprep.subr.bf16.mxu0 0
  %287 = vmatpush2.bf16.msra.mxu0 0
  %288 = vmatprep.subr.bf16.mxu0 0
  %289 = vmatpush2.bf16.msra.mxu0 0
  %290 = vmatprep.subr.bf16.mxu0 0
  %291 = vmatpush2.bf16.msra.mxu0 0
  %292 = vmatprep.subr.bf16.mxu0 0
  %293 = vmatpush2.bf16.msra.mxu0 0
  %294 = vmatprep.subr.bf16.mxu0 0
  %295 = vmatpush2.bf16.msra.mxu0 0
  %296 = vmatprep.subr.bf16.mxu0 0
  %297 = vmatpush2.bf16.msra.mxu0 0
  %298 = vmatprep.mubr.bf16.mxu0 0
  %299 = vmatmul.mubr.bf16.gmra.mxu0 %v260
  %v300 = vpop.f32.mrf.mxu0
  %v301 = vadd.f32 0.0, %v300
  %v302 = vpop.f32.mrf.mxu0
  %v303 = vpop.f32.mrf.mxu0
  %v304 = vpop.f32.mrf.mxu0
  %305 = vdwg.mxu0
  %306 = vrot.lane.b32.xlu0 %v131, 64
  %v307 = vpop.permute.xlu0 %306
  %v309 = vsel %vm135, %v256, 0
  %v312 = vsel %vm262, %v307, 0
  %314 = vmatprep.subr.bf16.mxu0 0
  %315 = vmatpush1.bf16.msra.mxu0 0
  %316 = vmatprep.subr.bf16.mxu0 0
  %317 = vmatpush1.bf16.msra.mxu0 0
  %318 = vmatprep.subr.bf16.mxu0 0
  %319 = vmatpush1.bf16.msra.mxu0 0
  %320 = vmatprep.subr.bf16.mxu0 0
  %321 = vmatpush1.bf16.msra.mxu0 0
  %322 = vmatprep.subr.bf16.mxu0 0
  %323 = vmatpush1.bf16.msra.mxu0 0
  %324 = vmatprep.subr.bf16.mxu0 0
  %325 = vmatpush1.bf16.msra.mxu0 0
  %326 = vmatprep.subr.bf16.mxu0 0
  %327 = vmatpush1.bf16.msra.mxu0 0
  %328 = vmatprep.subr.bf16.mxu0 0
  %329 = vmatpush1.bf16.msra.mxu0 %v312
  %330 = vmatprep.subr.bf16.mxu0 0
  %331 = vmatpush2.bf16.msra.mxu0 0
  %332 = vmatprep.subr.bf16.mxu0 0
  %333 = vmatpush2.bf16.msra.mxu0 0
  %334 = vmatprep.subr.bf16.mxu0 0
  %335 = vmatpush2.bf16.msra.mxu0 0
  %336 = vmatprep.subr.bf16.mxu0 0
  %337 = vmatpush2.bf16.msra.mxu0 0
  %338 = vmatprep.subr.bf16.mxu0 0
  %339 = vmatpush2.bf16.msra.mxu0 0
  %340 = vmatprep.subr.bf16.mxu0 0
  %341 = vmatpush2.bf16.msra.mxu0 0
  %342 = vmatprep.subr.bf16.mxu0 0
  %343 = vmatpush2.bf16.msra.mxu0 0
  %344 = vmatprep.subr.bf16.mxu0 0
  %345 = vmatpush2.bf16.msra.mxu0 0
  %346 = vmatprep.mubr.bf16.mxu0 0
  %347 = vmatmul.mubr.bf16.gmra.mxu0 %v309
  %v348 = vpop.f32.mrf.mxu0
  %v349 = vadd.f32 0.0, %v348
  %v350 = vpop.f32.mrf.mxu0
  %v351 = vpop.f32.mrf.mxu0
  %v352 = vpop.f32.mrf.mxu0
  %353 = vdwg.mxu0
  %v354 = vpack.c.bf16 %v301, %v301
  %v355 = vpack.c.bf16 %v349, %v349
  %vm356 = vcmask 60416
  %357 = vst.msk [vmem:[#allocation2] sm:$0xf] %vm356, %v354
  %358 = vst.msk [vmem:[#allocation2 + $0x4] sm:$0xf] %vm356, %v355
  %359 = vrot.lane.b32.xlu0 %v130, 120
  %v360 = vpop.permute.xlu0 %359
  %361 = vrot.lane.b32.xlu0 %v130, 88
  %v362 = vpop.permute.xlu0 %361
  %v364 = vsel %vm135, %v360, 0
  %v367 = vsel %vm135, %v362, 0
  %369 = vmatprep.subr.bf16.mxu0 0
  %370 = vmatpush1.bf16.xpose.msra.mxu0 0
  %371 = vmatprep.subr.bf16.mxu0 0
  %372 = vmatpush1.bf16.xpose.msra.mxu0 0
  %373 = vmatprep.subr.bf16.mxu0 0
  %374 = vmatpush1.bf16.xpose.msra.mxu0 0
  %375 = vmatprep.subr.bf16.mxu0 0
  %376 = vmatpush1.bf16.xpose.msra.mxu0 0
  %377 = vmatprep.subr.bf16.mxu0 0
  %378 = vmatpush1.bf16.xpose.msra.mxu0 0
  %379 = vmatprep.subr.bf16.mxu0 0
  %380 = vmatpush1.bf16.xpose.msra.mxu0 0
  %381 = vmatprep.subr.bf16.mxu0 0
  %382 = vmatpush1.bf16.xpose.msra.mxu0 0
  %383 = vmatprep.subr.bf16.mxu0 0
  %384 = vmatpush1.bf16.xpose.msra.mxu0 %v367
  %385 = vmatprep.subr.bf16.mxu0 0
  %386 = vmatpush2.bf16.xpose.msra.mxu0 0
  %387 = vmatprep.subr.bf16.mxu0 0
  %388 = vmatpush2.bf16.xpose.msra.mxu0 0
  %389 = vmatprep.subr.bf16.mxu0 0
  %390 = vmatpush2.bf16.xpose.msra.mxu0 0
  %391 = vmatprep.subr.bf16.mxu0 0
  %392 = vmatpush2.bf16.xpose.msra.mxu0 0
  %393 = vmatprep.subr.bf16.mxu0 0
  %394 = vmatpush2.bf16.xpose.msra.mxu0 0
  %395 = vmatprep.subr.bf16.mxu0 0
  %396 = vmatpush2.bf16.xpose.msra.mxu0 0
  %397 = vmatprep.subr.bf16.mxu0 0
  %398 = vmatpush2.bf16.xpose.msra.mxu0 0
  %399 = vmatprep.subr.bf16.mxu0 0
  %400 = vmatpush2.bf16.xpose.msra.mxu0 0
  %401 = vmatprep.mubr.bf16.mxu0 0
  %402 = vmatmul.mubr.bf16.gmra.mxu0 %v364
  %v403 = vpop.f32.mrf.mxu0
  %v404 = vadd.f32 0.0, %v403
  %v405 = vpop.f32.mrf.mxu0
  %v406 = vpop.f32.mrf.mxu0
  %v407 = vpop.f32.mrf.mxu0
  %408 = vdwg.mxu0
  %409 = vrot.lane.b32.xlu0 %v131, 120
  %v410 = vpop.permute.xlu0 %409
  %411 = vrot.lane.b32.xlu0 %v131, 88
  %v412 = vpop.permute.xlu0 %411
  %v414 = vsel %vm135, %v410, 0
  %v417 = vsel %vm135, %v412, 0
  %419 = vmatprep.subr.bf16.mxu0 0
  %420 = vmatpush1.bf16.xpose.msra.mxu0 0
  %421 = vmatprep.subr.bf16.mxu0 0
  %422 = vmatpush1.bf16.xpose.msra.mxu0 0
  %423 = vmatprep.subr.bf16.mxu0 0
  %424 = vmatpush1.bf16.xpose.msra.mxu0 0
  %425 = vmatprep.subr.bf16.mxu0 0
  %426 = vmatpush1.bf16.xpose.msra.mxu0 0
  %427 = vmatprep.subr.bf16.mxu0 0
  %428 = vmatpush1.bf16.xpose.msra.mxu0 0
  %429 = vmatprep.subr.bf16.mxu0 0
  %430 = vmatpush1.bf16.xpose.msra.mxu0 0
  %431 = vmatprep.subr.bf16.mxu0 0
  %432 = vmatpush1.bf16.xpose.msra.mxu0 0
  %433 = vmatprep.subr.bf16.mxu0 0
  %434 = vmatpush1.bf16.xpose.msra.mxu0 %v417
  %435 = vmatprep.subr.bf16.mxu0 0
  %436 = vmatpush2.bf16.xpose.msra.mxu0 0
  %437 = vmatprep.subr.bf16.mxu0 0
  %438 = vmatpush2.bf16.xpose.msra.mxu0 0
  %439 = vmatprep.subr.bf16.mxu0 0
  %440 = vmatpush2.bf16.xpose.msra.mxu0 0
  %441 = vmatprep.subr.bf16.mxu0 0
  %442 = vmatpush2.bf16.xpose.msra.mxu0 0
  %443 = vmatprep.subr.bf16.mxu0 0
  %444 = vmatpush2.bf16.xpose.msra.mxu0 0
  %445 = vmatprep.subr.bf16.mxu0 0
  %446 = vmatpush2.bf16.xpose.msra.mxu0 0
  %447 = vmatprep.subr.bf16.mxu0 0
  %448 = vmatpush2.bf16.xpose.msra.mxu0 0
  %449 = vmatprep.subr.bf16.mxu0 0
  %450 = vmatpush2.bf16.xpose.msra.mxu0 0
  %451 = vmatprep.mubr.bf16.mxu0 0
  %452 = vmatmul.mubr.bf16.gmra.mxu0 %v414
  %v453 = vpop.f32.mrf.mxu0
  %v454 = vadd.f32 0.0, %v453
  %v455 = vpop.f32.mrf.mxu0
  %v456 = vpop.f32.mrf.mxu0
  %v457 = vpop.f32.mrf.mxu0
  %458 = vdwg.mxu0
  %v459 = vmul.f32 %v404, 0.35355338
  %v460 = vmul.f32 %v454, 0.35355338
  %v461 = vsel %vm135, %v459, -inf
  %462 = vmax.xlane.f32.xlu0 %v461
  %v463 = vpop.xlane.xlu0 %462
  %v464 = vsel %vm135, %v460, -inf
  %465 = vmax.xlane.f32.xlu0 %v464
  %v466 = vpop.xlane.xlu0 %465
  %v467 = vsub.f32 %v459, %v463
  %v468 = vsub.f32 %v460, %v466
  %v469 = vmul.f32 %v467, 1.442695
  %v470 = vpow.pop %v469
  %v471 = vmul.f32 %v468, 1.442695
  %v472 = vpow.pop %v471
  %v473 = vsel %vm135, %v470, 0.0
  %474 = vadd.xlane.f32.xlu0 %v473
  %v475 = vpop.xlane.xlu0 %474
  %v476 = vsel %vm135, %v472, 0.0
  %477 = vadd.xlane.f32.xlu0 %v476
  %v478 = vpop.xlane.xlu0 %477
  %v479 = vrcp.pop %v475
  %v480 = vrcp.pop %v478
  %v481 = vmul.f32 %v470, %v479
  %v482 = vmul.f32 %v472, %v480
  %v483 = vpack.c.bf16 %v481, %v481
  %v484 = vpack.c.bf16 %v482, %v482
  %485 = vrot.lane.b32.xlu0 %v130, 56
  %v486 = vpop.permute.xlu0 %485
  %v488 = vsel %vm135, %v483, 0
  %v491 = vsel %vm262, %v486, 0
  %493 = vmatprep.subr.bf16.mxu0 0
  %494 = vmatpush1.bf16.msra.mxu0 0
  %495 = vmatprep.subr.bf16.mxu0 0
  %496 = vmatpush1.bf16.msra.mxu0 0
  %497 = vmatprep.subr.bf16.mxu0 0
  %498 = vmatpush1.bf16.msra.mxu0 0
  %499 = vmatprep.subr.bf16.mxu0 0
  %500 = vmatpush1.bf16.msra.mxu0 0
  %501 = vmatprep.subr.bf16.mxu0 0
  %502 = vmatpush1.bf16.msra.mxu0 0
  %503 = vmatprep.subr.bf16.mxu0 0
  %504 = vmatpush1.bf16.msra.mxu0 0
  %505 = vmatprep.subr.bf16.mxu0 0
  %506 = vmatpush1.bf16.msra.mxu0 0
  %507 = vmatprep.subr.bf16.mxu0 0
  %508 = vmatpush1.bf16.msra.mxu0 %v491
  %509 = vmatprep.subr.bf16.mxu0 0
  %510 = vmatpush2.bf16.msra.mxu0 0
  %511 = vmatprep.subr.bf16.mxu0 0
  %512 = vmatpush2.bf16.msra.mxu0 0
  %513 = vmatprep.subr.bf16.mxu0 0
  %514 = vmatpush2.bf16.msra.mxu0 0
  %515 = vmatprep.subr.bf16.mxu0 0
  %516 = vmatpush2.bf16.msra.mxu0 0
  %517 = vmatprep.subr.bf16.mxu0 0
  %518 = vmatpush2.bf16.msra.mxu0 0
  %519 = vmatprep.subr.bf16.mxu0 0
  %520 = vmatpush2.bf16.msra.mxu0 0
  %521 = vmatprep.subr.bf16.mxu0 0
  %522 = vmatpush2.bf16.msra.mxu0 0
  %523 = vmatprep.subr.bf16.mxu0 0
  %524 = vmatpush2.bf16.msra.mxu0 0
  %525 = vmatprep.mubr.bf16.mxu0 0
  %526 = vmatmul.mubr.bf16.gmra.mxu0 %v488
  %v527 = vpop.f32.mrf.mxu0
  %v528 = vadd.f32 0.0, %v527
  %v529 = vpop.f32.mrf.mxu0
  %v530 = vpop.f32.mrf.mxu0
  %v531 = vpop.f32.mrf.mxu0
  %532 = vdwg.mxu0
  %533 = vrot.lane.b32.xlu0 %v131, 56
  %v534 = vpop.permute.xlu0 %533
  %v536 = vsel %vm135, %v484, 0
  %v539 = vsel %vm262, %v534, 0
  %541 = vmatprep.subr.bf16.mxu0 0
  %542 = vmatpush1.bf16.msra.mxu0 0
  %543 = vmatprep.subr.bf16.mxu0 0
  %544 = vmatpush1.bf16.msra.mxu0 0
  %545 = vmatprep.subr.bf16.mxu0 0
  %546 = vmatpush1.bf16.msra.mxu0 0
  %547 = vmatprep.subr.bf16.mxu0 0
  %548 = vmatpush1.bf16.msra.mxu0 0
  %549 = vmatprep.subr.bf16.mxu0 0
  %550 = vmatpush1.bf16.msra.mxu0 0
  %551 = vmatprep.subr.bf16.mxu0 0
  %552 = vmatpush1.bf16.msra.mxu0 0
  %553 = vmatprep.subr.bf16.mxu0 0
  %554 = vmatpush1.bf16.msra.mxu0 0
  %555 = vmatprep.subr.bf16.mxu0 0
  %556 = vmatpush1.bf16.msra.mxu0 %v539
  %557 = vmatprep.subr.bf16.mxu0 0
  %558 = vmatpush2.bf16.msra.mxu0 0
  %559 = vmatprep.subr.bf16.mxu0 0
  %560 = vmatpush2.bf16.msra.mxu0 0
  %561 = vmatprep.subr.bf16.mxu0 0
  %562 = vmatpush2.bf16.msra.mxu0 0
  %563 = vmatprep.subr.bf16.mxu0 0
  %564 = vmatpush2.bf16.msra.mxu0 0
  %565 = vmatprep.subr.bf16.mxu0 0
  %566 = vmatpush2.bf16.msra.mxu0 0
  %567 = vmatprep.subr.bf16.mxu0 0
  %568 = vmatpush2.bf16.msra.mxu0 0
  %569 = vmatprep.subr.bf16.mxu0 0
  %570 = vmatpush2.bf16.msra.mxu0 0
  %571 = vmatprep.subr.bf16.mxu0 0
  %572 = vmatpush2.bf16.msra.mxu0 0
  %573 = vmatprep.mubr.bf16.mxu0 0
  %574 = vmatmul.mubr.bf16.gmra.mxu0 %v536
  %v575 = vpop.f32.mrf.mxu0
  %v576 = vadd.f32 0.0, %v575
  %v577 = vpop.f32.mrf.mxu0
  %v578 = vpop.f32.mrf.mxu0
  %v579 = vpop.f32.mrf.mxu0
  %580 = vdwg.mxu0
  %v581 = vpack.c.bf16 %v528, %v528
  %v582 = vpack.c.bf16 %v576, %v576
  %v585 = vunpack.c.l.b16 %v581
  %v586 = vunpack.c.l.b16 %v582
  %v587 = vpack.c.b16 %v585, %v585
  %v588 = vpack.c.b16 %v586, %v586
  %589 = vrot.lane.b32.xlu0 %v587, 8
  %v590 = vpop.permute.xlu0 %589
  %591 = vrot.lane.b32.xlu0 %v588, 8
  %v592 = vpop.permute.xlu0 %591
  %vm595 = vcmask 126016
  %596 = vst.msk [vmem:[#allocation2] sm:$0xf] %vm595, %v590
  %597 = vst.msk [vmem:[#allocation2 + $0x4] sm:$0xf] %vm595, %v592
  %598 = vrot.lane.b32.xlu0 %v130, 112
  %v599 = vpop.permute.xlu0 %598
  %600 = vrot.lane.b32.xlu0 %v130, 80
  %v601 = vpop.permute.xlu0 %600
  %v603 = vsel %vm135, %v599, 0
  %v606 = vsel %vm135, %v601, 0
  %608 = vmatprep.subr.bf16.mxu0 0
  %609 = vmatpush1.bf16.xpose.msra.mxu0 0
  %610 = vmatprep.subr.bf16.mxu0 0
  %611 = vmatpush1.bf16.xpose.msra.mxu0 0
  %612 = vmatprep.subr.bf16.mxu0 0
  %613 = vmatpush1.bf16.xpose.msra.mxu0 0
  %614 = vmatprep.subr.bf16.mxu0 0
  %615 = vmatpush1.bf16.xpose.msra.mxu0 0
  %616 = vmatprep.subr.bf16.mxu0 0
  %617 = vmatpush1.bf16.xpose.msra.mxu0 0
  %618 = vmatprep.subr.bf16.mxu0 0
  %619 = vmatpush1.bf16.xpose.msra.mxu0 0
  %620 = vmatprep.subr.bf16.mxu0 0
  %621 = vmatpush1.bf16.xpose.msra.mxu0 0
  %622 = vmatprep.subr.bf16.mxu0 0
  %623 = vmatpush1.bf16.xpose.msra.mxu0 %v606
  %624 = vmatprep.subr.bf16.mxu0 0
  %625 = vmatpush2.bf16.xpose.msra.mxu0 0
  %626 = vmatprep.subr.bf16.mxu0 0
  %627 = vmatpush2.bf16.xpose.msra.mxu0 0
  %628 = vmatprep.subr.bf16.mxu0 0
  %629 = vmatpush2.bf16.xpose.msra.mxu0 0
  %630 = vmatprep.subr.bf16.mxu0 0
  %631 = vmatpush2.bf16.xpose.msra.mxu0 0
  %632 = vmatprep.subr.bf16.mxu0 0
  %633 = vmatpush2.bf16.xpose.msra.mxu0 0
  %634 = vmatprep.subr.bf16.mxu0 0
  %635 = vmatpush2.bf16.xpose.msra.mxu0 0
  %636 = vmatprep.subr.bf16.mxu0 0
  %637 = vmatpush2.bf16.xpose.msra.mxu0 0
  %638 = vmatprep.subr.bf16.mxu0 0
  %639 = vmatpush2.bf16.xpose.msra.mxu0 0
  %640 = vmatprep.mubr.bf16.mxu0 0
  %641 = vmatmul.mubr.bf16.gmra.mxu0 %v603
  %v642 = vpop.f32.mrf.mxu0
  %v643 = vadd.f32 0.0, %v642
  %v644 = vpop.f32.mrf.mxu0
  %v645 = vpop.f32.mrf.mxu0
  %v646 = vpop.f32.mrf.mxu0
  %647 = vdwg.mxu0
  %648 = vrot.lane.b32.xlu0 %v131, 112
  %v649 = vpop.permute.xlu0 %648
  %650 = vrot.lane.b32.xlu0 %v131, 80
  %v651 = vpop.permute.xlu0 %650
  %v653 = vsel %vm135, %v649, 0
  %v656 = vsel %vm135, %v651, 0
  %658 = vmatprep.subr.bf16.mxu0 0
  %659 = vmatpush1.bf16.xpose.msra.mxu0 0
  %660 = vmatprep.subr.bf16.mxu0 0
  %661 = vmatpush1.bf16.xpose.msra.mxu0 0
  %662 = vmatprep.subr.bf16.mxu0 0
  %663 = vmatpush1.bf16.xpose.msra.mxu0 0
  %664 = vmatprep.subr.bf16.mxu0 0
  %665 = vmatpush1.bf16.xpose.msra.mxu0 0
  %666 = vmatprep.subr.bf16.mxu0 0
  %667 = vmatpush1.bf16.xpose.msra.mxu0 0
  %668 = vmatprep.subr.bf16.mxu0 0
  %669 = vmatpush1.bf16.xpose.msra.mxu0 0
  %670 = vmatprep.subr.bf16.mxu0 0
  %671 = vmatpush1.bf16.xpose.msra.mxu0 0
  %672 = vmatprep.subr.bf16.mxu0 0
  %673 = vmatpush1.bf16.xpose.msra.mxu0 %v656
  %674 = vmatprep.subr.bf16.mxu0 0
  %675 = vmatpush2.bf16.xpose.msra.mxu0 0
  %676 = vmatprep.subr.bf16.mxu0 0
  %677 = vmatpush2.bf16.xpose.msra.mxu0 0
  %678 = vmatprep.subr.bf16.mxu0 0
  %679 = vmatpush2.bf16.xpose.msra.mxu0 0
  %680 = vmatprep.subr.bf16.mxu0 0
  %681 = vmatpush2.bf16.xpose.msra.mxu0 0
  %682 = vmatprep.subr.bf16.mxu0 0
  %683 = vmatpush2.bf16.xpose.msra.mxu0 0
  %684 = vmatprep.subr.bf16.mxu0 0
  %685 = vmatpush2.bf16.xpose.msra.mxu0 0
  %686 = vmatprep.subr.bf16.mxu0 0
  %687 = vmatpush2.bf16.xpose.msra.mxu0 0
  %688 = vmatprep.subr.bf16.mxu0 0
  %689 = vmatpush2.bf16.xpose.msra.mxu0 0
  %690 = vmatprep.mubr.bf16.mxu0 0
  %691 = vmatmul.mubr.bf16.gmra.mxu0 %v653
  %v692 = vpop.f32.mrf.mxu0
  %v693 = vadd.f32 0.0, %v692
  %v694 = vpop.f32.mrf.mxu0
  %v695 = vpop.f32.mrf.mxu0
  %v696 = vpop.f32.mrf.mxu0
  %697 = vdwg.mxu0
  %v698 = vmul.f32 %v643, 0.35355338
  %v699 = vmul.f32 %v693, 0.35355338
  %v700 = vsel %vm135, %v698, -inf
  %701 = vmax.xlane.f32.xlu0 %v700
  %v702 = vpop.xlane.xlu0 %701
  %v703 = vsel %vm135, %v699, -inf
  %704 = vmax.xlane.f32.xlu0 %v703
  %v705 = vpop.xlane.xlu0 %704
  %v706 = vsub.f32 %v698, %v702
  %v707 = vsub.f32 %v699, %v705
  %v708 = vmul.f32 %v706, 1.442695
  %v709 = vpow.pop %v708
  %v710 = vmul.f32 %v707, 1.442695
  %v711 = vpow.pop %v710
  %v712 = vsel %vm135, %v709, 0.0
  %713 = vadd.xlane.f32.xlu0 %v712
  %v714 = vpop.xlane.xlu0 %713
  %v715 = vsel %vm135, %v711, 0.0
  %716 = vadd.xlane.f32.xlu0 %v715
  %v717 = vpop.xlane.xlu0 %716
  %v718 = vrcp.pop %v714
  %v719 = vrcp.pop %v717
  %v720 = vmul.f32 %v709, %v718
  %v721 = vmul.f32 %v711, %v719
  %v722 = vpack.c.bf16 %v720, %v720
  %v723 = vpack.c.bf16 %v721, %v721
  %724 = vrot.lane.b32.xlu0 %v130, 48
  %v725 = vpop.permute.xlu0 %724
  %v727 = vsel %vm135, %v722, 0
  %v730 = vsel %vm262, %v725, 0
  %732 = vmatprep.subr.bf16.mxu0 0
  %733 = vmatpush1.bf16.msra.mxu0 0
  %734 = vmatprep.subr.bf16.mxu0 0
  %735 = vmatpush1.bf16.msra.mxu0 0
  %736 = vmatprep.subr.bf16.mxu0 0
  %737 = vmatpush1.bf16.msra.mxu0 0
  %738 = vmatprep.subr.bf16.mxu0 0
  %739 = vmatpush1.bf16.msra.mxu0 0
  %740 = vmatprep.subr.bf16.mxu0 0
  %741 = vmatpush1.bf16.msra.mxu0 0
  %742 = vmatprep.subr.bf16.mxu0 0
  %743 = vmatpush1.bf16.msra.mxu0 0
  %744 = vmatprep.subr.bf16.mxu0 0
  %745 = vmatpush1.bf16.msra.mxu0 0
  %746 = vmatprep.subr.bf16.mxu0 0
  %747 = vmatpush1.bf16.msra.mxu0 %v730
  %748 = vmatprep.subr.bf16.mxu0 0
  %749 = vmatpush2.bf16.msra.mxu0 0
  %750 = vmatprep.subr.bf16.mxu0 0
  %751 = vmatpush2.bf16.msra.mxu0 0
  %752 = vmatprep.subr.bf16.mxu0 0
  %753 = vmatpush2.bf16.msra.mxu0 0
  %754 = vmatprep.subr.bf16.mxu0 0
  %755 = vmatpush2.bf16.msra.mxu0 0
  %756 = vmatprep.subr.bf16.mxu0 0
  %757 = vmatpush2.bf16.msra.mxu0 0
  %758 = vmatprep.subr.bf16.mxu0 0
  %759 = vmatpush2.bf16.msra.mxu0 0
  %760 = vmatprep.subr.bf16.mxu0 0
  %761 = vmatpush2.bf16.msra.mxu0 0
  %762 = vmatprep.subr.bf16.mxu0 0
  %763 = vmatpush2.bf16.msra.mxu0 0
  %764 = vmatprep.mubr.bf16.mxu0 0
  %765 = vmatmul.mubr.bf16.gmra.mxu0 %v727
  %v766 = vpop.f32.mrf.mxu0
  %v767 = vadd.f32 0.0, %v766
  %v768 = vpop.f32.mrf.mxu0
  %v769 = vpop.f32.mrf.mxu0
  %v770 = vpop.f32.mrf.mxu0
  %771 = vdwg.mxu0
  %772 = vrot.lane.b32.xlu0 %v131, 48
  %v773 = vpop.permute.xlu0 %772
  %v775 = vsel %vm135, %v723, 0
  %v778 = vsel %vm262, %v773, 0
  %780 = vmatprep.subr.bf16.mxu0 0
  %781 = vmatpush1.bf16.msra.mxu0 0
  %782 = vmatprep.subr.bf16.mxu0 0
  %783 = vmatpush1.bf16.msra.mxu0 0
  %784 = vmatprep.subr.bf16.mxu0 0
  %785 = vmatpush1.bf16.msra.mxu0 0
  %786 = vmatprep.subr.bf16.mxu0 0
  %787 = vmatpush1.bf16.msra.mxu0 0
  %788 = vmatprep.subr.bf16.mxu0 0
  %789 = vmatpush1.bf16.msra.mxu0 0
  %790 = vmatprep.subr.bf16.mxu0 0
  %791 = vmatpush1.bf16.msra.mxu0 0
  %792 = vmatprep.subr.bf16.mxu0 0
  %793 = vmatpush1.bf16.msra.mxu0 0
  %794 = vmatprep.subr.bf16.mxu0 0
  %795 = vmatpush1.bf16.msra.mxu0 %v778
  %796 = vmatprep.subr.bf16.mxu0 0
  %797 = vmatpush2.bf16.msra.mxu0 0
  %798 = vmatprep.subr.bf16.mxu0 0
  %799 = vmatpush2.bf16.msra.mxu0 0
  %800 = vmatprep.subr.bf16.mxu0 0
  %801 = vmatpush2.bf16.msra.mxu0 0
  %802 = vmatprep.subr.bf16.mxu0 0
  %803 = vmatpush2.bf16.msra.mxu0 0
  %804 = vmatprep.subr.bf16.mxu0 0
  %805 = vmatpush2.bf16.msra.mxu0 0
  %806 = vmatprep.subr.bf16.mxu0 0
  %807 = vmatpush2.bf16.msra.mxu0 0
  %808 = vmatprep.subr.bf16.mxu0 0
  %809 = vmatpush2.bf16.msra.mxu0 0
  %810 = vmatprep.subr.bf16.mxu0 0
  %811 = vmatpush2.bf16.msra.mxu0 0
  %812 = vmatprep.mubr.bf16.mxu0 0
  %813 = vmatmul.mubr.bf16.gmra.mxu0 %v775
  %v814 = vpop.f32.mrf.mxu0
  %v815 = vadd.f32 0.0, %v814
  %v816 = vpop.f32.mrf.mxu0
  %v817 = vpop.f32.mrf.mxu0
  %v818 = vpop.f32.mrf.mxu0
  %819 = vdwg.mxu0
  %v820 = vpack.c.bf16 %v767, %v767
  %v821 = vpack.c.bf16 %v815, %v815
  %v824 = vunpack.c.l.b16 %v820
  %v825 = vunpack.c.l.b16 %v821
  %v826 = vpack.c.b16 %v824, %v824
  %v827 = vpack.c.b16 %v825, %v825
  %828 = vrot.lane.b32.xlu0 %v826, 16
  %v829 = vpop.permute.xlu0 %828
  %830 = vrot.lane.b32.xlu0 %v827, 16
  %v831 = vpop.permute.xlu0 %830
  %vm834 = vcmask 191616
  %835 = vst.msk [vmem:[#allocation2] sm:$0xf] %vm834, %v829
  %836 = vst.msk [vmem:[#allocation2 + $0x4] sm:$0xf] %vm834, %v831
  %837 = vrot.lane.b32.xlu0 %v130, 104
  %v838 = vpop.permute.xlu0 %837
  %839 = vrot.lane.b32.xlu0 %v130, 72
  %v840 = vpop.permute.xlu0 %839
  %v842 = vsel %vm135, %v838, 0
  %v845 = vsel %vm135, %v840, 0
  %847 = vmatprep.subr.bf16.mxu0 0
  %848 = vmatpush1.bf16.xpose.msra.mxu0 0
  %849 = vmatprep.subr.bf16.mxu0 0
  %850 = vmatpush1.bf16.xpose.msra.mxu0 0
  %851 = vmatprep.subr.bf16.mxu0 0
  %852 = vmatpush1.bf16.xpose.msra.mxu0 0
  %853 = vmatprep.subr.bf16.mxu0 0
  %854 = vmatpush1.bf16.xpose.msra.mxu0 0
  %855 = vmatprep.subr.bf16.mxu0 0
  %856 = vmatpush1.bf16.xpose.msra.mxu0 0
  %857 = vmatprep.subr.bf16.mxu0 0
  %858 = vmatpush1.bf16.xpose.msra.mxu0 0
  %859 = vmatprep.subr.bf16.mxu0 0
  %860 = vmatpush1.bf16.xpose.msra.mxu0 0
  %861 = vmatprep.subr.bf16.mxu0 0
  %862 = vmatpush1.bf16.xpose.msra.mxu0 %v845
  %863 = vmatprep.subr.bf16.mxu0 0
  %864 = vmatpush2.bf16.xpose.msra.mxu0 0
  %865 = vmatprep.subr.bf16.mxu0 0
  %866 = vmatpush2.bf16.xpose.msra.mxu0 0
  %867 = vmatprep.subr.bf16.mxu0 0
  %868 = vmatpush2.bf16.xpose.msra.mxu0 0
  %869 = vmatprep.subr.bf16.mxu0 0
  %870 = vmatpush2.bf16.xpose.msra.mxu0 0
  %871 = vmatprep.subr.bf16.mxu0 0
  %872 = vmatpush2.bf16.xpose.msra.mxu0 0
  %873 = vmatprep.subr.bf16.mxu0 0
  %874 = vmatpush2.bf16.xpose.msra.mxu0 0
  %875 = vmatprep.subr.bf16.mxu0 0
  %876 = vmatpush2.bf16.xpose.msra.mxu0 0
  %877 = vmatprep.subr.bf16.mxu0 0
  %878 = vmatpush2.bf16.xpose.msra.mxu0 0
  %879 = vmatprep.mubr.bf16.mxu0 0
  %880 = vmatmul.mubr.bf16.gmra.mxu0 %v842
  %v881 = vpop.f32.mrf.mxu0
  %v882 = vadd.f32 0.0, %v881
  %v883 = vpop.f32.mrf.mxu0
  %v884 = vpop.f32.mrf.mxu0
  %v885 = vpop.f32.mrf.mxu0
  %886 = vdwg.mxu0
  %887 = vrot.lane.b32.xlu0 %v131, 104
  %v888 = vpop.permute.xlu0 %887
  %889 = vrot.lane.b32.xlu0 %v131, 72
  %v890 = vpop.permute.xlu0 %889
  %v892 = vsel %vm135, %v888, 0
  %v895 = vsel %vm135, %v890, 0
  %897 = vmatprep.subr.bf16.mxu0 0
  %898 = vmatpush1.bf16.xpose.msra.mxu0 0
  %899 = vmatprep.subr.bf16.mxu0 0
  %900 = vmatpush1.bf16.xpose.msra.mxu0 0
  %901 = vmatprep.subr.bf16.mxu0 0
  %902 = vmatpush1.bf16.xpose.msra.mxu0 0
  %903 = vmatprep.subr.bf16.mxu0 0
  %904 = vmatpush1.bf16.xpose.msra.mxu0 0
  %905 = vmatprep.subr.bf16.mxu0 0
  %906 = vmatpush1.bf16.xpose.msra.mxu0 0
  %907 = vmatprep.subr.bf16.mxu0 0
  %908 = vmatpush1.bf16.xpose.msra.mxu0 0
  %909 = vmatprep.subr.bf16.mxu0 0
  %910 = vmatpush1.bf16.xpose.msra.mxu0 0
  %911 = vmatprep.subr.bf16.mxu0 0
  %912 = vmatpush1.bf16.xpose.msra.mxu0 %v895
  %913 = vmatprep.subr.bf16.mxu0 0
  %914 = vmatpush2.bf16.xpose.msra.mxu0 0
  %915 = vmatprep.subr.bf16.mxu0 0
  %916 = vmatpush2.bf16.xpose.msra.mxu0 0
  %917 = vmatprep.subr.bf16.mxu0 0
  %918 = vmatpush2.bf16.xpose.msra.mxu0 0
  %919 = vmatprep.subr.bf16.mxu0 0
  %920 = vmatpush2.bf16.xpose.msra.mxu0 0
  %921 = vmatprep.subr.bf16.mxu0 0
  %922 = vmatpush2.bf16.xpose.msra.mxu0 0
  %923 = vmatprep.subr.bf16.mxu0 0
  %924 = vmatpush2.bf16.xpose.msra.mxu0 0
  %925 = vmatprep.subr.bf16.mxu0 0
  %926 = vmatpush2.bf16.xpose.msra.mxu0 0
  %927 = vmatprep.subr.bf16.mxu0 0
  %928 = vmatpush2.bf16.xpose.msra.mxu0 0
  %929 = vmatprep.mubr.bf16.mxu0 0
  %930 = vmatmul.mubr.bf16.gmra.mxu0 %v892
  %v931 = vpop.f32.mrf.mxu0
  %v932 = vadd.f32 0.0, %v931
  %v933 = vpop.f32.mrf.mxu0
  %v934 = vpop.f32.mrf.mxu0
  %v935 = vpop.f32.mrf.mxu0
  %936 = vdwg.mxu0
  %v937 = vmul.f32 %v882, 0.35355338
  %v938 = vmul.f32 %v932, 0.35355338
  %v939 = vsel %vm135, %v937, -inf
  %940 = vmax.xlane.f32.xlu0 %v939
  %v941 = vpop.xlane.xlu0 %940
  %v942 = vsel %vm135, %v938, -inf
  %943 = vmax.xlane.f32.xlu0 %v942
  %v944 = vpop.xlane.xlu0 %943
  %v945 = vsub.f32 %v937, %v941
  %v946 = vsub.f32 %v938, %v944
  %v947 = vmul.f32 %v945, 1.442695
  %v948 = vpow.pop %v947
  %v949 = vmul.f32 %v946, 1.442695
  %v950 = vpow.pop %v949
  %v951 = vsel %vm135, %v948, 0.0
  %952 = vadd.xlane.f32.xlu0 %v951
  %v953 = vpop.xlane.xlu0 %952
  %v954 = vsel %vm135, %v950, 0.0
  %955 = vadd.xlane.f32.xlu0 %v954
  %v956 = vpop.xlane.xlu0 %955
  %v957 = vrcp.pop %v953
  %v958 = vrcp.pop %v956
  %v959 = vmul.f32 %v948, %v957
  %v960 = vmul.f32 %v950, %v958
  %v961 = vpack.c.bf16 %v959, %v959
  %v962 = vpack.c.bf16 %v960, %v960
  %963 = vrot.lane.b32.xlu0 %v130, 40
  %v964 = vpop.permute.xlu0 %963
  %v966 = vsel %vm135, %v961, 0
  %v969 = vsel %vm262, %v964, 0
  %971 = vmatprep.subr.bf16.mxu0 0
  %972 = vmatpush1.bf16.msra.mxu0 0
  %973 = vmatprep.subr.bf16.mxu0 0
  %974 = vmatpush1.bf16.msra.mxu0 0
  %975 = vmatprep.subr.bf16.mxu0 0
  %976 = vmatpush1.bf16.msra.mxu0 0
  %977 = vmatprep.subr.bf16.mxu0 0
  %978 = vmatpush1.bf16.msra.mxu0 0
  %979 = vmatprep.subr.bf16.mxu0 0
  %980 = vmatpush1.bf16.msra.mxu0 0
  %981 = vmatprep.subr.bf16.mxu0 0
  %982 = vmatpush1.bf16.msra.mxu0 0
  %983 = vmatprep.subr.bf16.mxu0 0
  %984 = vmatpush1.bf16.msra.mxu0 0
  %985 = vmatprep.subr.bf16.mxu0 0
  %986 = vmatpush1.bf16.msra.mxu0 %v969
  %987 = vmatprep.subr.bf16.mxu0 0
  %988 = vmatpush2.bf16.msra.mxu0 0
  %989 = vmatprep.subr.bf16.mxu0 0
  %990 = vmatpush2.bf16.msra.mxu0 0
  %991 = vmatprep.subr.bf16.mxu0 0
  %992 = vmatpush2.bf16.msra.mxu0 0
  %993 = vmatprep.subr.bf16.mxu0 0
  %994 = vmatpush2.bf16.msra.mxu0 0
  %995 = vmatprep.subr.bf16.mxu0 0
  %996 = vmatpush2.bf16.msra.mxu0 0
  %997 = vmatprep.subr.bf16.mxu0 0
  %998 = vmatpush2.bf16.msra.mxu0 0
  %999 = vmatprep.subr.bf16.mxu0 0
  %1000 = vmatpush2.bf16.msra.mxu0 0
  %1001 = vmatprep.subr.bf16.mxu0 0
  %1002 = vmatpush2.bf16.msra.mxu0 0
  %1003 = vmatprep.mubr.bf16.mxu0 0
  %1004 = vmatmul.mubr.bf16.gmra.mxu0 %v966
  %v1005 = vpop.f32.mrf.mxu0
  %v1006 = vadd.f32 0.0, %v1005
  %v1007 = vpop.f32.mrf.mxu0
  %v1008 = vpop.f32.mrf.mxu0
  %v1009 = vpop.f32.mrf.mxu0
  %1010 = vdwg.mxu0
  %1011 = vrot.lane.b32.xlu0 %v131, 40
  %v1012 = vpop.permute.xlu0 %1011
  %v1014 = vsel %vm135, %v962, 0
  %v1017 = vsel %vm262, %v1012, 0
  %1019 = vmatprep.subr.bf16.mxu0 0
  %1020 = vmatpush1.bf16.msra.mxu0 0
  %1021 = vmatprep.subr.bf16.mxu0 0
  %1022 = vmatpush1.bf16.msra.mxu0 0
  %1023 = vmatprep.subr.bf16.mxu0 0
  %1024 = vmatpush1.bf16.msra.mxu0 0
  %1025 = vmatprep.subr.bf16.mxu0 0
  %1026 = vmatpush1.bf16.msra.mxu0 0
  %1027 = vmatprep.subr.bf16.mxu0 0
  %1028 = vmatpush1.bf16.msra.mxu0 0
  %1029 = vmatprep.subr.bf16.mxu0 0
  %1030 = vmatpush1.bf16.msra.mxu0 0
  %1031 = vmatprep.subr.bf16.mxu0 0
  %1032 = vmatpush1.bf16.msra.mxu0 0
  %1033 = vmatprep.subr.bf16.mxu0 0
  %1034 = vmatpush1.bf16.msra.mxu0 %v1017
  %1035 = vmatprep.subr.bf16.mxu0 0
  %1036 = vmatpush2.bf16.msra.mxu0 0
  %1037 = vmatprep.subr.bf16.mxu0 0
  %1038 = vmatpush2.bf16.msra.mxu0 0
  %1039 = vmatprep.subr.bf16.mxu0 0
  %1040 = vmatpush2.bf16.msra.mxu0 0
  %1041 = vmatprep.subr.bf16.mxu0 0
  %1042 = vmatpush2.bf16.msra.mxu0 0
  %1043 = vmatprep.subr.bf16.mxu0 0
  %1044 = vmatpush2.bf16.msra.mxu0 0
  %1045 = vmatprep.subr.bf16.mxu0 0
  %1046 = vmatpush2.bf16.msra.mxu0 0
  %1047 = vmatprep.subr.bf16.mxu0 0
  %1048 = vmatpush2.bf16.msra.mxu0 0
  %1049 = vmatprep.subr.bf16.mxu0 0
  %1050 = vmatpush2.bf16.msra.mxu0 0
  %1051 = vmatprep.mubr.bf16.mxu0 0
  %1052 = vmatmul.mubr.bf16.gmra.mxu0 %v1014
  %v1053 = vpop.f32.mrf.mxu0
  %v1054 = vadd.f32 0.0, %v1053
  %v1055 = vpop.f32.mrf.mxu0
  %v1056 = vpop.f32.mrf.mxu0
  %v1057 = vpop.f32.mrf.mxu0
  %1058 = vdwg.mxu0
  %v1059 = vpack.c.bf16 %v1006, %v1006
  %v1060 = vpack.c.bf16 %v1054, %v1054
  %v1063 = vunpack.c.l.b16 %v1059
  %v1064 = vunpack.c.l.b16 %v1060
  %v1065 = vpack.c.b16 %v1063, %v1063
  %v1066 = vpack.c.b16 %v1064, %v1064
  %1067 = vrot.lane.b32.xlu0 %v1065, 24
  %v1068 = vpop.permute.xlu0 %1067
  %1069 = vrot.lane.b32.xlu0 %v1066, 24
  %v1070 = vpop.permute.xlu0 %1069
  %vm1073 = vcmask 257216
  %1074 = vst.msk [vmem:[#allocation2] sm:$0xf] %vm1073, %v1068
  %1075 = vst.msk [vmem:[#allocation2 + $0x4] sm:$0xf] %vm1073, %v1070
  %v1076 = vld [vmem:[#allocation2] sm:$0xf]
  %v1077 = vld [vmem:[#allocation2 + $0x4] sm:$0xf]
  %v1078 = vld [vmem:[%s3] sm:$0xf]
  %v1079 = vld [vmem:[%s3 + $0x4] sm:$0xf]
  %v1080 = vld [vmem:[%s3 + $0x8] sm:$0xf]
  %v1081 = vld [vmem:[%s3 + $0xc] sm:$0xf]
  %v1082 = vld [vmem:[%s4] sm:$0x1]
  %v1084 = vlaneseq
  %v1085 = vshrl.u32 %v1084, 7
  %v1086 = vsub.s32 0, %v1085
  %v1087 = vrot.slane %v1082, %v1086
  %v1091 = vunpack.c.l.b16 %v1076
  %v1092 = vunpack.c.l.b16 %v1077
  %v1093 = vpack.c.b16 %v1092, %v1091
  %v1098 = vunpack.c.l.b16 %v1078
  %v1099 = vunpack.c.l.b16 %v1079
  %v1100 = vunpack.c.l.b16 %v1080
  %v1101 = vunpack.c.l.b16 %v1081
  %v1102 = vpack.c.b16 %v1099, %v1098
  %v1103 = vpack.c.b16 %v1101, %v1100
  %v1107 = vsel %vm85, %v1093, 0
  %1109 = vmatprep.subr.bf16.mxu0 0
  %1110 = vmatpush1.bf16.msra.mxu0 0
  %1111 = vmatprep.subr.bf16.mxu0 0
  %1112 = vmatpush1.bf16.msra.mxu0 0
  %1113 = vmatprep.subr.bf16.mxu0 0
  %1114 = vmatpush1.bf16.msra.mxu0 0
  %1115 = vmatprep.subr.bf16.mxu0 0
  %1116 = vmatpush1.bf16.msra.mxu0 0
  %1117 = vmatprep.subr.bf16.mxu0 0
  %1118 = vmatpush1.bf16.msra.mxu0 0
  %1119 = vmatprep.subr.bf16.mxu0 0
  %1120 = vmatpush1.bf16.msra.mxu0 0
  %1121 = vmatprep.subr.bf16.mxu0 0
  %1122 = vmatpush1.bf16.msra.mxu0 %v1103
  %1123 = vmatprep.subr.bf16.mxu0 0
  %1124 = vmatpush1.bf16.msra.mxu0 %v1102
  %1125 = vmatprep.subr.bf16.mxu0 0
  %1126 = vmatpush2.bf16.msra.mxu0 0
  %1127 = vmatprep.subr.bf16.mxu0 0
  %1128 = vmatpush2.bf16.msra.mxu0 0
  %1129 = vmatprep.subr.bf16.mxu0 0
  %1130 = vmatpush2.bf16.msra.mxu0 0
  %1131 = vmatprep.subr.bf16.mxu0 0
  %1132 = vmatpush2.bf16.msra.mxu0 0
  %1133 = vmatprep.subr.bf16.mxu0 0
  %1134 = vmatpush2.bf16.msra.mxu0 0
  %1135 = vmatprep.subr.bf16.mxu0 0
  %1136 = vmatpush2.bf16.msra.mxu0 0
  %1137 = vmatprep.subr.bf16.mxu0 0
  %1138 = vmatpush2.bf16.msra.mxu0 0
  %1139 = vmatprep.subr.bf16.mxu0 0
  %1140 = vmatpush2.bf16.msra.mxu0 0
  %1141 = vmatprep.mubr.bf16.mxu0 0
  %1142 = vmatmul.mubr.bf16.gmra.mxu0 %v1107
  %v1143 = vpop.f32.mrf.mxu0
  %v1144 = vadd.f32 %v1087, %v1143
  %v1145 = vpop.f32.mrf.mxu0
  %v1146 = vpop.f32.mrf.mxu0
  %v1147 = vadd.f32 %v1087, %v1146
  %v1148 = vpop.f32.mrf.mxu0
  %1149 = vdwg.mxu0
  %v1150 = vadd.f32 %v59, %v1144
  %v1151 = vadd.f32 %v60, %v1147
  %v1152 = vld [vmem:[%s9] sm:$0x1]
  %v1153 = vld [vmem:[%s10] sm:$0x1]
  %v1154 = vsel %vm85, %v1150, 0.0
  %1155 = vadd.xlane.f32.xlu0 %v1154
  %v1156 = vpop.xlane.xlu0 %1155
  %v1157 = vsel %vm85, %v1151, 0.0
  %1158 = vadd.xlane.f32.xlu0 %v1157
  %v1159 = vpop.xlane.xlu0 %1158
  %v1160 = vrcp.pop 32.0
  %v1161 = vmul.f32 %v1156, %v1160
  %v1162 = vmul.f32 %v1159, %v1160
  %v1163 = vsub.f32 %v1150, %v1161
  %v1164 = vsub.f32 %v1151, %v1162
  %v1165 = vmul.f32 %v1163, %v1163
  %v1166 = vmul.f32 %v1164, %v1164
  %v1167 = vsel %vm85, %v1165, 0.0
  %1168 = vadd.xlane.f32.xlu0 %v1167
  %v1169 = vpop.xlane.xlu0 %1168
  %v1170 = vsel %vm85, %v1166, 0.0
  %1171 = vadd.xlane.f32.xlu0 %v1170
  %v1172 = vpop.xlane.xlu0 %1171
  %v1173 = vmul.f32 %v1169, %v1160
  %v1174 = vmul.f32 %v1172, %v1160
  %v1175 = vadd.f32 %v1173, 1e-05
  %v1176 = vadd.f32 %v1174, 1e-05
  %v1177 = vrsqrt.pop %v1175
  %v1178 = vrsqrt.pop %v1176
  %v1179 = vmul.f32 %v1163, %v1177
  %v1180 = vmul.f32 %v1164, %v1178
  %v1182 = vlaneseq
  %v1183 = vshrl.u32 %v1182, 7
  %v1184 = vsub.s32 0, %v1183
  %v1185 = vrot.slane %v1152, %v1184
  %v1187 = vmul.f32 %v1179, %v1185
  %v1188 = vmul.f32 %v1180, %v1185
  %v1190 = vlaneseq
  %v1191 = vshrl.u32 %v1190, 7
  %v1192 = vsub.s32 0, %v1191
  %v1193 = vrot.slane %v1153, %v1192
  %v1195 = vadd.f32 %v1187, %v1193
  %v1196 = vadd.f32 %v1188, %v1193
  %v1197 = vpack.c.bf16 %v1196, %v1195
  %v1198 = vld [vmem:[%s5] sm:$0xf]
  %v1199 = vld [vmem:[%s5 + $0x4] sm:$0xf]
  %v1200 = vld [vmem:[%s5 + $0x8] sm:$0xf]
  %v1201 = vld [vmem:[%s5 + $0xc] sm:$0xf]
  %v1202 = vld [vmem:[%s6] sm:$0x1]
  %v1204 = vlaneseq
  %v1205 = vshrl.u32 %v1204, 7
  %v1206 = vsub.s32 0, %v1205
  %v1207 = vrot.slane %v1202, %v1206
  %v1213 = vunpack.c.l.b16 %v1198
  %v1214 = vunpack.c.l.b16 %v1199
  %v1215 = vunpack.c.l.b16 %v1200
  %v1216 = vunpack.c.l.b16 %v1201
  %v1217 = vpack.c.b16 %v1214, %v1213
  %v1218 = vpack.c.b16 %v1216, %v1215
  %v1222 = vsel %vm85, %v1197, 0
  %1224 = vmatprep.subr.bf16.mxu0 0
  %1225 = vmatpush1.bf16.msra.mxu0 0
  %1226 = vmatprep.subr.bf16.mxu0 0
  %1227 = vmatpush1.bf16.msra.mxu0 0
  %1228 = vmatprep.subr.bf16.mxu0 0
  %1229 = vmatpush1.bf16.msra.mxu0 0
  %1230 = vmatprep.subr.bf16.mxu0 0
  %1231 = vmatpush1.bf16.msra.mxu0 0
  %1232 = vmatprep.subr.bf16.mxu0 0
  %1233 = vmatpush1.bf16.msra.mxu0 0
  %1234 = vmatprep.subr.bf16.mxu0 0
  %1235 = vmatpush1.bf16.msra.mxu0 0
  %1236 = vmatprep.subr.bf16.mxu0 0
  %1237 = vmatpush1.bf16.msra.mxu0 %v1218
  %1238 = vmatprep.subr.bf16.mxu0 0
  %1239 = vmatpush1.bf16.msra.mxu0 %v1217
  %1240 = vmatprep.subr.bf16.mxu0 0
  %1241 = vmatpush2.bf16.msra.mxu0 0
  %1242 = vmatprep.subr.bf16.mxu0 0
  %1243 = vmatpush2.bf16.msra.mxu0 0
  %1244 = vmatprep.subr.bf16.mxu0 0
  %1245 = vmatpush2.bf16.msra.mxu0 0
  %1246 = vmatprep.subr.bf16.mxu0 0
  %1247 = vmatpush2.bf16.msra.mxu0 0
  %1248 = vmatprep.subr.bf16.mxu0 0
  %1249 = vmatpush2.bf16.msra.mxu0 0
  %1250 = vmatprep.subr.bf16.mxu0 0
  %1251 = vmatpush2.bf16.msra.mxu0 0
  %1252 = vmatprep.subr.bf16.mxu0 0
  %1253 = vmatpush2.bf16.msra.mxu0 0
  %1254 = vmatprep.subr.bf16.mxu0 0
  %1255 = vmatpush2.bf16.msra.mxu0 0
  %1256 = vmatprep.mubr.bf16.mxu0 0
  %1257 = vmatmul.mubr.bf16.gmra.mxu0 %v1222
  %v1258 = vpop.f32.mrf.mxu0
  %v1259 = vadd.f32 %v1207, %v1258
  %v1260 = vpop.f32.mrf.mxu0
  %v1261 = vpop.f32.mrf.mxu0
  %v1262 = vadd.f32 %v1207, %v1261
  %v1263 = vpop.f32.mrf.mxu0
  %1264 = vdwg.mxu0
  %v1265 = vmax.f32 %v1259, 0.0
  %v1266 = vmax.f32 %v1262, 0.0
  %v1267 = vpack.c.bf16 %v1266, %v1265
  %v1268 = vld [vmem:[%s7] sm:$0xf]
  %v1269 = vld [vmem:[%s7 + $0x4] sm:$0xf]
  %v1270 = vld [vmem:[%s7 + $0x8] sm:$0xf]
  %v1271 = vld [vmem:[%s7 + $0xc] sm:$0xf]
  %v1272 = vld [vmem:[%s7 + $0x10] sm:$0xf]
  %v1273 = vld [vmem:[%s7 + $0x14] sm:$0xf]
  %v1274 = vld [vmem:[%s7 + $0x18] sm:$0xf]
  %v1275 = vld [vmem:[%s7 + $0x1c] sm:$0xf]
  %v1276 = vld [vmem:[%s7 + $0x20] sm:$0xf]
  %v1277 = vld [vmem:[%s7 + $0x24] sm:$0xf]
  %v1278 = vld [vmem:[%s7 + $0x28] sm:$0xf]
  %v1279 = vld [vmem:[%s7 + $0x2c] sm:$0xf]
  %v1280 = vld [vmem:[%s7 + $0x30] sm:$0xf]
  %v1281 = vld [vmem:[%s7 + $0x34] sm:$0xf]
  %v1282 = vld [vmem:[%s7 + $0x38] sm:$0xf]
  %v1283 = vld [vmem:[%s7 + $0x3c] sm:$0xf]
  %v1284 = vld [vmem:[%s8] sm:$0x1]
  %v1286 = vlaneseq
  %v1287 = vshrl.u32 %v1286, 7
  %v1288 = vsub.s32 0, %v1287
  %v1289 = vrot.slane %v1284, %v1288
  %v1307 = vunpack.c.l.b16 %v1268
  %v1308 = vunpack.c.l.b16 %v1269
  %v1309 = vunpack.c.l.b16 %v1270
  %v1310 = vunpack.c.l.b16 %v1271
  %v1311 = vunpack.c.l.b16 %v1272
  %v1312 = vunpack.c.l.b16 %v1273
  %v1313 = vunpack.c.l.b16 %v1274
  %v1314 = vunpack.c.l.b16 %v1275
  %v1315 = vunpack.c.l.b16 %v1276
  %v1316 = vunpack.c.l.b16 %v1277
  %v1317 = vunpack.c.l.b16 %v1278
  %v1318 = vunpack.c.l.b16 %v1279
  %v1319 = vunpack.c.l.b16 %v1280
  %v1320 = vunpack.c.l.b16 %v1281
  %v1321 = vunpack.c.l.b16 %v1282
  %v1322 = vunpack.c.l.b16 %v1283
  %v1323 = vpack.c.b16 %v1308, %v1307
  %v1324 = vpack.c.b16 %v1310, %v1309
  %v1325 = vpack.c.b16 %v1312, %v1311
  %v1326 = vpack.c.b16 %v1314, %v1313
  %v1327 = vpack.c.b16 %v1316, %v1315
  %v1328 = vpack.c.b16 %v1318, %v1317
  %v1329 = vpack.c.b16 %v1320, %v1319
  %v1330 = vpack.c.b16 %v1322, %v1321
  %1339 = vmatprep.subr.bf16.mxu0 0
  %1340 = vmatpush1.bf16.msra.mxu0 %v1330
  %1341 = vmatprep.subr.bf16.mxu0 0
  %1342 = vmatpush1.bf16.msra.mxu0 %v1329
  %1343 = vmatprep.subr.bf16.mxu0 0
  %1344 = vmatpush1.bf16.msra.mxu0 %v1328
  %1345 = vmatprep.subr.bf16.mxu0 0
  %1346 = vmatpush1.bf16.msra.mxu0 %v1327
  %1347 = vmatprep.subr.bf16.mxu0 0
  %1348 = vmatpush1.bf16.msra.mxu0 %v1326
  %1349 = vmatprep.subr.bf16.mxu0 0
  %1350 = vmatpush1.bf16.msra.mxu0 %v1325
  %1351 = vmatprep.subr.bf16.mxu0 0
  %1352 = vmatpush1.bf16.msra.mxu0 %v1324
  %1353 = vmatprep.subr.bf16.mxu0 0
  %1354 = vmatpush1.bf16.msra.mxu0 %v1323
  %1355 = vmatprep.subr.bf16.mxu0 0
  %1356 = vmatpush2.bf16.msra.mxu0 0
  %1357 = vmatprep.subr.bf16.mxu0 0
  %1358 = vmatpush2.bf16.msra.mxu0 0
  %1359 = vmatprep.subr.bf16.mxu0 0
  %1360 = vmatpush2.bf16.msra.mxu0 0
  %1361 = vmatprep.subr.bf16.mxu0 0
  %1362 = vmatpush2.bf16.msra.mxu0 0
  %1363 = vmatprep.subr.bf16.mxu0 0
  %1364 = vmatpush2.bf16.msra.mxu0 0
  %1365 = vmatprep.subr.bf16.mxu0 0
  %1366 = vmatpush2.bf16.msra.mxu0 0
  %1367 = vmatprep.subr.bf16.mxu0 0
  %1368 = vmatpush2.bf16.msra.mxu0 0
  %1369 = vmatprep.subr.bf16.mxu0 0
  %1370 = vmatpush2.bf16.msra.mxu0 0
  %1371 = vmatprep.mubr.bf16.mxu0 0
  %1372 = vmatmul.mubr.bf16.gmra.mxu0 %v1267
  %v1373 = vpop.f32.mrf.mxu0
  %v1374 = vadd.f32 %v1289, %v1373
  %v1375 = vpop.f32.mrf.mxu0
  %v1376 = vpop.f32.mrf.mxu0
  %v1377 = vadd.f32 %v1289, %v1376
  %v1378 = vpop.f32.mrf.mxu0
  %1379 = vdwg.mxu0
  %v1380 = vadd.f32 %v1195, %v1374
  %v1381 = vadd.f32 %v1196, %v1377
  %v1382 = vld [vmem:[%s11] sm:$0x1]
  %v1383 = vld [vmem:[%s12] sm:$0x1]
  %v1384 = vsel %vm85, %v1380, 0.0
  %1385 = vadd.xlane.f32.xlu0 %v1384
  %v1386 = vpop.xlane.xlu0 %1385
  %v1387 = vsel %vm85, %v1381, 0.0
  %1388 = vadd.xlane.f32.xlu0 %v1387
  %v1389 = vpop.xlane.xlu0 %1388
  %v1390 = vmul.f32 %v1386, %v1160
  %v1391 = vmul.f32 %v1389, %v1160
  %v1392 = vsub.f32 %v1380, %v1390
  %v1393 = vsub.f32 %v1381, %v1391
  %v1394 = vmul.f32 %v1392, %v1392
  %v1395 = vmul.f32 %v1393, %v1393
  %v1396 = vsel %vm85, %v1394, 0.0
  %1397 = vadd.xlane.f32.xlu0 %v1396
  %v1398 = vpop.xlane.xlu0 %1397
  %v1399 = vsel %vm85, %v1395, 0.0
  %1400 = vadd.xlane.f32.xlu0 %v1399
  %v1401 = vpop.xlane.xlu0 %1400
  %v1402 = vmul.f32 %v1398, %v1160
  %v1403 = vmul.f32 %v1401, %v1160
  %v1404 = vadd.f32 %v1402, 1e-05
  %v1405 = vadd.f32 %v1403, 1e-05
  %v1406 = vrsqrt.pop %v1404
  %v1407 = vrsqrt.pop %v1405
  %v1408 = vmul.f32 %v1392, %v1406
  %v1409 = vmul.f32 %v1393, %v1407
  %v1411 = vlaneseq
  %v1412 = vshrl.u32 %v1411, 7
  %v1413 = vsub.s32 0, %v1412
  %v1414 = vrot.slane %v1382, %v1413
  %v1416 = vmul.f32 %v1408, %v1414
  %v1417 = vmul.f32 %v1409, %v1414
  %v1419 = vlaneseq
  %v1420 = vshrl.u32 %v1419, 7
  %v1421 = vsub.s32 0, %v1420
  %v1422 = vrot.slane %v1383, %v1421
  %v1424 = vadd.f32 %v1416, %v1422
  %v1425 = vadd.f32 %v1417, %v1422
  %v1426 = vpack.c.bf16 %v1425, %v1424
  %s1427 = scalar_lea.vmem %s1, 16
  %v1428 = vld [vmem:[%s1427] sm:$0xf]
  %v1429 = vld [vmem:[%s1427 + $0x4] sm:$0xf]
  %v1430 = vld [vmem:[%s1427 + $0x8] sm:$0xf]
  %v1431 = vld [vmem:[%s1427 + $0xc] sm:$0xf]
  %s1432 = scalar_lea.vmem %s2, 1
  %v1433 = vld [vmem:[%s1432] sm:$0x1]
  %v1435 = vlaneseq
  %v1436 = vshrl.u32 %v1435, 7
  %v1437 = vsub.s32 0, %v1436
  %v1438 = vrot.slane %v1433, %v1437
  %v1444 = vunpack.c.l.b16 %v1428
  %v1445 = vunpack.c.l.b16 %v1429
  %v1446 = vunpack.c.l.b16 %v1430
  %v1447 = vunpack.c.l.b16 %v1431
  %v1448 = vpack.c.b16 %v1445, %v1444
  %v1449 = vpack.c.b16 %v1447, %v1446
  %v1453 = vsel %vm85, %v1426, 0
  %1455 = vmatprep.subr.bf16.mxu0 0
  %1456 = vmatpush1.bf16.msra.mxu0 0
  %1457 = vmatprep.subr.bf16.mxu0 0
  %1458 = vmatpush1.bf16.msra.mxu0 0
  %1459 = vmatprep.subr.bf16.mxu0 0
  %1460 = vmatpush1.bf16.msra.mxu0 0
  %1461 = vmatprep.subr.bf16.mxu0 0
  %1462 = vmatpush1.bf16.msra.mxu0 0
  %1463 = vmatprep.subr.bf16.mxu0 0
  %1464 = vmatpush1.bf16.msra.mxu0 0
  %1465 = vmatprep.subr.bf16.mxu0 0
  %1466 = vmatpush1.bf16.msra.mxu0 0
  %1467 = vmatprep.subr.bf16.mxu0 0
  %1468 = vmatpush1.bf16.msra.mxu0 %v1449
  %1469 = vmatprep.subr.bf16.mxu0 0
  %1470 = vmatpush1.bf16.msra.mxu0 %v1448
  %1471 = vmatprep.subr.bf16.mxu0 0
  %1472 = vmatpush2.bf16.msra.mxu0 0
  %1473 = vmatprep.subr.bf16.mxu0 0
  %1474 = vmatpush2.bf16.msra.mxu0 0
  %1475 = vmatprep.subr.bf16.mxu0 0
  %1476 = vmatpush2.bf16.msra.mxu0 0
  %1477 = vmatprep.subr.bf16.mxu0 0
  %1478 = vmatpush2.bf16.msra.mxu0 0
  %1479 = vmatprep.subr.bf16.mxu0 0
  %1480 = vmatpush2.bf16.msra.mxu0 0
  %1481 = vmatprep.subr.bf16.mxu0 0
  %1482 = vmatpush2.bf16.msra.mxu0 0
  %1483 = vmatprep.subr.bf16.mxu0 0
  %1484 = vmatpush2.bf16.msra.mxu0 0
  %1485 = vmatprep.subr.bf16.mxu0 0
  %1486 = vmatpush2.bf16.msra.mxu0 0
  %1487 = vmatprep.mubr.bf16.mxu0 0
  %1488 = vmatmul.mubr.bf16.gmra.mxu0 %v1453
  %v1489 = vpop.f32.mrf.mxu0
  %v1490 = vadd.f32 %v1438, %v1489
  %v1491 = vpop.f32.mrf.mxu0
  %v1492 = vpop.f32.mrf.mxu0
  %v1493 = vadd.f32 %v1438, %v1492
  %v1494 = vpop.f32.mrf.mxu0
  %1495 = vdwg.mxu0
  %v1496 = vpack.c.bf16 %v1490, %v1490
  %v1497 = vpack.c.bf16 %v1493, %v1493
  %1499 = vrot.lane.b32.xlu0 %v1496, 96
  %v1500 = vpop.permute.xlu0 %1499
  %v1502 = vsel %vm135, %v1496, 0
  %v1505 = vsel %vm135, %v1500, 0
  %1507 = vmatprep.subr.bf16.mxu0 0
  %1508 = vmatpush1.bf16.xpose.msra.mxu0 0
  %1509 = vmatprep.subr.bf16.mxu0 0
  %1510 = vmatpush1.bf16.xpose.msra.mxu0 0
  %1511 = vmatprep.subr.bf16.mxu0 0
  %1512 = vmatpush1.bf16.xpose.msra.mxu0 0
  %1513 = vmatprep.subr.bf16.mxu0 0
  %1514 = vmatpush1.bf16.xpose.msra.mxu0 0
  %1515 = vmatprep.subr.bf16.mxu0 0
  %1516 = vmatpush1.bf16.xpose.msra.mxu0 0
  %1517 = vmatprep.subr.bf16.mxu0 0
  %1518 = vmatpush1.bf16.xpose.msra.mxu0 0
  %1519 = vmatprep.subr.bf16.mxu0 0
  %1520 = vmatpush1.bf16.xpose.msra.mxu0 0
  %1521 = vmatprep.subr.bf16.mxu0 0
  %1522 = vmatpush1.bf16.xpose.msra.mxu0 %v1505
  %1523 = vmatprep.subr.bf16.mxu0 0
  %1524 = vmatpush2.bf16.xpose.msra.mxu0 0
  %1525 = vmatprep.subr.bf16.mxu0 0
  %1526 = vmatpush2.bf16.xpose.msra.mxu0 0
  %1527 = vmatprep.subr.bf16.mxu0 0
  %1528 = vmatpush2.bf16.xpose.msra.mxu0 0
  %1529 = vmatprep.subr.bf16.mxu0 0
  %1530 = vmatpush2.bf16.xpose.msra.mxu0 0
  %1531 = vmatprep.subr.bf16.mxu0 0
  %1532 = vmatpush2.bf16.xpose.msra.mxu0 0
  %1533 = vmatprep.subr.bf16.mxu0 0
  %1534 = vmatpush2.bf16.xpose.msra.mxu0 0
  %1535 = vmatprep.subr.bf16.mxu0 0
  %1536 = vmatpush2.bf16.xpose.msra.mxu0 0
  %1537 = vmatprep.subr.bf16.mxu0 0
  %1538 = vmatpush2.bf16.xpose.msra.mxu0 0
  %1539 = vmatprep.mubr.bf16.mxu0 0
  %1540 = vmatmul.mubr.bf16.gmra.mxu0 %v1502
  %v1541 = vpop.f32.mrf.mxu0
  %v1542 = vadd.f32 0.0, %v1541
  %v1543 = vpop.f32.mrf.mxu0
  %v1544 = vpop.f32.mrf.mxu0
  %v1545 = vpop.f32.mrf.mxu0
  %1546 = vdwg.mxu0
  %1548 = vrot.lane.b32.xlu0 %v1497, 96
  %v1549 = vpop.permute.xlu0 %1548
  %v1551 = vsel %vm135, %v1497, 0
  %v1554 = vsel %vm135, %v1549, 0
  %1556 = vmatprep.subr.bf16.mxu0 0
  %1557 = vmatpush1.bf16.xpose.msra.mxu0 0
  %1558 = vmatprep.subr.bf16.mxu0 0
  %1559 = vmatpush1.bf16.xpose.msra.mxu0 0
  %1560 = vmatprep.subr.bf16.mxu0 0
  %1561 = vmatpush1.bf16.xpose.msra.mxu0 0
  %1562 = vmatprep.subr.bf16.mxu0 0
  %1563 = vmatpush1.bf16.xpose.msra.mxu0 0
  %1564 = vmatprep.subr.bf16.mxu0 0
  %1565 = vmatpush1.bf16.xpose.msra.mxu0 0
  %1566 = vmatprep.subr.bf16.mxu0 0
  %1567 = vmatpush1.bf16.xpose.msra.mxu0 0
  %1568 = vmatprep.subr.bf16.mxu0 0
  %1569 = vmatpush1.bf16.xpose.msra.mxu0 0
  %1570 = vmatprep.subr.bf16.mxu0 0
  %1571 = vmatpush1.bf16.xpose.msra.mxu0 %v1554
  %1572 = vmatprep.subr.bf16.mxu0 0
  %1573 = vmatpush2.bf16.xpose.msra.mxu0 0
  %1574 = vmatprep.subr.bf16.mxu0 0
  %1575 = vmatpush2.bf16.xpose.msra.mxu0 0
  %1576 = vmatprep.subr.bf16.mxu0 0
  %1577 = vmatpush2.bf16.xpose.msra.mxu0 0
  %1578 = vmatprep.subr.bf16.mxu0 0
  %1579 = vmatpush2.bf16.xpose.msra.mxu0 0
  %1580 = vmatprep.subr.bf16.mxu0 0
  %1581 = vmatpush2.bf16.xpose.msra.mxu0 0
  %1582 = vmatprep.subr.bf16.mxu0 0
  %1583 = vmatpush2.bf16.xpose.msra.mxu0 0
  %1584 = vmatprep.subr.bf16.mxu0 0
  %1585 = vmatpush2.bf16.xpose.msra.mxu0 0
  %1586 = vmatprep.subr.bf16.mxu0 0
  %1587 = vmatpush2.bf16.xpose.msra.mxu0 0
  %1588 = vmatprep.mubr.bf16.mxu0 0
  %1589 = vmatmul.mubr.bf16.gmra.mxu0 %v1551
  %v1590 = vpop.f32.mrf.mxu0
  %v1591 = vadd.f32 0.0, %v1590
  %v1592 = vpop.f32.mrf.mxu0
  %v1593 = vpop.f32.mrf.mxu0
  %v1594 = vpop.f32.mrf.mxu0
  %1595 = vdwg.mxu0
  %v1596 = vmul.f32 %v1542, 0.35355338
  %v1597 = vmul.f32 %v1591, 0.35355338
  %v1598 = vsel %vm135, %v1596, -inf
  %1599 = vmax.xlane.f32.xlu0 %v1598
  %v1600 = vpop.xlane.xlu0 %1599
  %v1601 = vsel %vm135, %v1597, -inf
  %1602 = vmax.xlane.f32.xlu0 %v1601
  %v1603 = vpop.xlane.xlu0 %1602
  %v1604 = vsub.f32 %v1596, %v1600
  %v1605 = vsub.f32 %v1597, %v1603
  %v1606 = vmul.f32 %v1604, 1.442695
  %v1607 = vpow.pop %v1606
  %v1608 = vmul.f32 %v1605, 1.442695
  %v1609 = vpow.pop %v1608
  %v1610 = vsel %vm135, %v1607, 0.0
  %1611 = vadd.xlane.f32.xlu0 %v1610
  %v1612 = vpop.xlane.xlu0 %1611
  %v1613 = vsel %vm135, %v1609, 0.0
  %1614 = vadd.xlane.f32.xlu0 %v1613
  %v1615 = vpop.xlane.xlu0 %1614
  %v1616 = vrcp.pop %v1612
  %v1617 = vrcp.pop %v1615
  %v1618 = vmul.f32 %v1607, %v1616
  %v1619 = vmul.f32 %v1609, %v1617
  %v1620 = vpack.c.bf16 %v1618, %v1618
  %v1621 = vpack.c.bf16 %v1619, %v1619
  %1622 = vrot.lane.b32.xlu0 %v1496, 64
  %v1623 = vpop.permute.xlu0 %1622
  %v1625 = vsel %vm135, %v1620, 0
  %v1628 = vsel %vm262, %v1623, 0
  %1630 = vmatprep.subr.bf16.mxu0 0
  %1631 = vmatpush1.bf16.msra.mxu0 0
  %1632 = vmatprep.subr.bf16.mxu0 0
  %1633 = vmatpush1.bf16.msra.mxu0 0
  %1634 = vmatprep.subr.bf16.mxu0 0
  %1635 = vmatpush1.bf16.msra.mxu0 0
  %1636 = vmatprep.subr.bf16.mxu0 0
  %1637 = vmatpush1.bf16.msra.mxu0 0
  %1638 = vmatprep.subr.bf16.mxu0 0
  %1639 = vmatpush1.bf16.msra.mxu0 0
  %1640 = vmatprep.subr.bf16.mxu0 0
  %1641 = vmatpush1.bf16.msra.mxu0 0
  %1642 = vmatprep.subr.bf16.mxu0 0
  %1643 = vmatpush1.bf16.msra.mxu0 0
  %1644 = vmatprep.subr.bf16.mxu0 0
  %1645 = vmatpush1.bf16.msra.mxu0 %v1628
  %1646 = vmatprep.subr.bf16.mxu0 0
  %1647 = vmatpush2.bf16.msra.mxu0 0
  %1648 = vmatprep.subr.bf16.mxu0 0
  %1649 = vmatpush2.bf16.msra.mxu0 0
  %1650 = vmatprep.subr.bf16.mxu0 0
  %1651 = vmatpush2.bf16.msra.mxu0 0
  %1652 = vmatprep.subr.bf16.mxu0 0
  %1653 = vmatpush2.bf16.msra.mxu0 0
  %1654 = vmatprep.subr.bf16.mxu0 0
  %1655 = vmatpush2.bf16.msra.mxu0 0
  %1656 = vmatprep.subr.bf16.mxu0 0
  %1657 = vmatpush2.bf16.msra.mxu0 0
  %1658 = vmatprep.subr.bf16.mxu0 0
  %1659 = vmatpush2.bf16.msra.mxu0 0
  %1660 = vmatprep.subr.bf16.mxu0 0
  %1661 = vmatpush2.bf16.msra.mxu0 0
  %1662 = vmatprep.mubr.bf16.mxu0 0
  %1663 = vmatmul.mubr.bf16.gmra.mxu0 %v1625
  %v1664 = vpop.f32.mrf.mxu0
  %v1665 = vadd.f32 0.0, %v1664
  %v1666 = vpop.f32.mrf.mxu0
  %v1667 = vpop.f32.mrf.mxu0
  %v1668 = vpop.f32.mrf.mxu0
  %1669 = vdwg.mxu0
  %1670 = vrot.lane.b32.xlu0 %v1497, 64
  %v1671 = vpop.permute.xlu0 %1670
  %v1673 = vsel %vm135, %v1621, 0
  %v1676 = vsel %vm262, %v1671, 0
  %1678 = vmatprep.subr.bf16.mxu0 0
  %1679 = vmatpush1.bf16.msra.mxu0 0
  %1680 = vmatprep.subr.bf16.mxu0 0
  %1681 = vmatpush1.bf16.msra.mxu0 0
  %1682 = vmatprep.subr.bf16.mxu0 0
  %1683 = vmatpush1.bf16.msra.mxu0 0
  %1684 = vmatprep.subr.bf16.mxu0 0
  %1685 = vmatpush1.bf16.msra.mxu0 0
  %1686 = vmatprep.subr.bf16.mxu0 0
  %1687 = vmatpush1.bf16.msra.mxu0 0
  %1688 = vmatprep.subr.bf16.mxu0 0
  %1689 = vmatpush1.bf16.msra.mxu0 0
  %1690 = vmatprep.subr.bf16.mxu0 0
  %1691 = vmatpush1.bf16.msra.mxu0 0
  %1692 = vmatprep.subr.bf16.mxu0 0
  %1693 = vmatpush1.bf16.msra.mxu0 %v1676
  %1694 = vmatprep.subr.bf16.mxu0 0
  %1695 = vmatpush2.bf16.msra.mxu0 0
  %1696 = vmatprep.subr.bf16.mxu0 0
  %1697 = vmatpush2.bf16.msra.mxu0 0
  %1698 = vmatprep.subr.bf16.mxu0 0
  %1699 = vmatpush2.bf16.msra.mxu0 0
  %1700 = vmatprep.subr.bf16.mxu0 0
  %1701 = vmatpush2.bf16.msra.mxu0 0
  %1702 = vmatprep.subr.bf16.mxu0 0
  %1703 = vmatpush2.bf16.msra.mxu0 0
  %1704 = vmatprep.subr.bf16.mxu0 0
  %1705 = vmatpush2.bf16.msra.mxu0 0
  %1706 = vmatprep.subr.bf16.mxu0 0
  %1707 = vmatpush2.bf16.msra.mxu0 0
  %1708 = vmatprep.subr.bf16.mxu0 0
  %1709 = vmatpush2.bf16.msra.mxu0 0
  %1710 = vmatprep.mubr.bf16.mxu0 0
  %1711 = vmatmul.mubr.bf16.gmra.mxu0 %v1673
  %v1712 = vpop.f32.mrf.mxu0
  %v1713 = vadd.f32 0.0, %v1712
  %v1714 = vpop.f32.mrf.mxu0
  %v1715 = vpop.f32.mrf.mxu0
  %v1716 = vpop.f32.mrf.mxu0
  %1717 = vdwg.mxu0
  %v1718 = vpack.c.bf16 %v1665, %v1665
  %v1719 = vpack.c.bf16 %v1713, %v1713
  %1720 = vst.msk [vmem:[#allocation2] sm:$0xf] %vm356, %v1718
  %1721 = vst.msk [vmem:[#allocation2 + $0x4] sm:$0xf] %vm356, %v1719
  %1722 = vrot.lane.b32.xlu0 %v1496, 120
  %v1723 = vpop.permute.xlu0 %1722
  %1724 = vrot.lane.b32.xlu0 %v1496, 88
  %v1725 = vpop.permute.xlu0 %1724
  %v1727 = vsel %vm135, %v1723, 0
  %v1730 = vsel %vm135, %v1725, 0
  %1732 = vmatprep.subr.bf16.mxu0 0
  %1733 = vmatpush1.bf16.xpose.msra.mxu0 0
  %1734 = vmatprep.subr.bf16.mxu0 0
  %1735 = vmatpush1.bf16.xpose.msra.mxu0 0
  %1736 = vmatprep.subr.bf16.mxu0 0
  %1737 = vmatpush1.bf16.xpose.msra.mxu0 0
  %1738 = vmatprep.subr.bf16.mxu0 0
  %1739 = vmatpush1.bf16.xpose.msra.mxu0 0
  %1740 = vmatprep.subr.bf16.mxu0 0
  %1741 = vmatpush1.bf16.xpose.msra.mxu0 0
  %1742 = vmatprep.subr.bf16.mxu0 0
  %1743 = vmatpush1.bf16.xpose.msra.mxu0 0
  %1744 = vmatprep.subr.bf16.mxu0 0
  %1745 = vmatpush1.bf16.xpose.msra.mxu0 0
  %1746 = vmatprep.subr.bf16.mxu0 0
  %1747 = vmatpush1.bf16.xpose.msra.mxu0 %v1730
  %1748 = vmatprep.subr.bf16.mxu0 0
  %1749 = vmatpush2.bf16.xpose.msra.mxu0 0
  %1750 = vmatprep.subr.bf16.mxu0 0
  %1751 = vmatpush2.bf16.xpose.msra.mxu0 0
  %1752 = vmatprep.subr.bf16.mxu0 0
  %1753 = vmatpush2.bf16.xpose.msra.mxu0 0
  %1754 = vmatprep.subr.bf16.mxu0 0
  %1755 = vmatpush2.bf16.xpose.msra.mxu0 0
  %1756 = vmatprep.subr.bf16.mxu0 0
  %1757 = vmatpush2.bf16.xpose.msra.mxu0 0
  %1758 = vmatprep.subr.bf16.mxu0 0
  %1759 = vmatpush2.bf16.xpose.msra.mxu0 0
  %1760 = vmatprep.subr.bf16.mxu0 0
  %1761 = vmatpush2.bf16.xpose.msra.mxu0 0
  %1762 = vmatprep.subr.bf16.mxu0 0
  %1763 = vmatpush2.bf16.xpose.msra.mxu0 0
  %1764 = vmatprep.mubr.bf16.mxu0 0
  %1765 = vmatmul.mubr.bf16.gmra.mxu0 %v1727
  %v1766 = vpop.f32.mrf.mxu0
  %v1767 = vadd.f32 0.0, %v1766
  %v1768 = vpop.f32.mrf.mxu0
  %v1769 = vpop.f32.mrf.mxu0
  %v1770 = vpop.f32.mrf.mxu0
  %1771 = vdwg.mxu0
  %1772 = vrot.lane.b32.xlu0 %v1497, 120
  %v1773 = vpop.permute.xlu0 %1772
  %1774 = vrot.lane.b32.xlu0 %v1497, 88
  %v1775 = vpop.permute.xlu0 %1774
  %v1777 = vsel %vm135, %v1773, 0
  %v1780 = vsel %vm135, %v1775, 0
  %1782 = vmatprep.subr.bf16.mxu0 0
  %1783 = vmatpush1.bf16.xpose.msra.mxu0 0
  %1784 = vmatprep.subr.bf16.mxu0 0
  %1785 = vmatpush1.bf16.xpose.msra.mxu0 0
  %1786 = vmatprep.subr.bf16.mxu0 0
  %1787 = vmatpush1.bf16.xpose.msra.mxu0 0
  %1788 = vmatprep.subr.bf16.mxu0 0
  %1789 = vmatpush1.bf16.xpose.msra.mxu0 0
  %1790 = vmatprep.subr.bf16.mxu0 0
  %1791 = vmatpush1.bf16.xpose.msra.mxu0 0
  %1792 = vmatprep.subr.bf16.mxu0 0
  %1793 = vmatpush1.bf16.xpose.msra.mxu0 0
  %1794 = vmatprep.subr.bf16.mxu0 0
  %1795 = vmatpush1.bf16.xpose.msra.mxu0 0
  %1796 = vmatprep.subr.bf16.mxu0 0
  %1797 = vmatpush1.bf16.xpose.msra.mxu0 %v1780
  %1798 = vmatprep.subr.bf16.mxu0 0
  %1799 = vmatpush2.bf16.xpose.msra.mxu0 0
  %1800 = vmatprep.subr.bf16.mxu0 0
  %1801 = vmatpush2.bf16.xpose.msra.mxu0 0
  %1802 = vmatprep.subr.bf16.mxu0 0
  %1803 = vmatpush2.bf16.xpose.msra.mxu0 0
  %1804 = vmatprep.subr.bf16.mxu0 0
  %1805 = vmatpush2.bf16.xpose.msra.mxu0 0
  %1806 = vmatprep.subr.bf16.mxu0 0
  %1807 = vmatpush2.bf16.xpose.msra.mxu0 0
  %1808 = vmatprep.subr.bf16.mxu0 0
  %1809 = vmatpush2.bf16.xpose.msra.mxu0 0
  %1810 = vmatprep.subr.bf16.mxu0 0
  %1811 = vmatpush2.bf16.xpose.msra.mxu0 0
  %1812 = vmatprep.subr.bf16.mxu0 0
  %1813 = vmatpush2.bf16.xpose.msra.mxu0 0
  %1814 = vmatprep.mubr.bf16.mxu0 0
  %1815 = vmatmul.mubr.bf16.gmra.mxu0 %v1777
  %v1816 = vpop.f32.mrf.mxu0
  %v1817 = vadd.f32 0.0, %v1816
  %v1818 = vpop.f32.mrf.mxu0
  %v1819 = vpop.f32.mrf.mxu0
  %v1820 = vpop.f32.mrf.mxu0
  %1821 = vdwg.mxu0
  %v1822 = vmul.f32 %v1767, 0.35355338
  %v1823 = vmul.f32 %v1817, 0.35355338
  %v1824 = vsel %vm135, %v1822, -inf
  %1825 = vmax.xlane.f32.xlu0 %v1824
  %v1826 = vpop.xlane.xlu0 %1825
  %v1827 = vsel %vm135, %v1823, -inf
  %1828 = vmax.xlane.f32.xlu0 %v1827
  %v1829 = vpop.xlane.xlu0 %1828
  %v1830 = vsub.f32 %v1822, %v1826
  %v1831 = vsub.f32 %v1823, %v1829
  %v1832 = vmul.f32 %v1830, 1.442695
  %v1833 = vpow.pop %v1832
  %v1834 = vmul.f32 %v1831, 1.442695
  %v1835 = vpow.pop %v1834
  %v1836 = vsel %vm135, %v1833, 0.0
  %1837 = vadd.xlane.f32.xlu0 %v1836
  %v1838 = vpop.xlane.xlu0 %1837
  %v1839 = vsel %vm135, %v1835, 0.0
  %1840 = vadd.xlane.f32.xlu0 %v1839
  %v1841 = vpop.xlane.xlu0 %1840
  %v1842 = vrcp.pop %v1838
  %v1843 = vrcp.pop %v1841
  %v1844 = vmul.f32 %v1833, %v1842
  %v1845 = vmul.f32 %v1835, %v1843
  %v1846 = vpack.c.bf16 %v1844, %v1844
  %v1847 = vpack.c.bf16 %v1845, %v1845
  %1848 = vrot.lane.b32.xlu0 %v1496, 56
  %v1849 = vpop.permute.xlu0 %1848
  %v1851 = vsel %vm135, %v1846, 0
  %v1854 = vsel %vm262, %v1849, 0
  %1856 = vmatprep.subr.bf16.mxu0 0
  %1857 = vmatpush1.bf16.msra.mxu0 0
  %1858 = vmatprep.subr.bf16.mxu0 0
  %1859 = vmatpush1.bf16.msra.mxu0 0
  %1860 = vmatprep.subr.bf16.mxu0 0
  %1861 = vmatpush1.bf16.msra.mxu0 0
  %1862 = vmatprep.subr.bf16.mxu0 0
  %1863 = vmatpush1.bf16.msra.mxu0 0
  %1864 = vmatprep.subr.bf16.mxu0 0
  %1865 = vmatpush1.bf16.msra.mxu0 0
  %1866 = vmatprep.subr.bf16.mxu0 0
  %1867 = vmatpush1.bf16.msra.mxu0 0
  %1868 = vmatprep.subr.bf16.mxu0 0
  %1869 = vmatpush1.bf16.msra.mxu0 0
  %1870 = vmatprep.subr.bf16.mxu0 0
  %1871 = vmatpush1.bf16.msra.mxu0 %v1854
  %1872 = vmatprep.subr.bf16.mxu0 0
  %1873 = vmatpush2.bf16.msra.mxu0 0
  %1874 = vmatprep.subr.bf16.mxu0 0
  %1875 = vmatpush2.bf16.msra.mxu0 0
  %1876 = vmatprep.subr.bf16.mxu0 0
  %1877 = vmatpush2.bf16.msra.mxu0 0
  %1878 = vmatprep.subr.bf16.mxu0 0
  %1879 = vmatpush2.bf16.msra.mxu0 0
  %1880 = vmatprep.subr.bf16.mxu0 0
  %1881 = vmatpush2.bf16.msra.mxu0 0
  %1882 = vmatprep.subr.bf16.mxu0 0
  %1883 = vmatpush2.bf16.msra.mxu0 0
  %1884 = vmatprep.subr.bf16.mxu0 0
  %1885 = vmatpush2.bf16.msra.mxu0 0
  %1886 = vmatprep.subr.bf16.mxu0 0
  %1887 = vmatpush2.bf16.msra.mxu0 0
  %1888 = vmatprep.mubr.bf16.mxu0 0
  %1889 = vmatmul.mubr.bf16.gmra.mxu0 %v1851
  %v1890 = vpop.f32.mrf.mxu0
  %v1891 = vadd.f32 0.0, %v1890
  %v1892 = vpop.f32.mrf.mxu0
  %v1893 = vpop.f32.mrf.mxu0
  %v1894 = vpop.f32.mrf.mxu0
  %1895 = vdwg.mxu0
  %1896 = vrot.lane.b32.xlu0 %v1497, 56
  %v1897 = vpop.permute.xlu0 %1896
  %v1899 = vsel %vm135, %v1847, 0
  %v1902 = vsel %vm262, %v1897, 0
  %1904 = vmatprep.subr.bf16.mxu0 0
  %1905 = vmatpush1.bf16.msra.mxu0 0
  %1906 = vmatprep.subr.bf16.mxu0 0
  %1907 = vmatpush1.bf16.msra.mxu0 0
  %1908 = vmatprep.subr.bf16.mxu0 0
  %1909 = vmatpush1.bf16.msra.mxu0 0
  %1910 = vmatprep.subr.bf16.mxu0 0
  %1911 = vmatpush1.bf16.msra.mxu0 0
  %1912 = vmatprep.subr.bf16.mxu0 0
  %1913 = vmatpush1.bf16.msra.mxu0 0
  %1914 = vmatprep.subr.bf16.mxu0 0
  %1915 = vmatpush1.bf16.msra.mxu0 0
  %1916 = vmatprep.subr.bf16.mxu0 0
  %1917 = vmatpush1.bf16.msra.mxu0 0
  %1918 = vmatprep.subr.bf16.mxu0 0
  %1919 = vmatpush1.bf16.msra.mxu0 %v1902
  %1920 = vmatprep.subr.bf16.mxu0 0
  %1921 = vmatpush2.bf16.msra.mxu0 0
  %1922 = vmatprep.subr.bf16.mxu0 0
  %1923 = vmatpush2.bf16.msra.mxu0 0
  %1924 = vmatprep.subr.bf16.mxu0 0
  %1925 = vmatpush2.bf16.msra.mxu0 0
  %1926 = vmatprep.subr.bf16.mxu0 0
  %1927 = vmatpush2.bf16.msra.mxu0 0
  %1928 = vmatprep.subr.bf16.mxu0 0
  %1929 = vmatpush2.bf16.msra.mxu0 0
  %1930 = vmatprep.subr.bf16.mxu0 0
  %1931 = vmatpush2.bf16.msra.mxu0 0
  %1932 = vmatprep.subr.bf16.mxu0 0
  %1933 = vmatpush2.bf16.msra.mxu0 0
  %1934 = vmatprep.subr.bf16.mxu0 0
  %1935 = vmatpush2.bf16.msra.mxu0 0
  %1936 = vmatprep.mubr.bf16.mxu0 0
  %1937 = vmatmul.mubr.bf16.gmra.mxu0 %v1899
  %v1938 = vpop.f32.mrf.mxu0
  %v1939 = vadd.f32 0.0, %v1938
  %v1940 = vpop.f32.mrf.mxu0
  %v1941 = vpop.f32.mrf.mxu0
  %v1942 = vpop.f32.mrf.mxu0
  %1943 = vdwg.mxu0
  %v1944 = vpack.c.bf16 %v1891, %v1891
  %v1945 = vpack.c.bf16 %v1939, %v1939
  %v1948 = vunpack.c.l.b16 %v1944
  %v1949 = vunpack.c.l.b16 %v1945
  %v1950 = vpack.c.b16 %v1948, %v1948
  %v1951 = vpack.c.b16 %v1949, %v1949
  %1952 = vrot.lane.b32.xlu0 %v1950, 8
  %v1953 = vpop.permute.xlu0 %1952
  %1954 = vrot.lane.b32.xlu0 %v1951, 8
  %v1955 = vpop.permute.xlu0 %1954
  %1958 = vst.msk [vmem:[#allocation2] sm:$0xf] %vm595, %v1953
  %1959 = vst.msk [vmem:[#allocation2 + $0x4] sm:$0xf] %vm595, %v1955
  %1960 = vrot.lane.b32.xlu0 %v1496, 112
  %v1961 = vpop.permute.xlu0 %1960
  %1962 = vrot.lane.b32.xlu0 %v1496, 80
  %v1963 = vpop.permute.xlu0 %1962
  %v1965 = vsel %vm135, %v1961, 0
  %v1968 = vsel %vm135, %v1963, 0
  %1970 = vmatprep.subr.bf16.mxu0 0
  %1971 = vmatpush1.bf16.xpose.msra.mxu0 0
  %1972 = vmatprep.subr.bf16.mxu0 0
  %1973 = vmatpush1.bf16.xpose.msra.mxu0 0
  %1974 = vmatprep.subr.bf16.mxu0 0
  %1975 = vmatpush1.bf16.xpose.msra.mxu0 0
  %1976 = vmatprep.subr.bf16.mxu0 0
  %1977 = vmatpush1.bf16.xpose.msra.mxu0 0
  %1978 = vmatprep.subr.bf16.mxu0 0
  %1979 = vmatpush1.bf16.xpose.msra.mxu0 0
  %1980 = vmatprep.subr.bf16.mxu0 0
  %1981 = vmatpush1.bf16.xpose.msra.mxu0 0
  %1982 = vmatprep.subr.bf16.mxu0 0
  %1983 = vmatpush1.bf16.xpose.msra.mxu0 0
  %1984 = vmatprep.subr.bf16.mxu0 0
  %1985 = vmatpush1.bf16.xpose.msra.mxu0 %v1968
  %1986 = vmatprep.subr.bf16.mxu0 0
  %1987 = vmatpush2.bf16.xpose.msra.mxu0 0
  %1988 = vmatprep.subr.bf16.mxu0 0
  %1989 = vmatpush2.bf16.xpose.msra.mxu0 0
  %1990 = vmatprep.subr.bf16.mxu0 0
  %1991 = vmatpush2.bf16.xpose.msra.mxu0 0
  %1992 = vmatprep.subr.bf16.mxu0 0
  %1993 = vmatpush2.bf16.xpose.msra.mxu0 0
  %1994 = vmatprep.subr.bf16.mxu0 0
  %1995 = vmatpush2.bf16.xpose.msra.mxu0 0
  %1996 = vmatprep.subr.bf16.mxu0 0
  %1997 = vmatpush2.bf16.xpose.msra.mxu0 0
  %1998 = vmatprep.subr.bf16.mxu0 0
  %1999 = vmatpush2.bf16.xpose.msra.mxu0 0
  %2000 = vmatprep.subr.bf16.mxu0 0
  %2001 = vmatpush2.bf16.xpose.msra.mxu0 0
  %2002 = vmatprep.mubr.bf16.mxu0 0
  %2003 = vmatmul.mubr.bf16.gmra.mxu0 %v1965
  %v2004 = vpop.f32.mrf.mxu0
  %v2005 = vadd.f32 0.0, %v2004
  %v2006 = vpop.f32.mrf.mxu0
  %v2007 = vpop.f32.mrf.mxu0
  %v2008 = vpop.f32.mrf.mxu0
  %2009 = vdwg.mxu0
  %2010 = vrot.lane.b32.xlu0 %v1497, 112
  %v2011 = vpop.permute.xlu0 %2010
  %2012 = vrot.lane.b32.xlu0 %v1497, 80
  %v2013 = vpop.permute.xlu0 %2012
  %v2015 = vsel %vm135, %v2011, 0
  %v2018 = vsel %vm135, %v2013, 0
  %2020 = vmatprep.subr.bf16.mxu0 0
  %2021 = vmatpush1.bf16.xpose.msra.mxu0 0
  %2022 = vmatprep.subr.bf16.mxu0 0
  %2023 = vmatpush1.bf16.xpose.msra.mxu0 0
  %2024 = vmatprep.subr.bf16.mxu0 0
  %2025 = vmatpush1.bf16.xpose.msra.mxu0 0
  %2026 = vmatprep.subr.bf16.mxu0 0
  %2027 = vmatpush1.bf16.xpose.msra.mxu0 0
  %2028 = vmatprep.subr.bf16.mxu0 0
  %2029 = vmatpush1.bf16.xpose.msra.mxu0 0
  %2030 = vmatprep.subr.bf16.mxu0 0
  %2031 = vmatpush1.bf16.xpose.msra.mxu0 0
  %2032 = vmatprep.subr.bf16.mxu0 0
  %2033 = vmatpush1.bf16.xpose.msra.mxu0 0
  %2034 = vmatprep.subr.bf16.mxu0 0
  %2035 = vmatpush1.bf16.xpose.msra.mxu0 %v2018
  %2036 = vmatprep.subr.bf16.mxu0 0
  %2037 = vmatpush2.bf16.xpose.msra.mxu0 0
  %2038 = vmatprep.subr.bf16.mxu0 0
  %2039 = vmatpush2.bf16.xpose.msra.mxu0 0
  %2040 = vmatprep.subr.bf16.mxu0 0
  %2041 = vmatpush2.bf16.xpose.msra.mxu0 0
  %2042 = vmatprep.subr.bf16.mxu0 0
  %2043 = vmatpush2.bf16.xpose.msra.mxu0 0
  %2044 = vmatprep.subr.bf16.mxu0 0
  %2045 = vmatpush2.bf16.xpose.msra.mxu0 0
  %2046 = vmatprep.subr.bf16.mxu0 0
  %2047 = vmatpush2.bf16.xpose.msra.mxu0 0
  %2048 = vmatprep.subr.bf16.mxu0 0
  %2049 = vmatpush2.bf16.xpose.msra.mxu0 0
  %2050 = vmatprep.subr.bf16.mxu0 0
  %2051 = vmatpush2.bf16.xpose.msra.mxu0 0
  %2052 = vmatprep.mubr.bf16.mxu0 0
  %2053 = vmatmul.mubr.bf16.gmra.mxu0 %v2015
  %v2054 = vpop.f32.mrf.mxu0
  %v2055 = vadd.f32 0.0, %v2054
  %v2056 = vpop.f32.mrf.mxu0
  %v2057 = vpop.f32.mrf.mxu0
  %v2058 = vpop.f32.mrf.mxu0
  %2059 = vdwg.mxu0
  %v2060 = vmul.f32 %v2005, 0.35355338
  %v2061 = vmul.f32 %v2055, 0.35355338
  %v2062 = vsel %vm135, %v2060, -inf
  %2063 = vmax.xlane.f32.xlu0 %v2062
  %v2064 = vpop.xlane.xlu0 %2063
  %v2065 = vsel %vm135, %v2061, -inf
  %2066 = vmax.xlane.f32.xlu0 %v2065
  %v2067 = vpop.xlane.xlu0 %2066
  %v2068 = vsub.f32 %v2060, %v2064
  %v2069 = vsub.f32 %v2061, %v2067
  %v2070 = vmul.f32 %v2068, 1.442695
  %v2071 = vpow.pop %v2070
  %v2072 = vmul.f32 %v2069, 1.442695
  %v2073 = vpow.pop %v2072
  %v2074 = vsel %vm135, %v2071, 0.0
  %2075 = vadd.xlane.f32.xlu0 %v2074
  %v2076 = vpop.xlane.xlu0 %2075
  %v2077 = vsel %vm135, %v2073, 0.0
  %2078 = vadd.xlane.f32.xlu0 %v2077
  %v2079 = vpop.xlane.xlu0 %2078
  %v2080 = vrcp.pop %v2076
  %v2081 = vrcp.pop %v2079
  %v2082 = vmul.f32 %v2071, %v2080
  %v2083 = vmul.f32 %v2073, %v2081
  %v2084 = vpack.c.bf16 %v2082, %v2082
  %v2085 = vpack.c.bf16 %v2083, %v2083
  %2086 = vrot.lane.b32.xlu0 %v1496, 48
  %v2087 = vpop.permute.xlu0 %2086
  %v2089 = vsel %vm135, %v2084, 0
  %v2092 = vsel %vm262, %v2087, 0
  %2094 = vmatprep.subr.bf16.mxu0 0
  %2095 = vmatpush1.bf16.msra.mxu0 0
  %2096 = vmatprep.subr.bf16.mxu0 0
  %2097 = vmatpush1.bf16.msra.mxu0 0
  %2098 = vmatprep.subr.bf16.mxu0 0
  %2099 = vmatpush1.bf16.msra.mxu0 0
  %2100 = vmatprep.subr.bf16.mxu0 0
  %2101 = vmatpush1.bf16.msra.mxu0 0
  %2102 = vmatprep.subr.bf16.mxu0 0
  %2103 = vmatpush1.bf16.msra.mxu0 0
  %2104 = vmatprep.subr.bf16.mxu0 0
  %2105 = vmatpush1.bf16.msra.mxu0 0
  %2106 = vmatprep.subr.bf16.mxu0 0
  %2107 = vmatpush1.bf16.msra.mxu0 0
  %2108 = vmatprep.subr.bf16.mxu0 0
  %2109 = vmatpush1.bf16.msra.mxu0 %v2092
  %2110 = vmatprep.subr.bf16.mxu0 0
  %2111 = vmatpush2.bf16.msra.mxu0 0
  %2112 = vmatprep.subr.bf16.mxu0 0
  %2113 = vmatpush2.bf16.msra.mxu0 0
  %2114 = vmatprep.subr.bf16.mxu0 0
  %2115 = vmatpush2.bf16.msra.mxu0 0
  %2116 = vmatprep.subr.bf16.mxu0 0
  %2117 = vmatpush2.bf16.msra.mxu0 0
  %2118 = vmatprep.subr.bf16.mxu0 0
  %2119 = vmatpush2.bf16.msra.mxu0 0
  %2120 = vmatprep.subr.bf16.mxu0 0
  %2121 = vmatpush2.bf16.msra.mxu0 0
  %2122 = vmatprep.subr.bf16.mxu0 0
  %2123 = vmatpush2.bf16.msra.mxu0 0
  %2124 = vmatprep.subr.bf16.mxu0 0
  %2125 = vmatpush2.bf16.msra.mxu0 0
  %2126 = vmatprep.mubr.bf16.mxu0 0
  %2127 = vmatmul.mubr.bf16.gmra.mxu0 %v2089
  %v2128 = vpop.f32.mrf.mxu0
  %v2129 = vadd.f32 0.0, %v2128
  %v2130 = vpop.f32.mrf.mxu0
  %v2131 = vpop.f32.mrf.mxu0
  %v2132 = vpop.f32.mrf.mxu0
  %2133 = vdwg.mxu0
  %2134 = vrot.lane.b32.xlu0 %v1497, 48
  %v2135 = vpop.permute.xlu0 %2134
  %v2137 = vsel %vm135, %v2085, 0
  %v2140 = vsel %vm262, %v2135, 0
  %2142 = vmatprep.subr.bf16.mxu0 0
  %2143 = vmatpush1.bf16.msra.mxu0 0
  %2144 = vmatprep.subr.bf16.mxu0 0
  %2145 = vmatpush1.bf16.msra.mxu0 0
  %2146 = vmatprep.subr.bf16.mxu0 0
  %2147 = vmatpush1.bf16.msra.mxu0 0
  %2148 = vmatprep.subr.bf16.mxu0 0
  %2149 = vmatpush1.bf16.msra.mxu0 0
  %2150 = vmatprep.subr.bf16.mxu0 0
  %2151 = vmatpush1.bf16.msra.mxu0 0
  %2152 = vmatprep.subr.bf16.mxu0 0
  %2153 = vmatpush1.bf16.msra.mxu0 0
  %2154 = vmatprep.subr.bf16.mxu0 0
  %2155 = vmatpush1.bf16.msra.mxu0 0
  %2156 = vmatprep.subr.bf16.mxu0 0
  %2157 = vmatpush1.bf16.msra.mxu0 %v2140
  %2158 = vmatprep.subr.bf16.mxu0 0
  %2159 = vmatpush2.bf16.msra.mxu0 0
  %2160 = vmatprep.subr.bf16.mxu0 0
  %2161 = vmatpush2.bf16.msra.mxu0 0
  %2162 = vmatprep.subr.bf16.mxu0 0
  %2163 = vmatpush2.bf16.msra.mxu0 0
  %2164 = vmatprep.subr.bf16.mxu0 0
  %2165 = vmatpush2.bf16.msra.mxu0 0
  %2166 = vmatprep.subr.bf16.mxu0 0
  %2167 = vmatpush2.bf16.msra.mxu0 0
  %2168 = vmatprep.subr.bf16.mxu0 0
  %2169 = vmatpush2.bf16.msra.mxu0 0
  %2170 = vmatprep.subr.bf16.mxu0 0
  %2171 = vmatpush2.bf16.msra.mxu0 0
  %2172 = vmatprep.subr.bf16.mxu0 0
  %2173 = vmatpush2.bf16.msra.mxu0 0
  %2174 = vmatprep.mubr.bf16.mxu0 0
  %2175 = vmatmul.mubr.bf16.gmra.mxu0 %v2137
  %v2176 = vpop.f32.mrf.mxu0
  %v2177 = vadd.f32 0.0, %v2176
  %v2178 = vpop.f32.mrf.mxu0
  %v2179 = vpop.f32.mrf.mxu0
  %v2180 = vpop.f32.mrf.mxu0
  %2181 = vdwg.mxu0
  %v2182 = vpack.c.bf16 %v2129, %v2129
  %v2183 = vpack.c.bf16 %v2177, %v2177
  %v2186 = vunpack.c.l.b16 %v2182
  %v2187 = vunpack.c.l.b16 %v2183
  %v2188 = vpack.c.b16 %v2186, %v2186
  %v2189 = vpack.c.b16 %v2187, %v2187
  %2190 = vrot.lane.b32.xlu0 %v2188, 16
  %v2191 = vpop.permute.xlu0 %2190
  %2192 = vrot.lane.b32.xlu0 %v2189, 16
  %v2193 = vpop.permute.xlu0 %2192
  %2196 = vst.msk [vmem:[#allocation2] sm:$0xf] %vm834, %v2191
  %2197 = vst.msk [vmem:[#allocation2 + $0x4] sm:$0xf] %vm834, %v2193
  %2198 = vrot.lane.b32.xlu0 %v1496, 104
  %v2199 = vpop.permute.xlu0 %2198
  %2200 = vrot.lane.b32.xlu0 %v1496, 72
  %v2201 = vpop.permute.xlu0 %2200
  %v2203 = vsel %vm135, %v2199, 0
  %v2206 = vsel %vm135, %v2201, 0
  %2208 = vmatprep.subr.bf16.mxu0 0
  %2209 = vmatpush1.bf16.xpose.msra.mxu0 0
  %2210 = vmatprep.subr.bf16.mxu0 0
  %2211 = vmatpush1.bf16.xpose.msra.mxu0 0
  %2212 = vmatprep.subr.bf16.mxu0 0
  %2213 = vmatpush1.bf16.xpose.msra.mxu0 0
  %2214 = vmatprep.subr.bf16.mxu0 0
  %2215 = vmatpush1.bf16.xpose.msra.mxu0 0
  %2216 = vmatprep.subr.bf16.mxu0 0
  %2217 = vmatpush1.bf16.xpose.msra.mxu0 0
  %2218 = vmatprep.subr.bf16.mxu0 0
  %2219 = vmatpush1.bf16.xpose.msra.mxu0 0
  %2220 = vmatprep.subr.bf16.mxu0 0
  %2221 = vmatpush1.bf16.xpose.msra.mxu0 0
  %2222 = vmatprep.subr.bf16.mxu0 0
  %2223 = vmatpush1.bf16.xpose.msra.mxu0 %v2206
  %2224 = vmatprep.subr.bf16.mxu0 0
  %2225 = vmatpush2.bf16.xpose.msra.mxu0 0
  %2226 = vmatprep.subr.bf16.mxu0 0
  %2227 = vmatpush2.bf16.xpose.msra.mxu0 0
  %2228 = vmatprep.subr.bf16.mxu0 0
  %2229 = vmatpush2.bf16.xpose.msra.mxu0 0
  %2230 = vmatprep.subr.bf16.mxu0 0
  %2231 = vmatpush2.bf16.xpose.msra.mxu0 0
  %2232 = vmatprep.subr.bf16.mxu0 0
  %2233 = vmatpush2.bf16.xpose.msra.mxu0 0
  %2234 = vmatprep.subr.bf16.mxu0 0
  %2235 = vmatpush2.bf16.xpose.msra.mxu0 0
  %2236 = vmatprep.subr.bf16.mxu0 0
  %2237 = vmatpush2.bf16.xpose.msra.mxu0 0
  %2238 = vmatprep.subr.bf16.mxu0 0
  %2239 = vmatpush2.bf16.xpose.msra.mxu0 0
  %2240 = vmatprep.mubr.bf16.mxu0 0
  %2241 = vmatmul.mubr.bf16.gmra.mxu0 %v2203
  %v2242 = vpop.f32.mrf.mxu0
  %v2243 = vadd.f32 0.0, %v2242
  %v2244 = vpop.f32.mrf.mxu0
  %v2245 = vpop.f32.mrf.mxu0
  %v2246 = vpop.f32.mrf.mxu0
  %2247 = vdwg.mxu0
  %2248 = vrot.lane.b32.xlu0 %v1497, 104
  %v2249 = vpop.permute.xlu0 %2248
  %2250 = vrot.lane.b32.xlu0 %v1497, 72
  %v2251 = vpop.permute.xlu0 %2250
  %v2253 = vsel %vm135, %v2249, 0
  %v2256 = vsel %vm135, %v2251, 0
  %2258 = vmatprep.subr.bf16.mxu0 0
  %2259 = vmatpush1.bf16.xpose.msra.mxu0 0
  %2260 = vmatprep.subr.bf16.mxu0 0
  %2261 = vmatpush1.bf16.xpose.msra.mxu0 0
  %2262 = vmatprep.subr.bf16.mxu0 0
  %2263 = vmatpush1.bf16.xpose.msra.mxu0 0
  %2264 = vmatprep.subr.bf16.mxu0 0
  %2265 = vmatpush1.bf16.xpose.msra.mxu0 0
  %2266 = vmatprep.subr.bf16.mxu0 0
  %2267 = vmatpush1.bf16.xpose.msra.mxu0 0
  %2268 = vmatprep.subr.bf16.mxu0 0
  %2269 = vmatpush1.bf16.xpose.msra.mxu0 0
  %2270 = vmatprep.subr.bf16.mxu0 0
  %2271 = vmatpush1.bf16.xpose.msra.mxu0 0
  %2272 = vmatprep.subr.bf16.mxu0 0
  %2273 = vmatpush1.bf16.xpose.msra.mxu0 %v2256
  %2274 = vmatprep.subr.bf16.mxu0 0
  %2275 = vmatpush2.bf16.xpose.msra.mxu0 0
  %2276 = vmatprep.subr.bf16.mxu0 0
  %2277 = vmatpush2.bf16.xpose.msra.mxu0 0
  %2278 = vmatprep.subr.bf16.mxu0 0
  %2279 = vmatpush2.bf16.xpose.msra.mxu0 0
  %2280 = vmatprep.subr.bf16.mxu0 0
  %2281 = vmatpush2.bf16.xpose.msra.mxu0 0
  %2282 = vmatprep.subr.bf16.mxu0 0
  %2283 = vmatpush2.bf16.xpose.msra.mxu0 0
  %2284 = vmatprep.subr.bf16.mxu0 0
  %2285 = vmatpush2.bf16.xpose.msra.mxu0 0
  %2286 = vmatprep.subr.bf16.mxu0 0
  %2287 = vmatpush2.bf16.xpose.msra.mxu0 0
  %2288 = vmatprep.subr.bf16.mxu0 0
  %2289 = vmatpush2.bf16.xpose.msra.mxu0 0
  %2290 = vmatprep.mubr.bf16.mxu0 0
  %2291 = vmatmul.mubr.bf16.gmra.mxu0 %v2253
  %v2292 = vpop.f32.mrf.mxu0
  %v2293 = vadd.f32 0.0, %v2292
  %v2294 = vpop.f32.mrf.mxu0
  %v2295 = vpop.f32.mrf.mxu0
  %v2296 = vpop.f32.mrf.mxu0
  %2297 = vdwg.mxu0
  %v2298 = vmul.f32 %v2243, 0.35355338
  %v2299 = vmul.f32 %v2293, 0.35355338
  %v2300 = vsel %vm135, %v2298, -inf
  %2301 = vmax.xlane.f32.xlu0 %v2300
  %v2302 = vpop.xlane.xlu0 %2301
  %v2303 = vsel %vm135, %v2299, -inf
  %2304 = vmax.xlane.f32.xlu0 %v2303
  %v2305 = vpop.xlane.xlu0 %2304
  %v2306 = vsub.f32 %v2298, %v2302
  %v2307 = vsub.f32 %v2299, %v2305
  %v2308 = vmul.f32 %v2306, 1.442695
  %v2309 = vpow.pop %v2308
  %v2310 = vmul.f32 %v2307, 1.442695
  %v2311 = vpow.pop %v2310
  %v2312 = vsel %vm135, %v2309, 0.0
  %2313 = vadd.xlane.f32.xlu0 %v2312
  %v2314 = vpop.xlane.xlu0 %2313
  %v2315 = vsel %vm135, %v2311, 0.0
  %2316 = vadd.xlane.f32.xlu0 %v2315
  %v2317 = vpop.xlane.xlu0 %2316
  %v2318 = vrcp.pop %v2314
  %v2319 = vrcp.pop %v2317
  %v2320 = vmul.f32 %v2309, %v2318
  %v2321 = vmul.f32 %v2311, %v2319
  %v2322 = vpack.c.bf16 %v2320, %v2320
  %v2323 = vpack.c.bf16 %v2321, %v2321
  %2324 = vrot.lane.b32.xlu0 %v1496, 40
  %v2325 = vpop.permute.xlu0 %2324
  %v2327 = vsel %vm135, %v2322, 0
  %v2330 = vsel %vm262, %v2325, 0
  %2332 = vmatprep.subr.bf16.mxu0 0
  %2333 = vmatpush1.bf16.msra.mxu0 0
  %2334 = vmatprep.subr.bf16.mxu0 0
  %2335 = vmatpush1.bf16.msra.mxu0 0
  %2336 = vmatprep.subr.bf16.mxu0 0
  %2337 = vmatpush1.bf16.msra.mxu0 0
  %2338 = vmatprep.subr.bf16.mxu0 0
  %2339 = vmatpush1.bf16.msra.mxu0 0
  %2340 = vmatprep.subr.bf16.mxu0 0
  %2341 = vmatpush1.bf16.msra.mxu0 0
  %2342 = vmatprep.subr.bf16.mxu0 0
  %2343 = vmatpush1.bf16.msra.mxu0 0
  %2344 = vmatprep.subr.bf16.mxu0 0
  %2345 = vmatpush1.bf16.msra.mxu0 0
  %2346 = vmatprep.subr.bf16.mxu0 0
  %2347 = vmatpush1.bf16.msra.mxu0 %v2330
  %2348 = vmatprep.subr.bf16.mxu0 0
  %2349 = vmatpush2.bf16.msra.mxu0 0
  %2350 = vmatprep.subr.bf16.mxu0 0
  %2351 = vmatpush2.bf16.msra.mxu0 0
  %2352 = vmatprep.subr.bf16.mxu0 0
  %2353 = vmatpush2.bf16.msra.mxu0 0
  %2354 = vmatprep.subr.bf16.mxu0 0
  %2355 = vmatpush2.bf16.msra.mxu0 0
  %2356 = vmatprep.subr.bf16.mxu0 0
  %2357 = vmatpush2.bf16.msra.mxu0 0
  %2358 = vmatprep.subr.bf16.mxu0 0
  %2359 = vmatpush2.bf16.msra.mxu0 0
  %2360 = vmatprep.subr.bf16.mxu0 0
  %2361 = vmatpush2.bf16.msra.mxu0 0
  %2362 = vmatprep.subr.bf16.mxu0 0
  %2363 = vmatpush2.bf16.msra.mxu0 0
  %2364 = vmatprep.mubr.bf16.mxu0 0
  %2365 = vmatmul.mubr.bf16.gmra.mxu0 %v2327
  %v2366 = vpop.f32.mrf.mxu0
  %v2367 = vadd.f32 0.0, %v2366
  %v2368 = vpop.f32.mrf.mxu0
  %v2369 = vpop.f32.mrf.mxu0
  %v2370 = vpop.f32.mrf.mxu0
  %2371 = vdwg.mxu0
  %2372 = vrot.lane.b32.xlu0 %v1497, 40
  %v2373 = vpop.permute.xlu0 %2372
  %v2375 = vsel %vm135, %v2323, 0
  %v2378 = vsel %vm262, %v2373, 0
  %2380 = vmatprep.subr.bf16.mxu0 0
  %2381 = vmatpush1.bf16.msra.mxu0 0
  %2382 = vmatprep.subr.bf16.mxu0 0
  %2383 = vmatpush1.bf16.msra.mxu0 0
  %2384 = vmatprep.subr.bf16.mxu0 0
  %2385 = vmatpush1.bf16.msra.mxu0 0
  %2386 = vmatprep.subr.bf16.mxu0 0
  %2387 = vmatpush1.bf16.msra.mxu0 0
  %2388 = vmatprep.subr.bf16.mxu0 0
  %2389 = vmatpush1.bf16.msra.mxu0 0
  %2390 = vmatprep.subr.bf16.mxu0 0
  %2391 = vmatpush1.bf16.msra.mxu0 0
  %2392 = vmatprep.subr.bf16.mxu0 0
  %2393 = vmatpush1.bf16.msra.mxu0 0
  %2394 = vmatprep.subr.bf16.mxu0 0
  %2395 = vmatpush1.bf16.msra.mxu0 %v2378
  %2396 = vmatprep.subr.bf16.mxu0 0
  %2397 = vmatpush2.bf16.msra.mxu0 0
  %2398 = vmatprep.subr.bf16.mxu0 0
  %2399 = vmatpush2.bf16.msra.mxu0 0
  %2400 = vmatprep.subr.bf16.mxu0 0
  %2401 = vmatpush2.bf16.msra.mxu0 0
  %2402 = vmatprep.subr.bf16.mxu0 0
  %2403 = vmatpush2.bf16.msra.mxu0 0
  %2404 = vmatprep.subr.bf16.mxu0 0
  %2405 = vmatpush2.bf16.msra.mxu0 0
  %2406 = vmatprep.subr.bf16.mxu0 0
  %2407 = vmatpush2.bf16.msra.mxu0 0
  %2408 = vmatprep.subr.bf16.mxu0 0
  %2409 = vmatpush2.bf16.msra.mxu0 0
  %2410 = vmatprep.subr.bf16.mxu0 0
  %2411 = vmatpush2.bf16.msra.mxu0 0
  %2412 = vmatprep.mubr.bf16.mxu0 0
  %2413 = vmatmul.mubr.bf16.gmra.mxu0 %v2375
  %v2414 = vpop.f32.mrf.mxu0
  %v2415 = vadd.f32 0.0, %v2414
  %v2416 = vpop.f32.mrf.mxu0
  %v2417 = vpop.f32.mrf.mxu0
  %v2418 = vpop.f32.mrf.mxu0
  %2419 = vdwg.mxu0
  %v2420 = vpack.c.bf16 %v2367, %v2367
  %v2421 = vpack.c.bf16 %v2415, %v2415
  %v2424 = vunpack.c.l.b16 %v2420
  %v2425 = vunpack.c.l.b16 %v2421
  %v2426 = vpack.c.b16 %v2424, %v2424
  %v2427 = vpack.c.b16 %v2425, %v2425
  %2428 = vrot.lane.b32.xlu0 %v2426, 24
  %v2429 = vpop.permute.xlu0 %2428
  %2430 = vrot.lane.b32.xlu0 %v2427, 24
  %v2431 = vpop.permute.xlu0 %2430
  %2434 = vst.msk [vmem:[#allocation2] sm:$0xf] %vm1073, %v2429
  %2435 = vst.msk [vmem:[#allocation2 + $0x4] sm:$0xf] %vm1073, %v2431
  %v2436 = vld [vmem:[#allocation2] sm:$0xf]
  %v2437 = vld [vmem:[#allocation2 + $0x4] sm:$0xf]
  %s2438 = scalar_lea.vmem %s3, 16
  %v2439 = vld [vmem:[%s2438] sm:$0xf]
  %v2440 = vld [vmem:[%s2438 + $0x4] sm:$0xf]
  %v2441 = vld [vmem:[%s2438 + $0x8] sm:$0xf]
  %v2442 = vld [vmem:[%s2438 + $0xc] sm:$0xf]
  %s2443 = scalar_lea.vmem %s4, 1
  %v2444 = vld [vmem:[%s2443] sm:$0x1]
  %v2446 = vlaneseq
  %v2447 = vshrl.u32 %v2446, 7
  %v2448 = vsub.s32 0, %v2447
  %v2449 = vrot.slane %v2444, %v2448
  %v2453 = vunpack.c.l.b16 %v2436
  %v2454 = vunpack.c.l.b16 %v2437
  %v2455 = vpack.c.b16 %v2454, %v2453
  %v2460 = vunpack.c.l.b16 %v2439
  %v2461 = vunpack.c.l.b16 %v2440
  %v2462 = vunpack.c.l.b16 %v2441
  %v2463 = vunpack.c.l.b16 %v2442
  %v2464 = vpack.c.b16 %v2461, %v2460
  %v2465 = vpack.c.b16 %v2463, %v2462
  %v2469 = vsel %vm85, %v2455, 0
  %2471 = vmatprep.subr.bf16.mxu0 0
  %2472 = vmatpush1.bf16.msra.mxu0 0
  %2473 = vmatprep.subr.bf16.mxu0 0
  %2474 = vmatpush1.bf16.msra.mxu0 0
  %2475 = vmatprep.subr.bf16.mxu0 0
  %2476 = vmatpush1.bf16.msra.mxu0 0
  %2477 = vmatprep.subr.bf16.mxu0 0
  %2478 = vmatpush1.bf16.msra.mxu0 0
  %2479 = vmatprep.subr.bf16.mxu0 0
  %2480 = vmatpush1.bf16.msra.mxu0 0
  %2481 = vmatprep.subr.bf16.mxu0 0
  %2482 = vmatpush1.bf16.msra.mxu0 0
  %2483 = vmatprep.subr.bf16.mxu0 0
  %2484 = vmatpush1.bf16.msra.mxu0 %v2465
  %2485 = vmatprep.subr.bf16.mxu0 0
  %2486 = vmatpush1.bf16.msra.mxu0 %v2464
  %2487 = vmatprep.subr.bf16.mxu0 0
  %2488 = vmatpush2.bf16.msra.mxu0 0
  %2489 = vmatprep.subr.bf16.mxu0 0
  %2490 = vmatpush2.bf16.msra.mxu0 0
  %2491 = vmatprep.subr.bf16.mxu0 0
  %2492 = vmatpush2.bf16.msra.mxu0 0
  %2493 = vmatprep.subr.bf16.mxu0 0
  %2494 = vmatpush2.bf16.msra.mxu0 0
  %2495 = vmatprep.subr.bf16.mxu0 0
  %2496 = vmatpush2.bf16.msra.mxu0 0
  %2497 = vmatprep.subr.bf16.mxu0 0
  %2498 = vmatpush2.bf16.msra.mxu0 0
  %2499 = vmatprep.subr.bf16.mxu0 0
  %2500 = vmatpush2.bf16.msra.mxu0 0
  %2501 = vmatprep.subr.bf16.mxu0 0
  %2502 = vmatpush2.bf16.msra.mxu0 0
  %2503 = vmatprep.mubr.bf16.mxu0 0
  %2504 = vmatmul.mubr.bf16.gmra.mxu0 %v2469
  %v2505 = vpop.f32.mrf.mxu0
  %v2506 = vadd.f32 %v2449, %v2505
  %v2507 = vpop.f32.mrf.mxu0
  %v2508 = vpop.f32.mrf.mxu0
  %v2509 = vadd.f32 %v2449, %v2508
  %v2510 = vpop.f32.mrf.mxu0
  %2511 = vdwg.mxu0
  %v2512 = vadd.f32 %v1424, %v2506
  %v2513 = vadd.f32 %v1425, %v2509
  %s2514 = scalar_lea.vmem %s9, 1
  %v2515 = vld [vmem:[%s2514] sm:$0x1]
  %s2516 = scalar_lea.vmem %s10, 1
  %v2517 = vld [vmem:[%s2516] sm:$0x1]
  %v2518 = vsel %vm85, %v2512, 0.0
  %2519 = vadd.xlane.f32.xlu0 %v2518
  %v2520 = vpop.xlane.xlu0 %2519
  %v2521 = vsel %vm85, %v2513, 0.0
  %2522 = vadd.xlane.f32.xlu0 %v2521
  %v2523 = vpop.xlane.xlu0 %2522
  %v2524 = vmul.f32 %v2520, %v1160
  %v2525 = vmul.f32 %v2523, %v1160
  %v2526 = vsub.f32 %v2512, %v2524
  %v2527 = vsub.f32 %v2513, %v2525
  %v2528 = vmul.f32 %v2526, %v2526
  %v2529 = vmul.f32 %v2527, %v2527
  %v2530 = vsel %vm85, %v2528, 0.0
  %2531 = vadd.xlane.f32.xlu0 %v2530
  %v2532 = vpop.xlane.xlu0 %2531
  %v2533 = vsel %vm85, %v2529, 0.0
  %2534 = vadd.xlane.f32.xlu0 %v2533
  %v2535 = vpop.xlane.xlu0 %2534
  %v2536 = vmul.f32 %v2532, %v1160
  %v2537 = vmul.f32 %v2535, %v1160
  %v2538 = vadd.f32 %v2536, 1e-05
  %v2539 = vadd.f32 %v2537, 1e-05
  %v2540 = vrsqrt.pop %v2538
  %v2541 = vrsqrt.pop %v2539
  %v2542 = vmul.f32 %v2526, %v2540
  %v2543 = vmul.f32 %v2527, %v2541
  %v2545 = vlaneseq
  %v2546 = vshrl.u32 %v2545, 7
  %v2547 = vsub.s32 0, %v2546
  %v2548 = vrot.slane %v2515, %v2547
  %v2550 = vmul.f32 %v2542, %v2548
  %v2551 = vmul.f32 %v2543, %v2548
  %v2553 = vlaneseq
  %v2554 = vshrl.u32 %v2553, 7
  %v2555 = vsub.s32 0, %v2554
  %v2556 = vrot.slane %v2517, %v2555
  %v2558 = vadd.f32 %v2550, %v2556
  %v2559 = vadd.f32 %v2551, %v2556
  %v2560 = vpack.c.bf16 %v2559, %v2558
  %s2561 = scalar_lea.vmem %s5, 16
  %v2562 = vld [vmem:[%s2561] sm:$0xf]
  %v2563 = vld [vmem:[%s2561 + $0x4] sm:$0xf]
  %v2564 = vld [vmem:[%s2561 + $0x8] sm:$0xf]
  %v2565 = vld [vmem:[%s2561 + $0xc] sm:$0xf]
  %s2566 = scalar_lea.vmem %s6, 1
  %v2567 = vld [vmem:[%s2566] sm:$0x1]
  %v2569 = vlaneseq
  %v2570 = vshrl.u32 %v2569, 7
  %v2571 = vsub.s32 0, %v2570
  %v2572 = vrot.slane %v2567, %v2571
  %v2578 = vunpack.c.l.b16 %v2562
  %v2579 = vunpack.c.l.b16 %v2563
  %v2580 = vunpack.c.l.b16 %v2564
  %v2581 = vunpack.c.l.b16 %v2565
  %v2582 = vpack.c.b16 %v2579, %v2578
  %v2583 = vpack.c.b16 %v2581, %v2580
  %v2587 = vsel %vm85, %v2560, 0
  %2589 = vmatprep.subr.bf16.mxu0 0
  %2590 = vmatpush1.bf16.msra.mxu0 0
  %2591 = vmatprep.subr.bf16.mxu0 0
  %2592 = vmatpush1.bf16.msra.mxu0 0
  %2593 = vmatprep.subr.bf16.mxu0 0
  %2594 = vmatpush1.bf16.msra.mxu0 0
  %2595 = vmatprep.subr.bf16.mxu0 0
  %2596 = vmatpush1.bf16.msra.mxu0 0
  %2597 = vmatprep.subr.bf16.mxu0 0
  %2598 = vmatpush1.bf16.msra.mxu0 0
  %2599 = vmatprep.subr.bf16.mxu0 0
  %2600 = vmatpush1.bf16.msra.mxu0 0
  %2601 = vmatprep.subr.bf16.mxu0 0
  %2602 = vmatpush1.bf16.msra.mxu0 %v2583
  %2603 = vmatprep.subr.bf16.mxu0 0
  %2604 = vmatpush1.bf16.msra.mxu0 %v2582
  %2605 = vmatprep.subr.bf16.mxu0 0
  %2606 = vmatpush2.bf16.msra.mxu0 0
  %2607 = vmatprep.subr.bf16.mxu0 0
  %2608 = vmatpush2.bf16.msra.mxu0 0
  %2609 = vmatprep.subr.bf16.mxu0 0
  %2610 = vmatpush2.bf16.msra.mxu0 0
  %2611 = vmatprep.subr.bf16.mxu0 0
  %2612 = vmatpush2.bf16.msra.mxu0 0
  %2613 = vmatprep.subr.bf16.mxu0 0
  %2614 = vmatpush2.bf16.msra.mxu0 0
  %2615 = vmatprep.subr.bf16.mxu0 0
  %2616 = vmatpush2.bf16.msra.mxu0 0
  %2617 = vmatprep.subr.bf16.mxu0 0
  %2618 = vmatpush2.bf16.msra.mxu0 0
  %2619 = vmatprep.subr.bf16.mxu0 0
  %2620 = vmatpush2.bf16.msra.mxu0 0
  %2621 = vmatprep.mubr.bf16.mxu0 0
  %2622 = vmatmul.mubr.bf16.gmra.mxu0 %v2587
  %v2623 = vpop.f32.mrf.mxu0
  %v2624 = vadd.f32 %v2572, %v2623
  %v2625 = vpop.f32.mrf.mxu0
  %v2626 = vpop.f32.mrf.mxu0
  %v2627 = vadd.f32 %v2572, %v2626
  %v2628 = vpop.f32.mrf.mxu0
  %2629 = vdwg.mxu0
  %v2630 = vmax.f32 %v2624, 0.0
  %v2631 = vmax.f32 %v2627, 0.0
  %v2632 = vpack.c.bf16 %v2631, %v2630
  %s2633 = scalar_lea.vmem %s7, 64
  %v2634 = vld [vmem:[%s2633] sm:$0xf]
  %v2635 = vld [vmem:[%s2633 + $0x4] sm:$0xf]
  %v2636 = vld [vmem:[%s2633 + $0x8] sm:$0xf]
  %v2637 = vld [vmem:[%s2633 + $0xc] sm:$0xf]
  %v2638 = vld [vmem:[%s2633 + $0x10] sm:$0xf]
  %v2639 = vld [vmem:[%s2633 + $0x14] sm:$0xf]
  %v2640 = vld [vmem:[%s2633 + $0x18] sm:$0xf]
  %v2641 = vld [vmem:[%s2633 + $0x1c] sm:$0xf]
  %v2642 = vld [vmem:[%s2633 + $0x20] sm:$0xf]
  %v2643 = vld [vmem:[%s2633 + $0x24] sm:$0xf]
  %v2644 = vld [vmem:[%s2633 + $0x28] sm:$0xf]
  %v2645 = vld [vmem:[%s2633 + $0x2c] sm:$0xf]
  %v2646 = vld [vmem:[%s2633 + $0x30] sm:$0xf]
  %v2647 = vld [vmem:[%s2633 + $0x34] sm:$0xf]
  %v2648 = vld [vmem:[%s2633 + $0x38] sm:$0xf]
  %v2649 = vld [vmem:[%s2633 + $0x3c] sm:$0xf]
  %s2650 = scalar_lea.vmem %s8, 1
  %v2651 = vld [vmem:[%s2650] sm:$0x1]
  %v2653 = vlaneseq
  %v2654 = vshrl.u32 %v2653, 7
  %v2655 = vsub.s32 0, %v2654
  %v2656 = vrot.slane %v2651, %v2655
  %v2674 = vunpack.c.l.b16 %v2634
  %v2675 = vunpack.c.l.b16 %v2635
  %v2676 = vunpack.c.l.b16 %v2636
  %v2677 = vunpack.c.l.b16 %v2637
  %v2678 = vunpack.c.l.b16 %v2638
  %v2679 = vunpack.c.l.b16 %v2639
  %v2680 = vunpack.c.l.b16 %v2640
  %v2681 = vunpack.c.l.b16 %v2641
  %v2682 = vunpack.c.l.b16 %v2642
  %v2683 = vunpack.c.l.b16 %v2643
  %v2684 = vunpack.c.l.b16 %v2644
  %v2685 = vunpack.c.l.b16 %v2645
  %v2686 = vunpack.c.l.b16 %v2646
  %v2687 = vunpack.c.l.b16 %v2647
  %v2688 = vunpack.c.l.b16 %v2648
  %v2689 = vunpack.c.l.b16 %v2649
  %v2690 = vpack.c.b16 %v2675, %v2674
  %v2691 = vpack.c.b16 %v2677, %v2676
  %v2692 = vpack.c.b16 %v2679, %v2678
  %v2693 = vpack.c.b16 %v2681, %v2680
  %v2694 = vpack.c.b16 %v2683, %v2682
  %v2695 = vpack.c.b16 %v2685, %v2684
  %v2696 = vpack.c.b16 %v2687, %v2686
  %v2697 = vpack.c.b16 %v2689, %v2688
  %2706 = vmatprep.subr.bf16.mxu0 0
  %2707 = vmatpush1.bf16.msra.mxu0 %v2697
  %2708 = vmatprep.subr.bf16.mxu0 0
  %2709 = vmatpush1.bf16.msra.mxu0 %v2696
  %2710 = vmatprep.subr.bf16.mxu0 0
  %2711 = vmatpush1.bf16.msra.mxu0 %v2695
  %2712 = vmatprep.subr.bf16.mxu0 0
  %2713 = vmatpush1.bf16.msra.mxu0 %v2694
  %2714 = vmatprep.subr.bf16.mxu0 0
  %2715 = vmatpush1.bf16.msra.mxu0 %v2693
  %2716 = vmatprep.subr.bf16.mxu0 0
  %2717 = vmatpush1.bf16.msra.mxu0 %v2692
  %2718 = vmatprep.subr.bf16.mxu0 0
  %2719 = vmatpush1.bf16.msra.mxu0 %v2691
  %2720 = vmatprep.subr.bf16.mxu0 0
  %2721 = vmatpush1.bf16.msra.mxu0 %v2690
  %2722 = vmatprep.subr.bf16.mxu0 0
  %2723 = vmatpush2.bf16.msra.mxu0 0
  %2724 = vmatprep.subr.bf16.mxu0 0
  %2725 = vmatpush2.bf16.msra.mxu0 0
  %2726 = vmatprep.subr.bf16.mxu0 0
  %2727 = vmatpush2.bf16.msra.mxu0 0
  %2728 = vmatprep.subr.bf16.mxu0 0
  %2729 = vmatpush2.bf16.msra.mxu0 0
  %2730 = vmatprep.subr.bf16.mxu0 0
  %2731 = vmatpush2.bf16.msra.mxu0 0
  %2732 = vmatprep.subr.bf16.mxu0 0
  %2733 = vmatpush2.bf16.msra.mxu0 0
  %2734 = vmatprep.subr.bf16.mxu0 0
  %2735 = vmatpush2.bf16.msra.mxu0 0
  %2736 = vmatprep.subr.bf16.mxu0 0
  %2737 = vmatpush2.bf16.msra.mxu0 0
  %2738 = vmatprep.mubr.bf16.mxu0 0
  %2739 = vmatmul.mubr.bf16.gmra.mxu0 %v2632
  %v2740 = vpop.f32.mrf.mxu0
  %v2741 = vadd.f32 %v2656, %v2740
  %v2742 = vpop.f32.mrf.mxu0
  %v2743 = vpop.f32.mrf.mxu0
  %v2744 = vadd.f32 %v2656, %v2743
  %v2745 = vpop.f32.mrf.mxu0
  %2746 = vdwg.mxu0
  %v2747 = vadd.f32 %v2558, %v2741
  %v2748 = vadd.f32 %v2559, %v2744
  %s2749 = scalar_lea.vmem %s11, 1
  %v2750 = vld [vmem:[%s2749] sm:$0x1]
  %s2751 = scalar_lea.vmem %s12, 1
  %v2752 = vld [vmem:[%s2751] sm:$0x1]
  %v2753 = vsel %vm85, %v2747, 0.0
  %2754 = vadd.xlane.f32.xlu0 %v2753
  %v2755 = vpop.xlane.xlu0 %2754
  %v2756 = vsel %vm85, %v2748, 0.0
  %2757 = vadd.xlane.f32.xlu0 %v2756
  %v2758 = vpop.xlane.xlu0 %2757
  %v2759 = vmul.f32 %v2755, %v1160
  %v2760 = vmul.f32 %v2758, %v1160
  %v2761 = vsub.f32 %v2747, %v2759
  %v2762 = vsub.f32 %v2748, %v2760
  %v2763 = vmul.f32 %v2761, %v2761
  %v2764 = vmul.f32 %v2762, %v2762
  %v2765 = vsel %vm85, %v2763, 0.0
  %2766 = vadd.xlane.f32.xlu0 %v2765
  %v2767 = vpop.xlane.xlu0 %2766
  %v2768 = vsel %vm85, %v2764, 0.0
  %2769 = vadd.xlane.f32.xlu0 %v2768
  %v2770 = vpop.xlane.xlu0 %2769
  %v2771 = vmul.f32 %v2767, %v1160
  %v2772 = vmul.f32 %v2770, %v1160
  %v2773 = vadd.f32 %v2771, 1e-05
  %v2774 = vadd.f32 %v2772, 1e-05
  %v2775 = vrsqrt.pop %v2773
  %v2776 = vrsqrt.pop %v2774
  %v2777 = vmul.f32 %v2761, %v2775
  %v2778 = vmul.f32 %v2762, %v2776
  %v2780 = vlaneseq
  %v2781 = vshrl.u32 %v2780, 7
  %v2782 = vsub.s32 0, %v2781
  %v2783 = vrot.slane %v2750, %v2782
  %v2785 = vmul.f32 %v2777, %v2783
  %v2786 = vmul.f32 %v2778, %v2783
  %v2788 = vlaneseq
  %v2789 = vshrl.u32 %v2788, 7
  %v2790 = vsub.s32 0, %v2789
  %v2791 = vrot.slane %v2752, %v2790
  %v2793 = vadd.f32 %v2785, %v2791
  %v2794 = vadd.f32 %v2786, %v2791
  %v2795 = vld [vmem:[%s13] sm:$0x1]
  %v2796 = vld [vmem:[%s14] sm:$0x1]
  %v2797 = vsel %vm85, %v2793, 0.0
  %2798 = vadd.xlane.f32.xlu0 %v2797
  %v2799 = vpop.xlane.xlu0 %2798
  %v2800 = vsel %vm85, %v2794, 0.0
  %2801 = vadd.xlane.f32.xlu0 %v2800
  %v2802 = vpop.xlane.xlu0 %2801
  %v2803 = vmul.f32 %v2799, %v1160
  %v2804 = vmul.f32 %v2802, %v1160
  %v2805 = vsub.f32 %v2793, %v2803
  %v2806 = vsub.f32 %v2794, %v2804
  %v2807 = vmul.f32 %v2805, %v2805
  %v2808 = vmul.f32 %v2806, %v2806
  %v2809 = vsel %vm85, %v2807, 0.0
  %2810 = vadd.xlane.f32.xlu0 %v2809
  %v2811 = vpop.xlane.xlu0 %2810
  %v2812 = vsel %vm85, %v2808, 0.0
  %2813 = vadd.xlane.f32.xlu0 %v2812
  %v2814 = vpop.xlane.xlu0 %2813
  %v2815 = vmul.f32 %v2811, %v1160
  %v2816 = vmul.f32 %v2814, %v1160
  %v2817 = vadd.f32 %v2815, 1e-05
  %v2818 = vadd.f32 %v2816, 1e-05
  %v2819 = vrsqrt.pop %v2817
  %v2820 = vrsqrt.pop %v2818
  %v2821 = vmul.f32 %v2805, %v2819
  %v2822 = vmul.f32 %v2806, %v2820
  %v2824 = vlaneseq
  %v2825 = vshrl.u32 %v2824, 7
  %v2826 = vsub.s32 0, %v2825
  %v2827 = vrot.slane %v2795, %v2826
  %v2829 = vmul.f32 %v2821, %v2827
  %v2830 = vmul.f32 %v2822, %v2827
  %v2832 = vlaneseq
  %v2833 = vshrl.u32 %v2832, 7
  %v2834 = vsub.s32 0, %v2833
  %v2835 = vrot.slane %v2796, %v2834
  %v2837 = vadd.f32 %v2829, %v2835
  %v2838 = vadd.f32 %v2830, %v2835
  %v2839 = vsel %vm85, %v2837, -inf
  %v2840 = vrot.slane %v2839, 4
  %v2841 = vmax.f32 %v2839, %v2840
  %v2842 = vrot.slane %v2841, 2
  %v2843 = vmax.f32 %v2841, %v2842
  %v2844 = vrot.slane %v2843, 1
  %v2845 = vmax.f32 %v2843, %v2844
  %v2846 = vsel %vm85, %v2838, -inf
  %v2847 = vrot.slane %v2846, 4
  %v2848 = vmax.f32 %v2846, %v2847
  %v2849 = vrot.slane %v2848, 2
  %v2850 = vmax.f32 %v2848, %v2849
  %v2851 = vrot.slane %v2850, 1
  %v2852 = vmax.f32 %v2850, %v2851
  %v2853 = vld [vmem:[%s15] sm:$0x1]
  %v2855 = vlaneseq
  %v2856 = vshrl.u32 %v2855, 7
  %v2857 = vsub.s32 0, %v2856
  %v2858 = vrot.slane %v2853, %v2857
  %v2860 = vmul.f32 %v2845, %v2858
  %v2861 = vmul.f32 %v2852, %v2858
  %v2864 = vrot.slane %v2861, 7
  %vm2865 = vcmask 1041409
  %v2866 = vsel %vm2865, %v2864, %v2860
  %vm2868 = vcmask 254976
  %v2869 = vsel %vm2868, %v2866, 0.0
  %2870 = vadd.xlane.f32.xlu0 %v2869
  %v2871 = vpop.xlane.xlu0 %2870
  %v2872 = vld [vmem:[#allocation3] sm:$0x1]
  %v2874 = vlaneseq
  %v2875 = vshrl.u32 %v2874, 7
  %v2876 = vsub.s32 0, %v2875
  %v2877 = vrot.slane %v2872, %v2876
  %v2879 = vadd.f32 %v2871, %v2877
  %2881 = vset.pattern.permute.xlu0 0
  %2882 = vperm.xlu0 %2881, %v2879
  %v2883 = vpop.permute.xlu0 %2882
  %2885 = vst [vmem:[%s17] sm:$0x3] %v2883
  // Predicated region
  $region70: #{ndvi_transformer_forward.1} parent=0 // pred_check
    _
  $region71: #{ndvi_transformer_forward.1} parent=0 // pred_check_branch
    %2887 = sbr.rel (0) target = $region73
  $region72: #{ndvi_transformer_forward.1} parent=0 // pred_region
    _
  $region73: #{ndvi_transformer_forward.1} parent=0 // pred_fallthru
    _
  // Predicated region
  $region74: #{ndvi_transformer_forward.1} parent=0 // pred_check
    _
  $region75: #{ndvi_transformer_forward.1} parent=0 // pred_check_branch
    %2889 = sbr.rel (0) target = $region77
  $region76: #{ndvi_transformer_forward.1} parent=0 // pred_region
    _
  $region77: #{ndvi_transformer_forward.1} parent=0 // pred_fallthru
    _

</llo_original>
